<compile_context>
chip_gen: v6e
topology: v6e:2x2x1
jax: 0.10.0
libtpu: 0.0.40
codegen_flags: <defaults>
</compile_context>

<pallas_src>
import functools

import jax
import jax.numpy as jnp
from jax import lax
from jax.experimental import pallas as pl
from jax.experimental.pallas import tpu as pltpu

_LANE = 128


def _round_up(x, m):
    return ((x + m - 1) // m) * m


def _bpr_kernel(u_idx_ref, p_idx_ref, n_idx_ref,      # (1, tb) int32 index tiles
                user_emb_t_ref, item_emb_t_ref,       # (D, n_user)/(D, n_item) resident
                pos_out_ref, neg_out_ref):            # (1, tb) lane-dense outputs
    n_user = user_emb_t_ref.shape[1]
    n_item = item_emb_t_ref.shape[1]
    tb = pos_out_ref.shape[1]
    tdt = user_emb_t_ref.dtype

    u_idx = u_idx_ref[...]        # (1, tb)
    p_idx = p_idx_ref[...]
    n_idx = n_idx_ref[...]

    # One-hot gather masks, already transposed: mask[j, i] = (idx[i] == j).
    # Built from a sublane iota vs. a lane-major index vector (cheap VPU work).
    oh_u = (lax.broadcasted_iota(jnp.int32, (n_user, tb), 0) == u_idx).astype(tdt)
    oh_p = (lax.broadcasted_iota(jnp.int32, (n_item, tb), 0) == p_idx).astype(tdt)
    oh_n = (lax.broadcasted_iota(jnp.int32, (n_item, tb), 0) == n_idx).astype(tdt)

    # MXU one-hot gathers: (D, n_rows) @ (n_rows, tb) -> (D, tb).
    # HIGHEST precision keeps the f32 table values exact through the matmul
    # (the one-hot operand is exact, so the "gather" is bit-faithful).
    uT = jnp.dot(user_emb_t_ref[...], oh_u,
                 preferred_element_type=jnp.float32,
                 precision=lax.Precision.HIGHEST)
    pT = jnp.dot(item_emb_t_ref[...], oh_p,
                 preferred_element_type=jnp.float32,
                 precision=lax.Precision.HIGHEST)
    nT = jnp.dot(item_emb_t_ref[...], oh_n,
                 preferred_element_type=jnp.float32,
                 precision=lax.Precision.HIGHEST)

    # Scores: sublane reduction of the elementwise product -> naturally
    # lane-major (1, tb), stored as full unmasked vector stores.
    pos_out_ref[...] = jnp.sum(uT * pT, axis=0, keepdims=True)
    neg_out_ref[...] = jnp.sum(uT * nT, axis=0, keepdims=True)


def _choose_tile(B, batch_tile):
    """Batch tile: multiple of 128 (lane-dense stores); big on single-TC chips,
    but split into >=2 tiles when possible so v7x's two cores both get work."""
    batch_tile = max(_LANE, _round_up(batch_tile, _LANE))
    b_lane = _round_up(max(B, 1), _LANE)
    if b_lane // _LANE >= 2:
        tb = min(batch_tile, _round_up((b_lane + 1) // 2, _LANE))
    else:
        tb = b_lane
    b_pad = _round_up(b_lane, tb)
    return tb, b_pad


@functools.partial(jax.jit, static_argnames=("batch_tile",))
def bpr_forward(user_emb, item_emb, user, pos_item, neg_item, *, batch_tile=512):
    """Returns (pos_prediction, neg_prediction), each of shape (B,) float32."""
    B = user.shape[0]
    n_user, D = user_emb.shape
    n_item, _ = item_emb.shape

    tb, b_pad = _choose_tile(B, batch_tile)
    num_tiles = b_pad // tb
    pad = b_pad - B

    # Indices as lane-major (1, b_pad) int32 rows, tiled (1, tb) per grid step.
    user_i = jnp.pad(user.astype(jnp.int32), (0, pad)).reshape(1, b_pad)
    pos_i = jnp.pad(pos_item.astype(jnp.int32), (0, pad)).reshape(1, b_pad)
    neg_i = jnp.pad(neg_item.astype(jnp.int32), (0, pad)).reshape(1, b_pad)

    # Tables passed pre-transposed so the in-kernel gather result is (D, tb).
    user_emb_t = user_emb.T      # (D, n_user)
    item_emb_t = item_emb.T      # (D, n_item)

    # --- VMEM budget guard for the whole-table-resident design -------------
    itemsize = jnp.dtype(user_emb.dtype).itemsize
    table_bytes = (n_user + n_item) * D * itemsize
    tile_bytes = (3 + 2) * tb * 4                         # idx + out tiles
    temp_bytes = (n_user + 2 * n_item) * tb * itemsize + 3 * D * tb * 4
    est_vmem = 2 * (table_bytes + tile_bytes) + temp_bytes  # 2x: double-buffering
    # TODO(synk): for tables too large to keep VMEM-resident, fall back to a
    # memory_space=pl.ANY table + manual per-row DMA gather.
    if est_vmem > (48 << 20):   # stay well under v7x's 64 MiB physical VMEM
        raise ValueError("Embedding tables too large for the VMEM-resident path.")
    vmem_limit = int(min(max(2 * est_vmem, 8 << 20), 56 << 20))

    idx_spec = pl.BlockSpec((1, tb), lambda b: (0, b))
    table_u_spec = pl.BlockSpec((D, n_user), lambda b: (0, 0))   # resident
    table_i_spec = pl.BlockSpec((D, n_item), lambda b: (0, 0))   # resident
    out_spec = pl.BlockSpec((1, tb), lambda b: (0, b))

    grid_spec = pltpu.PrefetchScalarGridSpec(
        num_scalar_prefetch=0,
        grid=(num_tiles,),
        in_specs=[idx_spec, idx_spec, idx_spec, table_u_spec, table_i_spec],
        out_specs=[out_spec, out_spec],
        scratch_shapes=[],
    )

    pos_out, neg_out = pl.pallas_call(
        _bpr_kernel,
        out_shape=(jax.ShapeDtypeStruct((1, b_pad), jnp.float32),
                   jax.ShapeDtypeStruct((1, b_pad), jnp.float32)),
        grid_spec=grid_spec,
        compiler_params=pltpu.CompilerParams(
            dimension_semantics=("parallel",),   # lets v7x shard batch tiles over 2 TCs
            vmem_limit_bytes=vmem_limit,
        ),
    )(user_i, pos_i, neg_i, user_emb_t, item_emb_t)

    return pos_out[0, :B], neg_out[0, :B]


def orthogonal_init(key, n_rows, n_cols):
    """Deterministic semi-orthogonal init (rows orthonormal when n_rows <= n_cols)."""
    a = jax.random.normal(key, (n_cols, n_rows), dtype=jnp.float32)
    q, _ = jnp.linalg.qr(a)          # (n_cols, n_rows), orthonormal columns
    return q.T.astype(jnp.float32)   # (n_rows, n_cols)


if __name__ == "__main__":
    n_user, n_item, n_latent = 32, 64, 128
    batch = 8

    key = jax.random.PRNGKey(0)
    k_u, k_i, k_uu, k_pp, k_nn = jax.random.split(key, 5)

    user_emb = orthogonal_init(k_u, n_user, n_latent)   # (32, 128)
    item_emb = orthogonal_init(k_i, n_item, n_latent)   # (64, 128)

    user     = jax.random.randint(k_uu, (batch,), 0, n_user, dtype=jnp.int32)
    pos_item = jax.random.randint(k_pp, (batch,), 0, n_item, dtype=jnp.int32)
    neg_item = jax.random.randint(k_nn, (batch,), 0, n_item, dtype=jnp.int32)

    pos_pred, neg_pred = bpr_forward(user_emb, item_emb, user, pos_item, neg_item)
    jax.block_until_ready((pos_pred, neg_pred))

    # Pure-JAX reference check (same semantics as the PyTorch forward).
    ref_pos = jnp.sum(user_emb[user] * item_emb[pos_item], axis=1)
    ref_neg = jnp.sum(user_emb[user] * item_emb[neg_item], axis=1)
    assert jnp.allclose(pos_pred, ref_pos, atol=1e-5, rtol=1e-5)
    assert jnp.allclose(neg_pred, ref_neg, atol=1e-5, rtol=1e-5)

    print("KERNEL_OK")
</pallas_src>

<mosaic_0001>
module attributes {stable_mosaic.version = 11 : i64} {
  func.func @_bpr_kernel(%arg0: i32, %arg1: memref<1x128xi32, #tpu.memory_space<vmem>>, %arg2: memref<1x128xi32, #tpu.memory_space<vmem>>, %arg3: memref<1x128xi32, #tpu.memory_space<vmem>>, %arg4: memref<128x32xf32, #tpu.memory_space<vmem>>, %arg5: memref<128x64xf32, #tpu.memory_space<vmem>>, %arg6: memref<1x128xf32, #tpu.memory_space<vmem>>, %arg7: memref<1x128xf32, #tpu.memory_space<vmem>>) attributes {dimension_semantics = [#tpu.dimension_semantics<parallel>], iteration_bounds = array<i64: 1>, scalar_prefetch = 0 : i64, scratch_operands = 0 : i64, tpu.core_type = #tpu.core_type<tc>, window_params = [{transform_indices = @transform_0, window_bounds = array<i64: 1, 128>}, {transform_indices = @transform_1, window_bounds = array<i64: 1, 128>}, {transform_indices = @transform_2, window_bounds = array<i64: 1, 128>}, {pipeline_mode = #tpu.pipeline_mode<synchronous>, transform_indices = @transform_3, window_bounds = array<i64: 128, 32>}, {pipeline_mode = #tpu.pipeline_mode<synchronous>, transform_indices = @transform_4, window_bounds = array<i64: 128, 64>}, {transform_indices = @transform_5, window_bounds = array<i64: 1, 128>}, {transform_indices = @transform_6, window_bounds = array<i64: 1, 128>}]} {
    %c0 = arith.constant 0 : index
    %c0_0 = arith.constant 0 : index
    %0 = vector.load %arg1[%c0, %c0_0] : memref<1x128xi32, #tpu.memory_space<vmem>>, vector<1x128xi32>
    %c0_1 = arith.constant 0 : index
    %c0_2 = arith.constant 0 : index
    %1 = vector.load %arg2[%c0_1, %c0_2] : memref<1x128xi32, #tpu.memory_space<vmem>>, vector<1x128xi32>
    %c0_3 = arith.constant 0 : index
    %c0_4 = arith.constant 0 : index
    %2 = vector.load %arg3[%c0_3, %c0_4] : memref<1x128xi32, #tpu.memory_space<vmem>>, vector<1x128xi32>
    %3 = tpu.iota {dimensions = array<i32: 0>} : vector<32x128xi32>
    %4 = vector.broadcast %0 : vector<1x128xi32> to vector<32x128xi32>
    %5 = arith.cmpi eq, %3, %4 : vector<32x128xi32>
    %6 = arith.extui %5 : vector<32x128xi1> to vector<32x128xi32>
    %7 = arith.sitofp %6 : vector<32x128xi32> to vector<32x128xf32>
    %8 = tpu.iota {dimensions = array<i32: 0>} : vector<64x128xi32>
    %9 = vector.broadcast %1 : vector<1x128xi32> to vector<64x128xi32>
    %10 = arith.cmpi eq, %8, %9 : vector<64x128xi32>
    %11 = arith.extui %10 : vector<64x128xi1> to vector<64x128xi32>
    %12 = arith.sitofp %11 : vector<64x128xi32> to vector<64x128xf32>
    %13 = tpu.iota {dimensions = array<i32: 0>} : vector<64x128xi32>
    %14 = vector.broadcast %2 : vector<1x128xi32> to vector<64x128xi32>
    %15 = arith.cmpi eq, %13, %14 : vector<64x128xi32>
    %16 = arith.extui %15 : vector<64x128xi1> to vector<64x128xi32>
    %17 = arith.sitofp %16 : vector<64x128xi32> to vector<64x128xf32>
    %c0_5 = arith.constant 0 : index
    %c0_6 = arith.constant 0 : index
    %18 = vector.load %arg4[%c0_5, %c0_6] : memref<128x32xf32, #tpu.memory_space<vmem>>, vector<128x32xf32>
    %cst = arith.constant dense<0.000000e+00> : vector<128x128xf32>
    %19 = tpu.matmul %18, %7, %cst {dimension_numbers = #tpu.dot_dimension_numbers<[1], [0], [0], [1], [0, 0, 1, 1], [], []>, precision = #tpu.contract_precision<fp32>} : vector<128x32xf32>, vector<32x128xf32>, vector<128x128xf32> -> vector<128x128xf32>
    %c0_7 = arith.constant 0 : index
    %c0_8 = arith.constant 0 : index
    %20 = vector.load %arg5[%c0_7, %c0_8] : memref<128x64xf32, #tpu.memory_space<vmem>>, vector<128x64xf32>
    %cst_9 = arith.constant dense<0.000000e+00> : vector<128x128xf32>
    %21 = tpu.matmul %20, %12, %cst_9 {dimension_numbers = #tpu.dot_dimension_numbers<[1], [0], [0], [1], [0, 0, 1, 1], [], []>, precision = #tpu.contract_precision<fp32>} : vector<128x64xf32>, vector<64x128xf32>, vector<128x128xf32> -> vector<128x128xf32>
    %c0_10 = arith.constant 0 : index
    %c0_11 = arith.constant 0 : index
    %22 = vector.load %arg5[%c0_10, %c0_11] : memref<128x64xf32, #tpu.memory_space<vmem>>, vector<128x64xf32>
    %cst_12 = arith.constant dense<0.000000e+00> : vector<128x128xf32>
    %23 = tpu.matmul %22, %17, %cst_12 {dimension_numbers = #tpu.dot_dimension_numbers<[1], [0], [0], [1], [0, 0, 1, 1], [], []>, precision = #tpu.contract_precision<fp32>} : vector<128x64xf32>, vector<64x128xf32>, vector<128x128xf32> -> vector<128x128xf32>
    %24 = arith.mulf %19, %21 : vector<128x128xf32>
    %cst_13 = arith.constant dense<0.000000e+00> : vector<128xf32>
    %25 = vector.multi_reduction <add>, %24, %cst_13 [0] : vector<128x128xf32> to vector<128xf32>
    %26 = vector.shape_cast %25 : vector<128xf32> to vector<1x128xf32>
    %c0_14 = arith.constant 0 : index
    %c0_15 = arith.constant 0 : index
    %27 = vector.load %arg6[%c0_14, %c0_15] : memref<1x128xf32, #tpu.memory_space<vmem>>, vector<1x128xf32>
    tpu.vector_store %arg6[%c0_14, %c0_15], %26 {strides = array<i32>} : memref<1x128xf32, #tpu.memory_space<vmem>>, vector<1x128xf32>,
    %28 = arith.mulf %19, %23 : vector<128x128xf32>
    %cst_16 = arith.constant dense<0.000000e+00> : vector<128xf32>
    %29 = vector.multi_reduction <add>, %28, %cst_16 [0] : vector<128x128xf32> to vector<128xf32>
    %30 = vector.shape_cast %29 : vector<128xf32> to vector<1x128xf32>
    %c0_17 = arith.constant 0 : index
    %c0_18 = arith.constant 0 : index
    %31 = vector.load %arg7[%c0_17, %c0_18] : memref<1x128xf32, #tpu.memory_space<vmem>>, vector<1x128xf32>
    tpu.vector_store %arg7[%c0_17, %c0_18], %30 {strides = array<i32>} : memref<1x128xf32, #tpu.memory_space<vmem>>, vector<1x128xf32>,
    return
  }
  func.func @transform_0(%arg0: i32) -> (i32, i32) {
    %c0_i32 = arith.constant 0 : i32
    %c0_i32_0 = arith.constant 0 : i32
    return %c0_i32, %arg0 : i32, i32
  }
  func.func @transform_1(%arg0: i32) -> (i32, i32) {
    %c0_i32 = arith.constant 0 : i32
    %c0_i32_0 = arith.constant 0 : i32
    return %c0_i32, %arg0 : i32, i32
  }
  func.func @transform_2(%arg0: i32) -> (i32, i32) {
    %c0_i32 = arith.constant 0 : i32
    %c0_i32_0 = arith.constant 0 : i32
    return %c0_i32, %arg0 : i32, i32
  }
  func.func @transform_3(%arg0: i32) -> (i32, i32) {
    %c0_i32 = arith.constant 0 : i32
    %c0_i32_0 = arith.constant 0 : i32
    %c0_i32_1 = arith.constant 0 : i32
    return %c0_i32, %c0_i32_0 : i32, i32
  }
  func.func @transform_4(%arg0: i32) -> (i32, i32) {
    %c0_i32 = arith.constant 0 : i32
    %c0_i32_0 = arith.constant 0 : i32
    %c0_i32_1 = arith.constant 0 : i32
    return %c0_i32, %c0_i32_0 : i32, i32
  }
  func.func @transform_5(%arg0: i32) -> (i32, i32) {
    %c0_i32 = arith.constant 0 : i32
    %c0_i32_0 = arith.constant 0 : i32
    return %c0_i32, %arg0 : i32, i32
  }
  func.func @transform_6(%arg0: i32) -> (i32, i32) {
    %c0_i32 = arith.constant 0 : i32
    %c0_i32_0 = arith.constant 0 : i32
    return %c0_i32, %arg0 : i32, i32
  }
}

</mosaic_0001>

<llo_original>
// kernel: bpr_forward.1
$region0: #{bpr_forward.1}
  #allocation0 [shape = 'u32[]', space=smem, size = 0x4, offset = 0x4, fixed_abs, tag = 'smem constant byte address 0x4 - core index']
  #allocation1 [shape = 'u32[144,128]{1,0:T(1,128)}', space=vmem, size = 0x12000, scoped, tag = 'internal scratch']
  %s0 = inlined_call_operand.vmem [shape: s32[1,128], index: 0, kind: input, shape index: {}]
  %s1 = inlined_call_operand.vmem [shape: s32[1,128], index: 1, kind: input, shape index: {}]
  %s2 = inlined_call_operand.vmem [shape: s32[1,128], index: 2, kind: input, shape index: {}]
  %s3 = inlined_call_operand.vmem [shape: f32[128,32], index: 3, kind: input, shape index: {}]
  %s4 = inlined_call_operand.vmem [shape: f32[128,64], index: 4, kind: input, shape index: {}]
  %s5 = inlined_call_operand.vmem [shape: f32[1,128], index: 5, kind: output, shape index: {0}]
  %s6 = inlined_call_operand.vmem [shape: f32[1,128], index: 6, kind: output, shape index: {1}]
  %7 = xla_tuple %s5, %s6
  %s8 = sld [smem:[#allocation0]]
  $region38: #{bpr_forward.1} parent=0
    _
  %s10 = ssub.s32 1, %s8
  %s11 = scalar_select 0, %s10, %s8
  // Predicated region
  $region2: #{bpr_forward.1} parent=0 // pred_check
    _
  $region3: #{bpr_forward.1} parent=0 // pred_check_branch
    %13 = sbr.rel (0) target = $region5
  $region4: #{bpr_forward.1} parent=0 // pred_region
    _
  $region5: #{bpr_forward.1} parent=0 // pred_fallthru
    _
  // Predicated region
  $region6: #{bpr_forward.1} parent=0 // pred_check
    _
  $region7: #{bpr_forward.1} parent=0 // pred_check_branch
    %15 = sbr.rel (0) target = $region9
  $region8: #{bpr_forward.1} parent=0 // pred_region
    _
  $region9: #{bpr_forward.1} parent=0 // pred_fallthru
    _
  // Predicated region
  $region10: #{bpr_forward.1} parent=0 // pred_check
    _
  $region11: #{bpr_forward.1} parent=0 // pred_check_branch
    %17 = sbr.rel (0) target = $region13
  $region12: #{bpr_forward.1} parent=0 // pred_region
    _
  $region13: #{bpr_forward.1} parent=0 // pred_fallthru
    _
  // Predicated region
  $region14: #{bpr_forward.1} parent=0 // pred_check
    _
  $region15: #{bpr_forward.1} parent=0 // pred_check_branch
    %19 = sbr.rel (0) target = $region17
  $region16: #{bpr_forward.1} parent=0 // pred_region
    _
  $region17: #{bpr_forward.1} parent=0 // pred_fallthru
    _
  // Predicated region
  $region18: #{bpr_forward.1} parent=0 // pred_check
    _
  $region19: #{bpr_forward.1} parent=0 // pred_check_branch
    %21 = sbr.rel (0) target = $region21
  $region20: #{bpr_forward.1} parent=0 // pred_region
    _
  $region21: #{bpr_forward.1} parent=0 // pred_fallthru
    _
  %v22 = vld [vmem:[%s0] sm:$0x1]
  %v23 = vld [vmem:[%s1] sm:$0x1]
  %v24 = vld [vmem:[%s2] sm:$0x1]
  %v25 = vlaneseq
  %v26 = vshrl.u32 %v25, 7
  %v27 = vadd.s32 %v26, 8
  %v28 = vadd.s32 %v26, 16
  %v29 = vadd.s32 %v26, 24
  %v30 = vlaneseq
  %v31 = vshrl.u32 %v30, 7
  %v32 = vsub.s32 0, %v31
  %v33 = vrot.slane %v22, %v32
  %vm34 = vcmp.eq.s32.totalorder %v26, %v33
  %vm35 = vcmp.eq.s32.totalorder %v27, %v33
  %vm36 = vcmp.eq.s32.totalorder %v28, %v33
  %vm37 = vcmp.eq.s32.totalorder %v29, %v33
  %v38 = vsel %vm34, 1, 0
  %v39 = vsel %vm35, 1, 0
  %v40 = vsel %vm36, 1, 0
  %v41 = vsel %vm37, 1, 0
  %v42 = vcvt.s32.f32 %v38
  %v43 = vcvt.s32.f32 %v39
  %v44 = vcvt.s32.f32 %v40
  %v45 = vcvt.s32.f32 %v41
  %v46 = vadd.s32 %v26, 32
  %v47 = vadd.s32 %v26, 40
  %v48 = vadd.s32 %v26, 48
  %v49 = vadd.s32 %v26, 56
  %v50 = vlaneseq
  %v51 = vshrl.u32 %v50, 7
  %v52 = vsub.s32 0, %v51
  %v53 = vrot.slane %v23, %v52
  %vm54 = vcmp.eq.s32.totalorder %v26, %v53
  %vm55 = vcmp.eq.s32.totalorder %v27, %v53
  %vm56 = vcmp.eq.s32.totalorder %v28, %v53
  %vm57 = vcmp.eq.s32.totalorder %v29, %v53
  %vm58 = vcmp.eq.s32.totalorder %v46, %v53
  %vm59 = vcmp.eq.s32.totalorder %v47, %v53
  %vm60 = vcmp.eq.s32.totalorder %v48, %v53
  %vm61 = vcmp.eq.s32.totalorder %v49, %v53
  %v62 = vsel %vm54, 1, 0
  %v63 = vsel %vm55, 1, 0
  %v64 = vsel %vm56, 1, 0
  %v65 = vsel %vm57, 1, 0
  %v66 = vsel %vm58, 1, 0
  %v67 = vsel %vm59, 1, 0
  %v68 = vsel %vm60, 1, 0
  %v69 = vsel %vm61, 1, 0
  %v70 = vcvt.s32.f32 %v62
  %v71 = vcvt.s32.f32 %v63
  %v72 = vcvt.s32.f32 %v64
  %v73 = vcvt.s32.f32 %v65
  %v74 = vcvt.s32.f32 %v66
  %v75 = vcvt.s32.f32 %v67
  %v76 = vcvt.s32.f32 %v68
  %v77 = vcvt.s32.f32 %v69
  %v78 = vlaneseq
  %v79 = vshrl.u32 %v78, 7
  %v80 = vsub.s32 0, %v79
  %v81 = vrot.slane %v24, %v80
  %vm82 = vcmp.eq.s32.totalorder %v26, %v81
  %vm83 = vcmp.eq.s32.totalorder %v27, %v81
  %vm84 = vcmp.eq.s32.totalorder %v28, %v81
  %vm85 = vcmp.eq.s32.totalorder %v29, %v81
  %vm86 = vcmp.eq.s32.totalorder %v46, %v81
  %vm87 = vcmp.eq.s32.totalorder %v47, %v81
  %vm88 = vcmp.eq.s32.totalorder %v48, %v81
  %vm89 = vcmp.eq.s32.totalorder %v49, %v81
  %v90 = vsel %vm82, 1, 0
  %v91 = vsel %vm83, 1, 0
  %v92 = vsel %vm84, 1, 0
  %v93 = vsel %vm85, 1, 0
  %v94 = vsel %vm86, 1, 0
  %v95 = vsel %vm87, 1, 0
  %v96 = vsel %vm88, 1, 0
  %v97 = vsel %vm89, 1, 0
  %v98 = vcvt.s32.f32 %v90
  %v99 = vcvt.s32.f32 %v91
  %v100 = vcvt.s32.f32 %v92
  %v101 = vcvt.s32.f32 %v93
  %v102 = vcvt.s32.f32 %v94
  %v103 = vcvt.s32.f32 %v95
  %v104 = vcvt.s32.f32 %v96
  %v105 = vcvt.s32.f32 %v97
  %v106 = vld [vmem:[%s3] sm:$0xff]
  %v107 = vld [vmem:[%s3 + $0x8] sm:$0xff]
  %v108 = vld [vmem:[%s3 + $0x10] sm:$0xff]
  %v109 = vld [vmem:[%s3 + $0x18] sm:$0xff]
  %v110 = vld [vmem:[%s3 + $0x20] sm:$0xff]
  %v111 = vld [vmem:[%s3 + $0x28] sm:$0xff]
  %v112 = vld [vmem:[%s3 + $0x30] sm:$0xff]
  %v113 = vld [vmem:[%s3 + $0x38] sm:$0xff]
  %v114 = vld [vmem:[%s3 + $0x40] sm:$0xff]
  %v115 = vld [vmem:[%s3 + $0x48] sm:$0xff]
  %v116 = vld [vmem:[%s3 + $0x50] sm:$0xff]
  %v117 = vld [vmem:[%s3 + $0x58] sm:$0xff]
  %v118 = vld [vmem:[%s3 + $0x60] sm:$0xff]
  %v119 = vld [vmem:[%s3 + $0x68] sm:$0xff]
  %v120 = vld [vmem:[%s3 + $0x70] sm:$0xff]
  %v121 = vld [vmem:[%s3 + $0x78] sm:$0xff]
  %vm122 = vcmask 261120
  %v124 = vsel %vm122, %v106, 0
  %v127 = vsel %vm122, %v107, 0
  %v130 = vsel %vm122, %v108, 0
  %v133 = vsel %vm122, %v109, 0
  %v136 = vsel %vm122, %v110, 0
  %v139 = vsel %vm122, %v111, 0
  %v142 = vsel %vm122, %v112, 0
  %v145 = vsel %vm122, %v113, 0
  %v148 = vsel %vm122, %v114, 0
  %v151 = vsel %vm122, %v115, 0
  %v154 = vsel %vm122, %v116, 0
  %v157 = vsel %vm122, %v117, 0
  %v160 = vsel %vm122, %v118, 0
  %v163 = vsel %vm122, %v119, 0
  %v166 = vsel %vm122, %v120, 0
  %v169 = vsel %vm122, %v121, 0
  %171 = vmatprep.subr.mxu0 0.0
  %172 = vmatpush1.msra.mxu0 0.0
  %173 = vmatprep.subr.mxu0 0.0
  %174 = vmatpush1.msra.mxu0 0.0
  %175 = vmatprep.subr.mxu0 0.0
  %176 = vmatpush1.msra.mxu0 0.0
  %177 = vmatprep.subr.mxu0 0.0
  %178 = vmatpush1.msra.mxu0 0.0
  %179 = vmatprep.subr.mxu0 0.0
  %180 = vmatpush1.msra.mxu0 0.0
  %181 = vmatprep.subr.mxu0 0.0
  %182 = vmatpush1.msra.mxu0 0.0
  %183 = vmatprep.subr.mxu0 0.0
  %184 = vmatpush1.msra.mxu0 0.0
  %185 = vmatprep.subr.mxu0 0.0
  %186 = vmatpush1.msra.mxu0 0.0
  %187 = vmatprep.subr.mxu0 0.0
  %188 = vmatpush1.msra.mxu0 0.0
  %189 = vmatprep.subr.mxu0 0.0
  %190 = vmatpush1.msra.mxu0 0.0
  %191 = vmatprep.subr.mxu0 0.0
  %192 = vmatpush1.msra.mxu0 0.0
  %193 = vmatprep.subr.mxu0 0.0
  %194 = vmatpush1.msra.mxu0 0.0
  %195 = vmatprep.subr.mxu0 0.0
  %v196 = vand.u32 %v45, 4294901760
  %197 = vmatpush1.msra.mxu0 %v196
  %198 = vmatprep.subr.mxu0 0.0
  %v199 = vand.u32 %v44, 4294901760
  %200 = vmatpush1.msra.mxu0 %v199
  %201 = vmatprep.subr.mxu0 0.0
  %v202 = vand.u32 %v43, 4294901760
  %203 = vmatpush1.msra.mxu0 %v202
  %204 = vmatprep.subr.mxu0 0.0
  %v205 = vand.u32 %v42, 4294901760
  %206 = vmatpush1.msra.mxu0 %v205
  %207 = vmatprep.subr.mxu0 0.0
  %208 = vmatpush2.msra.mxu0 0.0
  %209 = vmatprep.subr.mxu0 0.0
  %210 = vmatpush2.msra.mxu0 0.0
  %211 = vmatprep.subr.mxu0 0.0
  %212 = vmatpush2.msra.mxu0 0.0
  %213 = vmatprep.subr.mxu0 0.0
  %214 = vmatpush2.msra.mxu0 0.0
  %215 = vmatprep.subr.mxu0 0.0
  %216 = vmatpush2.msra.mxu0 0.0
  %217 = vmatprep.subr.mxu0 0.0
  %218 = vmatpush2.msra.mxu0 0.0
  %219 = vmatprep.subr.mxu0 0.0
  %220 = vmatpush2.msra.mxu0 0.0
  %221 = vmatprep.subr.mxu0 0.0
  %222 = vmatpush2.msra.mxu0 0.0
  %223 = vmatprep.subr.mxu0 0.0
  %224 = vmatpush2.msra.mxu0 0.0
  %225 = vmatprep.subr.mxu0 0.0
  %226 = vmatpush2.msra.mxu0 0.0
  %227 = vmatprep.subr.mxu0 0.0
  %228 = vmatpush2.msra.mxu0 0.0
  %229 = vmatprep.subr.mxu0 0.0
  %230 = vmatpush2.msra.mxu0 0.0
  %231 = vmatprep.subr.mxu0 0.0
  %232 = vmatpush2.msra.mxu0 0.0
  %233 = vmatprep.subr.mxu0 0.0
  %234 = vmatpush2.msra.mxu0 0.0
  %235 = vmatprep.subr.mxu0 0.0
  %236 = vmatpush2.msra.mxu0 0.0
  %237 = vmatprep.subr.mxu0 0.0
  %238 = vmatpush2.msra.mxu0 0.0
  %239 = vmatprep.mubr.f32.mxu0 0.0
  %v240 = vand.u32 %v124, 4294901760
  %v241 = vsub.f32 %v124, %v240
  %v242 = vand.u32 %v241, 4294901760
  %v243 = vsub.f32 %v241, %v242
  %v244 = vand.u32 %v243, 4294901760
  %245 = vmatmul.mubr.f32.gmra.mxu0 %v244
  %v246 = vpop.f32.mrf.mxu0
  %v247 = vadd.f32 0.0, %v246
  %v248 = vpop.f32.mrf.mxu0
  %249 = vmatprep.mubr.f32.mxu0 0.0
  %v250 = vand.u32 %v127, 4294901760
  %v251 = vsub.f32 %v127, %v250
  %v252 = vand.u32 %v251, 4294901760
  %v253 = vsub.f32 %v251, %v252
  %v254 = vand.u32 %v253, 4294901760
  %255 = vmatmul.mubr.f32.gmra.mxu0 %v254
  %v256 = vpop.f32.mrf.mxu0
  %v257 = vadd.f32 0.0, %v256
  %v258 = vpop.f32.mrf.mxu0
  %259 = vmatprep.mubr.f32.mxu0 0.0
  %v260 = vand.u32 %v130, 4294901760
  %v261 = vsub.f32 %v130, %v260
  %v262 = vand.u32 %v261, 4294901760
  %v263 = vsub.f32 %v261, %v262
  %v264 = vand.u32 %v263, 4294901760
  %265 = vmatmul.mubr.f32.gmra.mxu0 %v264
  %v266 = vpop.f32.mrf.mxu0
  %v267 = vadd.f32 0.0, %v266
  %v268 = vpop.f32.mrf.mxu0
  %269 = vmatprep.mubr.f32.mxu0 0.0
  %v270 = vand.u32 %v133, 4294901760
  %v271 = vsub.f32 %v133, %v270
  %v272 = vand.u32 %v271, 4294901760
  %v273 = vsub.f32 %v271, %v272
  %v274 = vand.u32 %v273, 4294901760
  %275 = vmatmul.mubr.f32.gmra.mxu0 %v274
  %v276 = vpop.f32.mrf.mxu0
  %v277 = vadd.f32 0.0, %v276
  %v278 = vpop.f32.mrf.mxu0
  %279 = vmatprep.mubr.f32.mxu0 0.0
  %v280 = vand.u32 %v136, 4294901760
  %v281 = vsub.f32 %v136, %v280
  %v282 = vand.u32 %v281, 4294901760
  %v283 = vsub.f32 %v281, %v282
  %v284 = vand.u32 %v283, 4294901760
  %285 = vmatmul.mubr.f32.gmra.mxu0 %v284
  %v286 = vpop.f32.mrf.mxu0
  %v287 = vadd.f32 0.0, %v286
  %v288 = vpop.f32.mrf.mxu0
  %289 = vmatprep.mubr.f32.mxu0 0.0
  %v290 = vand.u32 %v139, 4294901760
  %v291 = vsub.f32 %v139, %v290
  %v292 = vand.u32 %v291, 4294901760
  %v293 = vsub.f32 %v291, %v292
  %v294 = vand.u32 %v293, 4294901760
  %295 = vmatmul.mubr.f32.gmra.mxu0 %v294
  %v296 = vpop.f32.mrf.mxu0
  %v297 = vadd.f32 0.0, %v296
  %v298 = vpop.f32.mrf.mxu0
  %299 = vmatprep.mubr.f32.mxu0 0.0
  %v300 = vand.u32 %v142, 4294901760
  %v301 = vsub.f32 %v142, %v300
  %v302 = vand.u32 %v301, 4294901760
  %v303 = vsub.f32 %v301, %v302
  %v304 = vand.u32 %v303, 4294901760
  %305 = vmatmul.mubr.f32.gmra.mxu0 %v304
  %v306 = vpop.f32.mrf.mxu0
  %v307 = vadd.f32 0.0, %v306
  %v308 = vpop.f32.mrf.mxu0
  %309 = vmatprep.mubr.f32.mxu0 0.0
  %v310 = vand.u32 %v145, 4294901760
  %v311 = vsub.f32 %v145, %v310
  %v312 = vand.u32 %v311, 4294901760
  %v313 = vsub.f32 %v311, %v312
  %v314 = vand.u32 %v313, 4294901760
  %315 = vmatmul.mubr.f32.gmra.mxu0 %v314
  %v316 = vpop.f32.mrf.mxu0
  %v317 = vadd.f32 0.0, %v316
  %v318 = vpop.f32.mrf.mxu0
  %319 = vmatprep.mubr.f32.mxu0 0.0
  %v320 = vand.u32 %v148, 4294901760
  %v321 = vsub.f32 %v148, %v320
  %v322 = vand.u32 %v321, 4294901760
  %v323 = vsub.f32 %v321, %v322
  %v324 = vand.u32 %v323, 4294901760
  %325 = vmatmul.mubr.f32.gmra.mxu0 %v324
  %v326 = vpop.f32.mrf.mxu0
  %v327 = vadd.f32 0.0, %v326
  %v328 = vpop.f32.mrf.mxu0
  %329 = vmatprep.mubr.f32.mxu0 0.0
  %v330 = vand.u32 %v151, 4294901760
  %v331 = vsub.f32 %v151, %v330
  %v332 = vand.u32 %v331, 4294901760
  %v333 = vsub.f32 %v331, %v332
  %v334 = vand.u32 %v333, 4294901760
  %335 = vmatmul.mubr.f32.gmra.mxu0 %v334
  %v336 = vpop.f32.mrf.mxu0
  %v337 = vadd.f32 0.0, %v336
  %v338 = vpop.f32.mrf.mxu0
  %339 = vmatprep.mubr.f32.mxu0 0.0
  %v340 = vand.u32 %v154, 4294901760
  %v341 = vsub.f32 %v154, %v340
  %v342 = vand.u32 %v341, 4294901760
  %v343 = vsub.f32 %v341, %v342
  %v344 = vand.u32 %v343, 4294901760
  %345 = vmatmul.mubr.f32.gmra.mxu0 %v344
  %v346 = vpop.f32.mrf.mxu0
  %v347 = vadd.f32 0.0, %v346
  %v348 = vpop.f32.mrf.mxu0
  %349 = vmatprep.mubr.f32.mxu0 0.0
  %v350 = vand.u32 %v157, 4294901760
  %v351 = vsub.f32 %v157, %v350
  %v352 = vand.u32 %v351, 4294901760
  %v353 = vsub.f32 %v351, %v352
  %v354 = vand.u32 %v353, 4294901760
  %355 = vmatmul.mubr.f32.gmra.mxu0 %v354
  %v356 = vpop.f32.mrf.mxu0
  %v357 = vadd.f32 0.0, %v356
  %v358 = vpop.f32.mrf.mxu0
  %359 = vmatprep.mubr.f32.mxu0 0.0
  %v360 = vand.u32 %v160, 4294901760
  %v361 = vsub.f32 %v160, %v360
  %v362 = vand.u32 %v361, 4294901760
  %v363 = vsub.f32 %v361, %v362
  %v364 = vand.u32 %v363, 4294901760
  %365 = vmatmul.mubr.f32.gmra.mxu0 %v364
  %v366 = vpop.f32.mrf.mxu0
  %v367 = vadd.f32 0.0, %v366
  %v368 = vpop.f32.mrf.mxu0
  %369 = vmatprep.mubr.f32.mxu0 0.0
  %v370 = vand.u32 %v163, 4294901760
  %v371 = vsub.f32 %v163, %v370
  %v372 = vand.u32 %v371, 4294901760
  %v373 = vsub.f32 %v371, %v372
  %v374 = vand.u32 %v373, 4294901760
  %375 = vmatmul.mubr.f32.gmra.mxu0 %v374
  %v376 = vpop.f32.mrf.mxu0
  %v377 = vadd.f32 0.0, %v376
  %v378 = vpop.f32.mrf.mxu0
  %379 = vmatprep.mubr.f32.mxu0 0.0
  %v380 = vand.u32 %v166, 4294901760
  %v381 = vsub.f32 %v166, %v380
  %v382 = vand.u32 %v381, 4294901760
  %v383 = vsub.f32 %v381, %v382
  %v384 = vand.u32 %v383, 4294901760
  %385 = vmatmul.mubr.f32.gmra.mxu0 %v384
  %v386 = vpop.f32.mrf.mxu0
  %v387 = vadd.f32 0.0, %v386
  %v388 = vpop.f32.mrf.mxu0
  %389 = vmatprep.mubr.f32.mxu0 0.0
  %v390 = vand.u32 %v169, 4294901760
  %v391 = vsub.f32 %v169, %v390
  %v392 = vand.u32 %v391, 4294901760
  %v393 = vsub.f32 %v391, %v392
  %v394 = vand.u32 %v393, 4294901760
  %395 = vmatmul.mubr.f32.gmra.mxu0 %v394
  %v396 = vpop.f32.mrf.mxu0
  %v397 = vadd.f32 0.0, %v396
  %v398 = vpop.f32.mrf.mxu0
  %399 = vdwg.mxu0
  %400 = vmatprep.subr.mxu0 0.0
  %401 = vmatpush1.msra.mxu0 0.0
  %402 = vmatprep.subr.mxu0 0.0
  %403 = vmatpush1.msra.mxu0 0.0
  %404 = vmatprep.subr.mxu0 0.0
  %405 = vmatpush1.msra.mxu0 0.0
  %406 = vmatprep.subr.mxu0 0.0
  %407 = vmatpush1.msra.mxu0 0.0
  %408 = vmatprep.subr.mxu0 0.0
  %409 = vmatpush1.msra.mxu0 0.0
  %410 = vmatprep.subr.mxu0 0.0
  %411 = vmatpush1.msra.mxu0 0.0
  %412 = vmatprep.subr.mxu0 0.0
  %413 = vmatpush1.msra.mxu0 0.0
  %414 = vmatprep.subr.mxu0 0.0
  %415 = vmatpush1.msra.mxu0 0.0
  %416 = vmatprep.subr.mxu0 0.0
  %417 = vmatpush1.msra.mxu0 0.0
  %418 = vmatprep.subr.mxu0 0.0
  %419 = vmatpush1.msra.mxu0 0.0
  %420 = vmatprep.subr.mxu0 0.0
  %421 = vmatpush1.msra.mxu0 0.0
  %422 = vmatprep.subr.mxu0 0.0
  %423 = vmatpush1.msra.mxu0 0.0
  %424 = vmatprep.subr.mxu0 0.0
  %v425 = vand.u32 %v45, 4294901760
  %v426 = vsub.f32 %v45, %v425
  %v427 = vand.u32 %v426, 4294901760
  %v428 = vsub.f32 %v426, %v427
  %v429 = vand.u32 %v428, 4294901760
  %430 = vmatpush1.msra.mxu0 %v429
  %431 = vmatprep.subr.mxu0 0.0
  %v432 = vand.u32 %v44, 4294901760
  %v433 = vsub.f32 %v44, %v432
  %v434 = vand.u32 %v433, 4294901760
  %v435 = vsub.f32 %v433, %v434
  %v436 = vand.u32 %v435, 4294901760
  %437 = vmatpush1.msra.mxu0 %v436
  %438 = vmatprep.subr.mxu0 0.0
  %v439 = vand.u32 %v43, 4294901760
  %v440 = vsub.f32 %v43, %v439
  %v441 = vand.u32 %v440, 4294901760
  %v442 = vsub.f32 %v440, %v441
  %v443 = vand.u32 %v442, 4294901760
  %444 = vmatpush1.msra.mxu0 %v443
  %445 = vmatprep.subr.mxu0 0.0
  %v446 = vand.u32 %v42, 4294901760
  %v447 = vsub.f32 %v42, %v446
  %v448 = vand.u32 %v447, 4294901760
  %v449 = vsub.f32 %v447, %v448
  %v450 = vand.u32 %v449, 4294901760
  %451 = vmatpush1.msra.mxu0 %v450
  %452 = vmatprep.subr.mxu0 0.0
  %453 = vmatpush2.msra.mxu0 0.0
  %454 = vmatprep.subr.mxu0 0.0
  %455 = vmatpush2.msra.mxu0 0.0
  %456 = vmatprep.subr.mxu0 0.0
  %457 = vmatpush2.msra.mxu0 0.0
  %458 = vmatprep.subr.mxu0 0.0
  %459 = vmatpush2.msra.mxu0 0.0
  %460 = vmatprep.subr.mxu0 0.0
  %461 = vmatpush2.msra.mxu0 0.0
  %462 = vmatprep.subr.mxu0 0.0
  %463 = vmatpush2.msra.mxu0 0.0
  %464 = vmatprep.subr.mxu0 0.0
  %465 = vmatpush2.msra.mxu0 0.0
  %466 = vmatprep.subr.mxu0 0.0
  %467 = vmatpush2.msra.mxu0 0.0
  %468 = vmatprep.subr.mxu0 0.0
  %469 = vmatpush2.msra.mxu0 0.0
  %470 = vmatprep.subr.mxu0 0.0
  %471 = vmatpush2.msra.mxu0 0.0
  %472 = vmatprep.subr.mxu0 0.0
  %473 = vmatpush2.msra.mxu0 0.0
  %474 = vmatprep.subr.mxu0 0.0
  %475 = vmatpush2.msra.mxu0 0.0
  %476 = vmatprep.subr.mxu0 0.0
  %477 = vmatpush2.msra.mxu0 0.0
  %478 = vmatprep.subr.mxu0 0.0
  %479 = vmatpush2.msra.mxu0 0.0
  %480 = vmatprep.subr.mxu0 0.0
  %481 = vmatpush2.msra.mxu0 0.0
  %482 = vmatprep.subr.mxu0 0.0
  %483 = vmatpush2.msra.mxu0 0.0
  %484 = vmatprep.mubr.f32.mxu0 0.0
  %v485 = vand.u32 %v124, 4294901760
  %486 = vmatmul.mubr.f32.gmra.mxu0 %v485
  %v487 = vpop.f32.mrf.mxu0
  %v488 = vadd.f32 %v247, %v487
  %v489 = vpop.f32.mrf.mxu0
  %490 = vmatprep.mubr.f32.mxu0 0.0
  %v491 = vand.u32 %v127, 4294901760
  %492 = vmatmul.mubr.f32.gmra.mxu0 %v491
  %v493 = vpop.f32.mrf.mxu0
  %v494 = vadd.f32 %v257, %v493
  %v495 = vpop.f32.mrf.mxu0
  %496 = vmatprep.mubr.f32.mxu0 0.0
  %v497 = vand.u32 %v130, 4294901760
  %498 = vmatmul.mubr.f32.gmra.mxu0 %v497
  %v499 = vpop.f32.mrf.mxu0
  %v500 = vadd.f32 %v267, %v499
  %v501 = vpop.f32.mrf.mxu0
  %502 = vmatprep.mubr.f32.mxu0 0.0
  %v503 = vand.u32 %v133, 4294901760
  %504 = vmatmul.mubr.f32.gmra.mxu0 %v503
  %v505 = vpop.f32.mrf.mxu0
  %v506 = vadd.f32 %v277, %v505
  %v507 = vpop.f32.mrf.mxu0
  %508 = vmatprep.mubr.f32.mxu0 0.0
  %v509 = vand.u32 %v136, 4294901760
  %510 = vmatmul.mubr.f32.gmra.mxu0 %v509
  %v511 = vpop.f32.mrf.mxu0
  %v512 = vadd.f32 %v287, %v511
  %v513 = vpop.f32.mrf.mxu0
  %514 = vmatprep.mubr.f32.mxu0 0.0
  %v515 = vand.u32 %v139, 4294901760
  %516 = vmatmul.mubr.f32.gmra.mxu0 %v515
  %v517 = vpop.f32.mrf.mxu0
  %v518 = vadd.f32 %v297, %v517
  %v519 = vpop.f32.mrf.mxu0
  %520 = vmatprep.mubr.f32.mxu0 0.0
  %v521 = vand.u32 %v142, 4294901760
  %522 = vmatmul.mubr.f32.gmra.mxu0 %v521
  %v523 = vpop.f32.mrf.mxu0
  %v524 = vadd.f32 %v307, %v523
  %v525 = vpop.f32.mrf.mxu0
  %526 = vmatprep.mubr.f32.mxu0 0.0
  %v527 = vand.u32 %v145, 4294901760
  %528 = vmatmul.mubr.f32.gmra.mxu0 %v527
  %v529 = vpop.f32.mrf.mxu0
  %v530 = vadd.f32 %v317, %v529
  %v531 = vpop.f32.mrf.mxu0
  %532 = vmatprep.mubr.f32.mxu0 0.0
  %v533 = vand.u32 %v148, 4294901760
  %534 = vmatmul.mubr.f32.gmra.mxu0 %v533
  %v535 = vpop.f32.mrf.mxu0
  %v536 = vadd.f32 %v327, %v535
  %v537 = vpop.f32.mrf.mxu0
  %538 = vmatprep.mubr.f32.mxu0 0.0
  %v539 = vand.u32 %v151, 4294901760
  %540 = vmatmul.mubr.f32.gmra.mxu0 %v539
  %v541 = vpop.f32.mrf.mxu0
  %v542 = vadd.f32 %v337, %v541
  %v543 = vpop.f32.mrf.mxu0
  %544 = vmatprep.mubr.f32.mxu0 0.0
  %v545 = vand.u32 %v154, 4294901760
  %546 = vmatmul.mubr.f32.gmra.mxu0 %v545
  %v547 = vpop.f32.mrf.mxu0
  %v548 = vadd.f32 %v347, %v547
  %v549 = vpop.f32.mrf.mxu0
  %550 = vmatprep.mubr.f32.mxu0 0.0
  %v551 = vand.u32 %v157, 4294901760
  %552 = vmatmul.mubr.f32.gmra.mxu0 %v551
  %v553 = vpop.f32.mrf.mxu0
  %v554 = vadd.f32 %v357, %v553
  %v555 = vpop.f32.mrf.mxu0
  %556 = vmatprep.mubr.f32.mxu0 0.0
  %v557 = vand.u32 %v160, 4294901760
  %558 = vmatmul.mubr.f32.gmra.mxu0 %v557
  %v559 = vpop.f32.mrf.mxu0
  %v560 = vadd.f32 %v367, %v559
  %v561 = vpop.f32.mrf.mxu0
  %562 = vmatprep.mubr.f32.mxu0 0.0
  %v563 = vand.u32 %v163, 4294901760
  %564 = vmatmul.mubr.f32.gmra.mxu0 %v563
  %v565 = vpop.f32.mrf.mxu0
  %v566 = vadd.f32 %v377, %v565
  %v567 = vpop.f32.mrf.mxu0
  %568 = vmatprep.mubr.f32.mxu0 0.0
  %v569 = vand.u32 %v166, 4294901760
  %570 = vmatmul.mubr.f32.gmra.mxu0 %v569
  %v571 = vpop.f32.mrf.mxu0
  %v572 = vadd.f32 %v387, %v571
  %v573 = vpop.f32.mrf.mxu0
  %574 = vmatprep.mubr.f32.mxu0 0.0
  %v575 = vand.u32 %v169, 4294901760
  %576 = vmatmul.mubr.f32.gmra.mxu0 %v575
  %v577 = vpop.f32.mrf.mxu0
  %v578 = vadd.f32 %v397, %v577
  %v579 = vpop.f32.mrf.mxu0
  %580 = vdwg.mxu0
  %581 = vmatprep.subr.mxu0 0.0
  %582 = vmatpush1.msra.mxu0 0.0
  %583 = vmatprep.subr.mxu0 0.0
  %584 = vmatpush1.msra.mxu0 0.0
  %585 = vmatprep.subr.mxu0 0.0
  %586 = vmatpush1.msra.mxu0 0.0
  %587 = vmatprep.subr.mxu0 0.0
  %588 = vmatpush1.msra.mxu0 0.0
  %589 = vmatprep.subr.mxu0 0.0
  %590 = vmatpush1.msra.mxu0 0.0
  %591 = vmatprep.subr.mxu0 0.0
  %592 = vmatpush1.msra.mxu0 0.0
  %593 = vmatprep.subr.mxu0 0.0
  %594 = vmatpush1.msra.mxu0 0.0
  %595 = vmatprep.subr.mxu0 0.0
  %596 = vmatpush1.msra.mxu0 0.0
  %597 = vmatprep.subr.mxu0 0.0
  %598 = vmatpush1.msra.mxu0 0.0
  %599 = vmatprep.subr.mxu0 0.0
  %600 = vmatpush1.msra.mxu0 0.0
  %601 = vmatprep.subr.mxu0 0.0
  %602 = vmatpush1.msra.mxu0 0.0
  %603 = vmatprep.subr.mxu0 0.0
  %604 = vmatpush1.msra.mxu0 0.0
  %605 = vmatprep.subr.mxu0 0.0
  %v606 = vand.u32 %v45, 4294901760
  %v607 = vsub.f32 %v45, %v606
  %608 = vmatpush1.msra.mxu0 %v607
  %609 = vmatprep.subr.mxu0 0.0
  %v610 = vand.u32 %v44, 4294901760
  %v611 = vsub.f32 %v44, %v610
  %612 = vmatpush1.msra.mxu0 %v611
  %613 = vmatprep.subr.mxu0 0.0
  %v614 = vand.u32 %v43, 4294901760
  %v615 = vsub.f32 %v43, %v614
  %616 = vmatpush1.msra.mxu0 %v615
  %617 = vmatprep.subr.mxu0 0.0
  %v618 = vand.u32 %v42, 4294901760
  %v619 = vsub.f32 %v42, %v618
  %620 = vmatpush1.msra.mxu0 %v619
  %621 = vmatprep.subr.mxu0 0.0
  %622 = vmatpush2.msra.mxu0 0.0
  %623 = vmatprep.subr.mxu0 0.0
  %624 = vmatpush2.msra.mxu0 0.0
  %625 = vmatprep.subr.mxu0 0.0
  %626 = vmatpush2.msra.mxu0 0.0
  %627 = vmatprep.subr.mxu0 0.0
  %628 = vmatpush2.msra.mxu0 0.0
  %629 = vmatprep.subr.mxu0 0.0
  %630 = vmatpush2.msra.mxu0 0.0
  %631 = vmatprep.subr.mxu0 0.0
  %632 = vmatpush2.msra.mxu0 0.0
  %633 = vmatprep.subr.mxu0 0.0
  %634 = vmatpush2.msra.mxu0 0.0
  %635 = vmatprep.subr.mxu0 0.0
  %636 = vmatpush2.msra.mxu0 0.0
  %637 = vmatprep.subr.mxu0 0.0
  %638 = vmatpush2.msra.mxu0 0.0
  %639 = vmatprep.subr.mxu0 0.0
  %640 = vmatpush2.msra.mxu0 0.0
  %641 = vmatprep.subr.mxu0 0.0
  %642 = vmatpush2.msra.mxu0 0.0
  %643 = vmatprep.subr.mxu0 0.0
  %644 = vmatpush2.msra.mxu0 0.0
  %645 = vmatprep.subr.mxu0 0.0
  %646 = vmatpush2.msra.mxu0 0.0
  %647 = vmatprep.subr.mxu0 0.0
  %648 = vmatpush2.msra.mxu0 0.0
  %649 = vmatprep.subr.mxu0 0.0
  %650 = vmatpush2.msra.mxu0 0.0
  %651 = vmatprep.subr.mxu0 0.0
  %652 = vmatpush2.msra.mxu0 0.0
  %653 = vmatprep.mubr.f32.mxu0 0.0
  %v654 = vand.u32 %v124, 4294901760
  %v655 = vsub.f32 %v124, %v654
  %656 = vmatmul.mubr.f32.gmra.mxu0 %v655
  %v657 = vpop.f32.mrf.mxu0
  %v658 = vadd.f32 %v488, %v657
  %v659 = vpop.f32.mrf.mxu0
  %660 = vmatprep.mubr.f32.mxu0 0.0
  %v661 = vand.u32 %v127, 4294901760
  %v662 = vsub.f32 %v127, %v661
  %663 = vmatmul.mubr.f32.gmra.mxu0 %v662
  %v664 = vpop.f32.mrf.mxu0
  %v665 = vadd.f32 %v494, %v664
  %v666 = vpop.f32.mrf.mxu0
  %667 = vmatprep.mubr.f32.mxu0 0.0
  %v668 = vand.u32 %v130, 4294901760
  %v669 = vsub.f32 %v130, %v668
  %670 = vmatmul.mubr.f32.gmra.mxu0 %v669
  %v671 = vpop.f32.mrf.mxu0
  %v672 = vadd.f32 %v500, %v671
  %v673 = vpop.f32.mrf.mxu0
  %674 = vmatprep.mubr.f32.mxu0 0.0
  %v675 = vand.u32 %v133, 4294901760
  %v676 = vsub.f32 %v133, %v675
  %677 = vmatmul.mubr.f32.gmra.mxu0 %v676
  %v678 = vpop.f32.mrf.mxu0
  %v679 = vadd.f32 %v506, %v678
  %v680 = vpop.f32.mrf.mxu0
  %681 = vmatprep.mubr.f32.mxu0 0.0
  %v682 = vand.u32 %v136, 4294901760
  %v683 = vsub.f32 %v136, %v682
  %684 = vmatmul.mubr.f32.gmra.mxu0 %v683
  %v685 = vpop.f32.mrf.mxu0
  %v686 = vadd.f32 %v512, %v685
  %v687 = vpop.f32.mrf.mxu0
  %688 = vmatprep.mubr.f32.mxu0 0.0
  %v689 = vand.u32 %v139, 4294901760
  %v690 = vsub.f32 %v139, %v689
  %691 = vmatmul.mubr.f32.gmra.mxu0 %v690
  %v692 = vpop.f32.mrf.mxu0
  %v693 = vadd.f32 %v518, %v692
  %v694 = vpop.f32.mrf.mxu0
  %695 = vmatprep.mubr.f32.mxu0 0.0
  %v696 = vand.u32 %v142, 4294901760
  %v697 = vsub.f32 %v142, %v696
  %698 = vmatmul.mubr.f32.gmra.mxu0 %v697
  %v699 = vpop.f32.mrf.mxu0
  %v700 = vadd.f32 %v524, %v699
  %v701 = vpop.f32.mrf.mxu0
  %702 = vmatprep.mubr.f32.mxu0 0.0
  %v703 = vand.u32 %v145, 4294901760
  %v704 = vsub.f32 %v145, %v703
  %705 = vmatmul.mubr.f32.gmra.mxu0 %v704
  %v706 = vpop.f32.mrf.mxu0
  %v707 = vadd.f32 %v530, %v706
  %v708 = vpop.f32.mrf.mxu0
  %709 = vmatprep.mubr.f32.mxu0 0.0
  %v710 = vand.u32 %v148, 4294901760
  %v711 = vsub.f32 %v148, %v710
  %712 = vmatmul.mubr.f32.gmra.mxu0 %v711
  %v713 = vpop.f32.mrf.mxu0
  %v714 = vadd.f32 %v536, %v713
  %v715 = vpop.f32.mrf.mxu0
  %716 = vmatprep.mubr.f32.mxu0 0.0
  %v717 = vand.u32 %v151, 4294901760
  %v718 = vsub.f32 %v151, %v717
  %719 = vmatmul.mubr.f32.gmra.mxu0 %v718
  %v720 = vpop.f32.mrf.mxu0
  %v721 = vadd.f32 %v542, %v720
  %v722 = vpop.f32.mrf.mxu0
  %723 = vmatprep.mubr.f32.mxu0 0.0
  %v724 = vand.u32 %v154, 4294901760
  %v725 = vsub.f32 %v154, %v724
  %726 = vmatmul.mubr.f32.gmra.mxu0 %v725
  %v727 = vpop.f32.mrf.mxu0
  %v728 = vadd.f32 %v548, %v727
  %v729 = vpop.f32.mrf.mxu0
  %730 = vmatprep.mubr.f32.mxu0 0.0
  %v731 = vand.u32 %v157, 4294901760
  %v732 = vsub.f32 %v157, %v731
  %733 = vmatmul.mubr.f32.gmra.mxu0 %v732
  %v734 = vpop.f32.mrf.mxu0
  %v735 = vadd.f32 %v554, %v734
  %v736 = vpop.f32.mrf.mxu0
  %737 = vmatprep.mubr.f32.mxu0 0.0
  %v738 = vand.u32 %v160, 4294901760
  %v739 = vsub.f32 %v160, %v738
  %740 = vmatmul.mubr.f32.gmra.mxu0 %v739
  %v741 = vpop.f32.mrf.mxu0
  %v742 = vadd.f32 %v560, %v741
  %v743 = vpop.f32.mrf.mxu0
  %744 = vmatprep.mubr.f32.mxu0 0.0
  %v745 = vand.u32 %v163, 4294901760
  %v746 = vsub.f32 %v163, %v745
  %747 = vmatmul.mubr.f32.gmra.mxu0 %v746
  %v748 = vpop.f32.mrf.mxu0
  %v749 = vadd.f32 %v566, %v748
  %v750 = vpop.f32.mrf.mxu0
  %751 = vmatprep.mubr.f32.mxu0 0.0
  %v752 = vand.u32 %v166, 4294901760
  %v753 = vsub.f32 %v166, %v752
  %754 = vmatmul.mubr.f32.gmra.mxu0 %v753
  %v755 = vpop.f32.mrf.mxu0
  %v756 = vadd.f32 %v572, %v755
  %v757 = vpop.f32.mrf.mxu0
  %758 = vmatprep.mubr.f32.mxu0 0.0
  %v759 = vand.u32 %v169, 4294901760
  %v760 = vsub.f32 %v169, %v759
  %761 = vmatmul.mubr.f32.gmra.mxu0 %v760
  %v762 = vpop.f32.mrf.mxu0
  %v763 = vadd.f32 %v578, %v762
  %v764 = vpop.f32.mrf.mxu0
  %765 = vdwg.mxu0
  %766 = vmatprep.subr.mxu0 0.0
  %767 = vmatpush1.msra.mxu0 0.0
  %768 = vmatprep.subr.mxu0 0.0
  %769 = vmatpush1.msra.mxu0 0.0
  %770 = vmatprep.subr.mxu0 0.0
  %771 = vmatpush1.msra.mxu0 0.0
  %772 = vmatprep.subr.mxu0 0.0
  %773 = vmatpush1.msra.mxu0 0.0
  %774 = vmatprep.subr.mxu0 0.0
  %775 = vmatpush1.msra.mxu0 0.0
  %776 = vmatprep.subr.mxu0 0.0
  %777 = vmatpush1.msra.mxu0 0.0
  %778 = vmatprep.subr.mxu0 0.0
  %779 = vmatpush1.msra.mxu0 0.0
  %780 = vmatprep.subr.mxu0 0.0
  %781 = vmatpush1.msra.mxu0 0.0
  %782 = vmatprep.subr.mxu0 0.0
  %783 = vmatpush1.msra.mxu0 0.0
  %784 = vmatprep.subr.mxu0 0.0
  %785 = vmatpush1.msra.mxu0 0.0
  %786 = vmatprep.subr.mxu0 0.0
  %787 = vmatpush1.msra.mxu0 0.0
  %788 = vmatprep.subr.mxu0 0.0
  %789 = vmatpush1.msra.mxu0 0.0
  %790 = vmatprep.subr.mxu0 0.0
  %v791 = vand.u32 %v45, 4294901760
  %792 = vmatpush1.msra.mxu0 %v791
  %793 = vmatprep.subr.mxu0 0.0
  %v794 = vand.u32 %v44, 4294901760
  %795 = vmatpush1.msra.mxu0 %v794
  %796 = vmatprep.subr.mxu0 0.0
  %v797 = vand.u32 %v43, 4294901760
  %798 = vmatpush1.msra.mxu0 %v797
  %799 = vmatprep.subr.mxu0 0.0
  %v800 = vand.u32 %v42, 4294901760
  %801 = vmatpush1.msra.mxu0 %v800
  %802 = vmatprep.subr.mxu0 0.0
  %803 = vmatpush2.msra.mxu0 0.0
  %804 = vmatprep.subr.mxu0 0.0
  %805 = vmatpush2.msra.mxu0 0.0
  %806 = vmatprep.subr.mxu0 0.0
  %807 = vmatpush2.msra.mxu0 0.0
  %808 = vmatprep.subr.mxu0 0.0
  %809 = vmatpush2.msra.mxu0 0.0
  %810 = vmatprep.subr.mxu0 0.0
  %811 = vmatpush2.msra.mxu0 0.0
  %812 = vmatprep.subr.mxu0 0.0
  %813 = vmatpush2.msra.mxu0 0.0
  %814 = vmatprep.subr.mxu0 0.0
  %815 = vmatpush2.msra.mxu0 0.0
  %816 = vmatprep.subr.mxu0 0.0
  %817 = vmatpush2.msra.mxu0 0.0
  %818 = vmatprep.subr.mxu0 0.0
  %819 = vmatpush2.msra.mxu0 0.0
  %820 = vmatprep.subr.mxu0 0.0
  %821 = vmatpush2.msra.mxu0 0.0
  %822 = vmatprep.subr.mxu0 0.0
  %823 = vmatpush2.msra.mxu0 0.0
  %824 = vmatprep.subr.mxu0 0.0
  %825 = vmatpush2.msra.mxu0 0.0
  %826 = vmatprep.subr.mxu0 0.0
  %827 = vmatpush2.msra.mxu0 0.0
  %828 = vmatprep.subr.mxu0 0.0
  %829 = vmatpush2.msra.mxu0 0.0
  %830 = vmatprep.subr.mxu0 0.0
  %831 = vmatpush2.msra.mxu0 0.0
  %832 = vmatprep.subr.mxu0 0.0
  %833 = vmatpush2.msra.mxu0 0.0
  %834 = vmatprep.mubr.f32.mxu0 0.0
  %v835 = vand.u32 %v124, 4294901760
  %v836 = vsub.f32 %v124, %v835
  %v837 = vand.u32 %v836, 4294901760
  %838 = vmatmul.mubr.f32.gmra.mxu0 %v837
  %v839 = vpop.f32.mrf.mxu0
  %v840 = vadd.f32 %v658, %v839
  %v841 = vpop.f32.mrf.mxu0
  %842 = vmatprep.mubr.f32.mxu0 0.0
  %v843 = vand.u32 %v127, 4294901760
  %v844 = vsub.f32 %v127, %v843
  %v845 = vand.u32 %v844, 4294901760
  %846 = vmatmul.mubr.f32.gmra.mxu0 %v845
  %v847 = vpop.f32.mrf.mxu0
  %v848 = vadd.f32 %v665, %v847
  %v849 = vpop.f32.mrf.mxu0
  %850 = vmatprep.mubr.f32.mxu0 0.0
  %v851 = vand.u32 %v130, 4294901760
  %v852 = vsub.f32 %v130, %v851
  %v853 = vand.u32 %v852, 4294901760
  %854 = vmatmul.mubr.f32.gmra.mxu0 %v853
  %v855 = vpop.f32.mrf.mxu0
  %v856 = vadd.f32 %v672, %v855
  %v857 = vpop.f32.mrf.mxu0
  %858 = vmatprep.mubr.f32.mxu0 0.0
  %v859 = vand.u32 %v133, 4294901760
  %v860 = vsub.f32 %v133, %v859
  %v861 = vand.u32 %v860, 4294901760
  %862 = vmatmul.mubr.f32.gmra.mxu0 %v861
  %v863 = vpop.f32.mrf.mxu0
  %v864 = vadd.f32 %v679, %v863
  %v865 = vpop.f32.mrf.mxu0
  %866 = vmatprep.mubr.f32.mxu0 0.0
  %v867 = vand.u32 %v136, 4294901760
  %v868 = vsub.f32 %v136, %v867
  %v869 = vand.u32 %v868, 4294901760
  %870 = vmatmul.mubr.f32.gmra.mxu0 %v869
  %v871 = vpop.f32.mrf.mxu0
  %v872 = vadd.f32 %v686, %v871
  %v873 = vpop.f32.mrf.mxu0
  %874 = vmatprep.mubr.f32.mxu0 0.0
  %v875 = vand.u32 %v139, 4294901760
  %v876 = vsub.f32 %v139, %v875
  %v877 = vand.u32 %v876, 4294901760
  %878 = vmatmul.mubr.f32.gmra.mxu0 %v877
  %v879 = vpop.f32.mrf.mxu0
  %v880 = vadd.f32 %v693, %v879
  %v881 = vpop.f32.mrf.mxu0
  %882 = vmatprep.mubr.f32.mxu0 0.0
  %v883 = vand.u32 %v142, 4294901760
  %v884 = vsub.f32 %v142, %v883
  %v885 = vand.u32 %v884, 4294901760
  %886 = vmatmul.mubr.f32.gmra.mxu0 %v885
  %v887 = vpop.f32.mrf.mxu0
  %v888 = vadd.f32 %v700, %v887
  %v889 = vpop.f32.mrf.mxu0
  %890 = vmatprep.mubr.f32.mxu0 0.0
  %v891 = vand.u32 %v145, 4294901760
  %v892 = vsub.f32 %v145, %v891
  %v893 = vand.u32 %v892, 4294901760
  %894 = vmatmul.mubr.f32.gmra.mxu0 %v893
  %v895 = vpop.f32.mrf.mxu0
  %v896 = vadd.f32 %v707, %v895
  %v897 = vpop.f32.mrf.mxu0
  %898 = vmatprep.mubr.f32.mxu0 0.0
  %v899 = vand.u32 %v148, 4294901760
  %v900 = vsub.f32 %v148, %v899
  %v901 = vand.u32 %v900, 4294901760
  %902 = vmatmul.mubr.f32.gmra.mxu0 %v901
  %v903 = vpop.f32.mrf.mxu0
  %v904 = vadd.f32 %v714, %v903
  %v905 = vpop.f32.mrf.mxu0
  %906 = vmatprep.mubr.f32.mxu0 0.0
  %v907 = vand.u32 %v151, 4294901760
  %v908 = vsub.f32 %v151, %v907
  %v909 = vand.u32 %v908, 4294901760
  %910 = vmatmul.mubr.f32.gmra.mxu0 %v909
  %v911 = vpop.f32.mrf.mxu0
  %v912 = vadd.f32 %v721, %v911
  %v913 = vpop.f32.mrf.mxu0
  %914 = vmatprep.mubr.f32.mxu0 0.0
  %v915 = vand.u32 %v154, 4294901760
  %v916 = vsub.f32 %v154, %v915
  %v917 = vand.u32 %v916, 4294901760
  %918 = vmatmul.mubr.f32.gmra.mxu0 %v917
  %v919 = vpop.f32.mrf.mxu0
  %v920 = vadd.f32 %v728, %v919
  %v921 = vpop.f32.mrf.mxu0
  %922 = vmatprep.mubr.f32.mxu0 0.0
  %v923 = vand.u32 %v157, 4294901760
  %v924 = vsub.f32 %v157, %v923
  %v925 = vand.u32 %v924, 4294901760
  %926 = vmatmul.mubr.f32.gmra.mxu0 %v925
  %v927 = vpop.f32.mrf.mxu0
  %v928 = vadd.f32 %v735, %v927
  %v929 = vpop.f32.mrf.mxu0
  %930 = vmatprep.mubr.f32.mxu0 0.0
  %v931 = vand.u32 %v160, 4294901760
  %v932 = vsub.f32 %v160, %v931
  %v933 = vand.u32 %v932, 4294901760
  %934 = vmatmul.mubr.f32.gmra.mxu0 %v933
  %v935 = vpop.f32.mrf.mxu0
  %v936 = vadd.f32 %v742, %v935
  %v937 = vpop.f32.mrf.mxu0
  %938 = vmatprep.mubr.f32.mxu0 0.0
  %v939 = vand.u32 %v163, 4294901760
  %v940 = vsub.f32 %v163, %v939
  %v941 = vand.u32 %v940, 4294901760
  %942 = vmatmul.mubr.f32.gmra.mxu0 %v941
  %v943 = vpop.f32.mrf.mxu0
  %v944 = vadd.f32 %v749, %v943
  %v945 = vpop.f32.mrf.mxu0
  %946 = vmatprep.mubr.f32.mxu0 0.0
  %v947 = vand.u32 %v166, 4294901760
  %v948 = vsub.f32 %v166, %v947
  %v949 = vand.u32 %v948, 4294901760
  %950 = vmatmul.mubr.f32.gmra.mxu0 %v949
  %v951 = vpop.f32.mrf.mxu0
  %v952 = vadd.f32 %v756, %v951
  %v953 = vpop.f32.mrf.mxu0
  %954 = vmatprep.mubr.f32.mxu0 0.0
  %v955 = vand.u32 %v169, 4294901760
  %v956 = vsub.f32 %v169, %v955
  %v957 = vand.u32 %v956, 4294901760
  %958 = vmatmul.mubr.f32.gmra.mxu0 %v957
  %v959 = vpop.f32.mrf.mxu0
  %v960 = vadd.f32 %v763, %v959
  %v961 = vpop.f32.mrf.mxu0
  %962 = vdwg.mxu0
  %963 = vmatprep.subr.mxu0 0.0
  %964 = vmatpush1.msra.mxu0 0.0
  %965 = vmatprep.subr.mxu0 0.0
  %966 = vmatpush1.msra.mxu0 0.0
  %967 = vmatprep.subr.mxu0 0.0
  %968 = vmatpush1.msra.mxu0 0.0
  %969 = vmatprep.subr.mxu0 0.0
  %970 = vmatpush1.msra.mxu0 0.0
  %971 = vmatprep.subr.mxu0 0.0
  %972 = vmatpush1.msra.mxu0 0.0
  %973 = vmatprep.subr.mxu0 0.0
  %974 = vmatpush1.msra.mxu0 0.0
  %975 = vmatprep.subr.mxu0 0.0
  %976 = vmatpush1.msra.mxu0 0.0
  %977 = vmatprep.subr.mxu0 0.0
  %978 = vmatpush1.msra.mxu0 0.0
  %979 = vmatprep.subr.mxu0 0.0
  %980 = vmatpush1.msra.mxu0 0.0
  %981 = vmatprep.subr.mxu0 0.0
  %982 = vmatpush1.msra.mxu0 0.0
  %983 = vmatprep.subr.mxu0 0.0
  %984 = vmatpush1.msra.mxu0 0.0
  %985 = vmatprep.subr.mxu0 0.0
  %986 = vmatpush1.msra.mxu0 0.0
  %987 = vmatprep.subr.mxu0 0.0
  %v988 = vand.u32 %v45, 4294901760
  %v989 = vsub.f32 %v45, %v988
  %v990 = vand.u32 %v989, 4294901760
  %991 = vmatpush1.msra.mxu0 %v990
  %992 = vmatprep.subr.mxu0 0.0
  %v993 = vand.u32 %v44, 4294901760
  %v994 = vsub.f32 %v44, %v993
  %v995 = vand.u32 %v994, 4294901760
  %996 = vmatpush1.msra.mxu0 %v995
  %997 = vmatprep.subr.mxu0 0.0
  %v998 = vand.u32 %v43, 4294901760
  %v999 = vsub.f32 %v43, %v998
  %v1000 = vand.u32 %v999, 4294901760
  %1001 = vmatpush1.msra.mxu0 %v1000
  %1002 = vmatprep.subr.mxu0 0.0
  %v1003 = vand.u32 %v42, 4294901760
  %v1004 = vsub.f32 %v42, %v1003
  %v1005 = vand.u32 %v1004, 4294901760
  %1006 = vmatpush1.msra.mxu0 %v1005
  %1007 = vmatprep.subr.mxu0 0.0
  %1008 = vmatpush2.msra.mxu0 0.0
  %1009 = vmatprep.subr.mxu0 0.0
  %1010 = vmatpush2.msra.mxu0 0.0
  %1011 = vmatprep.subr.mxu0 0.0
  %1012 = vmatpush2.msra.mxu0 0.0
  %1013 = vmatprep.subr.mxu0 0.0
  %1014 = vmatpush2.msra.mxu0 0.0
  %1015 = vmatprep.subr.mxu0 0.0
  %1016 = vmatpush2.msra.mxu0 0.0
  %1017 = vmatprep.subr.mxu0 0.0
  %1018 = vmatpush2.msra.mxu0 0.0
  %1019 = vmatprep.subr.mxu0 0.0
  %1020 = vmatpush2.msra.mxu0 0.0
  %1021 = vmatprep.subr.mxu0 0.0
  %1022 = vmatpush2.msra.mxu0 0.0
  %1023 = vmatprep.subr.mxu0 0.0
  %1024 = vmatpush2.msra.mxu0 0.0
  %1025 = vmatprep.subr.mxu0 0.0
  %1026 = vmatpush2.msra.mxu0 0.0
  %1027 = vmatprep.subr.mxu0 0.0
  %1028 = vmatpush2.msra.mxu0 0.0
  %1029 = vmatprep.subr.mxu0 0.0
  %1030 = vmatpush2.msra.mxu0 0.0
  %1031 = vmatprep.subr.mxu0 0.0
  %1032 = vmatpush2.msra.mxu0 0.0
  %1033 = vmatprep.subr.mxu0 0.0
  %1034 = vmatpush2.msra.mxu0 0.0
  %1035 = vmatprep.subr.mxu0 0.0
  %1036 = vmatpush2.msra.mxu0 0.0
  %1037 = vmatprep.subr.mxu0 0.0
  %1038 = vmatpush2.msra.mxu0 0.0
  %1039 = vmatprep.mubr.f32.mxu0 0.0
  %v1040 = vand.u32 %v124, 4294901760
  %1041 = vmatmul.mubr.f32.gmra.mxu0 %v1040
  %v1042 = vpop.f32.mrf.mxu0
  %v1043 = vadd.f32 %v840, %v1042
  %v1044 = vpop.f32.mrf.mxu0
  %1045 = vmatprep.mubr.f32.mxu0 0.0
  %v1046 = vand.u32 %v127, 4294901760
  %1047 = vmatmul.mubr.f32.gmra.mxu0 %v1046
  %v1048 = vpop.f32.mrf.mxu0
  %v1049 = vadd.f32 %v848, %v1048
  %v1050 = vpop.f32.mrf.mxu0
  %1051 = vmatprep.mubr.f32.mxu0 0.0
  %v1052 = vand.u32 %v130, 4294901760
  %1053 = vmatmul.mubr.f32.gmra.mxu0 %v1052
  %v1054 = vpop.f32.mrf.mxu0
  %v1055 = vadd.f32 %v856, %v1054
  %v1056 = vpop.f32.mrf.mxu0
  %1057 = vmatprep.mubr.f32.mxu0 0.0
  %v1058 = vand.u32 %v133, 4294901760
  %1059 = vmatmul.mubr.f32.gmra.mxu0 %v1058
  %v1060 = vpop.f32.mrf.mxu0
  %v1061 = vadd.f32 %v864, %v1060
  %v1062 = vpop.f32.mrf.mxu0
  %1063 = vmatprep.mubr.f32.mxu0 0.0
  %v1064 = vand.u32 %v136, 4294901760
  %1065 = vmatmul.mubr.f32.gmra.mxu0 %v1064
  %v1066 = vpop.f32.mrf.mxu0
  %v1067 = vadd.f32 %v872, %v1066
  %v1068 = vpop.f32.mrf.mxu0
  %1069 = vmatprep.mubr.f32.mxu0 0.0
  %v1070 = vand.u32 %v139, 4294901760
  %1071 = vmatmul.mubr.f32.gmra.mxu0 %v1070
  %v1072 = vpop.f32.mrf.mxu0
  %v1073 = vadd.f32 %v880, %v1072
  %v1074 = vpop.f32.mrf.mxu0
  %1075 = vmatprep.mubr.f32.mxu0 0.0
  %v1076 = vand.u32 %v142, 4294901760
  %1077 = vmatmul.mubr.f32.gmra.mxu0 %v1076
  %v1078 = vpop.f32.mrf.mxu0
  %v1079 = vadd.f32 %v888, %v1078
  %v1080 = vpop.f32.mrf.mxu0
  %1081 = vmatprep.mubr.f32.mxu0 0.0
  %v1082 = vand.u32 %v145, 4294901760
  %1083 = vmatmul.mubr.f32.gmra.mxu0 %v1082
  %v1084 = vpop.f32.mrf.mxu0
  %v1085 = vadd.f32 %v896, %v1084
  %v1086 = vpop.f32.mrf.mxu0
  %1087 = vmatprep.mubr.f32.mxu0 0.0
  %v1088 = vand.u32 %v148, 4294901760
  %1089 = vmatmul.mubr.f32.gmra.mxu0 %v1088
  %v1090 = vpop.f32.mrf.mxu0
  %v1091 = vadd.f32 %v904, %v1090
  %v1092 = vpop.f32.mrf.mxu0
  %1093 = vmatprep.mubr.f32.mxu0 0.0
  %v1094 = vand.u32 %v151, 4294901760
  %1095 = vmatmul.mubr.f32.gmra.mxu0 %v1094
  %v1096 = vpop.f32.mrf.mxu0
  %v1097 = vadd.f32 %v912, %v1096
  %v1098 = vpop.f32.mrf.mxu0
  %1099 = vmatprep.mubr.f32.mxu0 0.0
  %v1100 = vand.u32 %v154, 4294901760
  %1101 = vmatmul.mubr.f32.gmra.mxu0 %v1100
  %v1102 = vpop.f32.mrf.mxu0
  %v1103 = vadd.f32 %v920, %v1102
  %v1104 = vpop.f32.mrf.mxu0
  %1105 = vmatprep.mubr.f32.mxu0 0.0
  %v1106 = vand.u32 %v157, 4294901760
  %1107 = vmatmul.mubr.f32.gmra.mxu0 %v1106
  %v1108 = vpop.f32.mrf.mxu0
  %v1109 = vadd.f32 %v928, %v1108
  %v1110 = vpop.f32.mrf.mxu0
  %1111 = vmatprep.mubr.f32.mxu0 0.0
  %v1112 = vand.u32 %v160, 4294901760
  %1113 = vmatmul.mubr.f32.gmra.mxu0 %v1112
  %v1114 = vpop.f32.mrf.mxu0
  %v1115 = vadd.f32 %v936, %v1114
  %v1116 = vpop.f32.mrf.mxu0
  %1117 = vmatprep.mubr.f32.mxu0 0.0
  %v1118 = vand.u32 %v163, 4294901760
  %1119 = vmatmul.mubr.f32.gmra.mxu0 %v1118
  %v1120 = vpop.f32.mrf.mxu0
  %v1121 = vadd.f32 %v944, %v1120
  %v1122 = vpop.f32.mrf.mxu0
  %1123 = vmatprep.mubr.f32.mxu0 0.0
  %v1124 = vand.u32 %v166, 4294901760
  %1125 = vmatmul.mubr.f32.gmra.mxu0 %v1124
  %v1126 = vpop.f32.mrf.mxu0
  %v1127 = vadd.f32 %v952, %v1126
  %v1128 = vpop.f32.mrf.mxu0
  %1129 = vmatprep.mubr.f32.mxu0 0.0
  %v1130 = vand.u32 %v169, 4294901760
  %1131 = vmatmul.mubr.f32.gmra.mxu0 %v1130
  %v1132 = vpop.f32.mrf.mxu0
  %v1133 = vadd.f32 %v960, %v1132
  %v1134 = vpop.f32.mrf.mxu0
  %1135 = vdwg.mxu0
  %1136 = vmatprep.subr.mxu0 0.0
  %1137 = vmatpush1.msra.mxu0 0.0
  %1138 = vmatprep.subr.mxu0 0.0
  %1139 = vmatpush1.msra.mxu0 0.0
  %1140 = vmatprep.subr.mxu0 0.0
  %1141 = vmatpush1.msra.mxu0 0.0
  %1142 = vmatprep.subr.mxu0 0.0
  %1143 = vmatpush1.msra.mxu0 0.0
  %1144 = vmatprep.subr.mxu0 0.0
  %1145 = vmatpush1.msra.mxu0 0.0
  %1146 = vmatprep.subr.mxu0 0.0
  %1147 = vmatpush1.msra.mxu0 0.0
  %1148 = vmatprep.subr.mxu0 0.0
  %1149 = vmatpush1.msra.mxu0 0.0
  %1150 = vmatprep.subr.mxu0 0.0
  %1151 = vmatpush1.msra.mxu0 0.0
  %1152 = vmatprep.subr.mxu0 0.0
  %1153 = vmatpush1.msra.mxu0 0.0
  %1154 = vmatprep.subr.mxu0 0.0
  %1155 = vmatpush1.msra.mxu0 0.0
  %1156 = vmatprep.subr.mxu0 0.0
  %1157 = vmatpush1.msra.mxu0 0.0
  %1158 = vmatprep.subr.mxu0 0.0
  %1159 = vmatpush1.msra.mxu0 0.0
  %1160 = vmatprep.subr.mxu0 0.0
  %v1161 = vand.u32 %v45, 4294901760
  %1162 = vmatpush1.msra.mxu0 %v1161
  %1163 = vmatprep.subr.mxu0 0.0
  %v1164 = vand.u32 %v44, 4294901760
  %1165 = vmatpush1.msra.mxu0 %v1164
  %1166 = vmatprep.subr.mxu0 0.0
  %v1167 = vand.u32 %v43, 4294901760
  %1168 = vmatpush1.msra.mxu0 %v1167
  %1169 = vmatprep.subr.mxu0 0.0
  %v1170 = vand.u32 %v42, 4294901760
  %1171 = vmatpush1.msra.mxu0 %v1170
  %1172 = vmatprep.subr.mxu0 0.0
  %1173 = vmatpush2.msra.mxu0 0.0
  %1174 = vmatprep.subr.mxu0 0.0
  %1175 = vmatpush2.msra.mxu0 0.0
  %1176 = vmatprep.subr.mxu0 0.0
  %1177 = vmatpush2.msra.mxu0 0.0
  %1178 = vmatprep.subr.mxu0 0.0
  %1179 = vmatpush2.msra.mxu0 0.0
  %1180 = vmatprep.subr.mxu0 0.0
  %1181 = vmatpush2.msra.mxu0 0.0
  %1182 = vmatprep.subr.mxu0 0.0
  %1183 = vmatpush2.msra.mxu0 0.0
  %1184 = vmatprep.subr.mxu0 0.0
  %1185 = vmatpush2.msra.mxu0 0.0
  %1186 = vmatprep.subr.mxu0 0.0
  %1187 = vmatpush2.msra.mxu0 0.0
  %1188 = vmatprep.subr.mxu0 0.0
  %1189 = vmatpush2.msra.mxu0 0.0
  %1190 = vmatprep.subr.mxu0 0.0
  %1191 = vmatpush2.msra.mxu0 0.0
  %1192 = vmatprep.subr.mxu0 0.0
  %1193 = vmatpush2.msra.mxu0 0.0
  %1194 = vmatprep.subr.mxu0 0.0
  %1195 = vmatpush2.msra.mxu0 0.0
  %1196 = vmatprep.subr.mxu0 0.0
  %1197 = vmatpush2.msra.mxu0 0.0
  %1198 = vmatprep.subr.mxu0 0.0
  %1199 = vmatpush2.msra.mxu0 0.0
  %1200 = vmatprep.subr.mxu0 0.0
  %1201 = vmatpush2.msra.mxu0 0.0
  %1202 = vmatprep.subr.mxu0 0.0
  %1203 = vmatpush2.msra.mxu0 0.0
  %1204 = vmatprep.mubr.f32.mxu0 0.0
  %v1205 = vand.u32 %v124, 4294901760
  %1206 = vmatmul.mubr.f32.gmra.mxu0 %v1205
  %v1207 = vpop.f32.mrf.mxu0
  %v1208 = vadd.f32 %v1043, %v1207
  %v1209 = vpop.f32.mrf.mxu0
  %1210 = vmatprep.mubr.f32.mxu0 0.0
  %v1211 = vand.u32 %v127, 4294901760
  %1212 = vmatmul.mubr.f32.gmra.mxu0 %v1211
  %v1213 = vpop.f32.mrf.mxu0
  %v1214 = vadd.f32 %v1049, %v1213
  %v1215 = vpop.f32.mrf.mxu0
  %1216 = vmatprep.mubr.f32.mxu0 0.0
  %v1217 = vand.u32 %v130, 4294901760
  %1218 = vmatmul.mubr.f32.gmra.mxu0 %v1217
  %v1219 = vpop.f32.mrf.mxu0
  %v1220 = vadd.f32 %v1055, %v1219
  %v1221 = vpop.f32.mrf.mxu0
  %1222 = vmatprep.mubr.f32.mxu0 0.0
  %v1223 = vand.u32 %v133, 4294901760
  %1224 = vmatmul.mubr.f32.gmra.mxu0 %v1223
  %v1225 = vpop.f32.mrf.mxu0
  %v1226 = vadd.f32 %v1061, %v1225
  %v1227 = vpop.f32.mrf.mxu0
  %1228 = vmatprep.mubr.f32.mxu0 0.0
  %v1229 = vand.u32 %v136, 4294901760
  %1230 = vmatmul.mubr.f32.gmra.mxu0 %v1229
  %v1231 = vpop.f32.mrf.mxu0
  %v1232 = vadd.f32 %v1067, %v1231
  %v1233 = vpop.f32.mrf.mxu0
  %1234 = vmatprep.mubr.f32.mxu0 0.0
  %v1235 = vand.u32 %v139, 4294901760
  %1236 = vmatmul.mubr.f32.gmra.mxu0 %v1235
  %v1237 = vpop.f32.mrf.mxu0
  %v1238 = vadd.f32 %v1073, %v1237
  %v1239 = vpop.f32.mrf.mxu0
  %1240 = vmatprep.mubr.f32.mxu0 0.0
  %v1241 = vand.u32 %v142, 4294901760
  %1242 = vmatmul.mubr.f32.gmra.mxu0 %v1241
  %v1243 = vpop.f32.mrf.mxu0
  %v1244 = vadd.f32 %v1079, %v1243
  %v1245 = vpop.f32.mrf.mxu0
  %1246 = vmatprep.mubr.f32.mxu0 0.0
  %v1247 = vand.u32 %v145, 4294901760
  %1248 = vmatmul.mubr.f32.gmra.mxu0 %v1247
  %v1249 = vpop.f32.mrf.mxu0
  %v1250 = vadd.f32 %v1085, %v1249
  %v1251 = vpop.f32.mrf.mxu0
  %1252 = vmatprep.mubr.f32.mxu0 0.0
  %v1253 = vand.u32 %v148, 4294901760
  %1254 = vmatmul.mubr.f32.gmra.mxu0 %v1253
  %v1255 = vpop.f32.mrf.mxu0
  %v1256 = vadd.f32 %v1091, %v1255
  %v1257 = vpop.f32.mrf.mxu0
  %1258 = vmatprep.mubr.f32.mxu0 0.0
  %v1259 = vand.u32 %v151, 4294901760
  %1260 = vmatmul.mubr.f32.gmra.mxu0 %v1259
  %v1261 = vpop.f32.mrf.mxu0
  %v1262 = vadd.f32 %v1097, %v1261
  %v1263 = vpop.f32.mrf.mxu0
  %1264 = vmatprep.mubr.f32.mxu0 0.0
  %v1265 = vand.u32 %v154, 4294901760
  %1266 = vmatmul.mubr.f32.gmra.mxu0 %v1265
  %v1267 = vpop.f32.mrf.mxu0
  %v1268 = vadd.f32 %v1103, %v1267
  %v1269 = vpop.f32.mrf.mxu0
  %1270 = vmatprep.mubr.f32.mxu0 0.0
  %v1271 = vand.u32 %v157, 4294901760
  %1272 = vmatmul.mubr.f32.gmra.mxu0 %v1271
  %v1273 = vpop.f32.mrf.mxu0
  %v1274 = vadd.f32 %v1109, %v1273
  %v1275 = vpop.f32.mrf.mxu0
  %1276 = vmatprep.mubr.f32.mxu0 0.0
  %v1277 = vand.u32 %v160, 4294901760
  %1278 = vmatmul.mubr.f32.gmra.mxu0 %v1277
  %v1279 = vpop.f32.mrf.mxu0
  %v1280 = vadd.f32 %v1115, %v1279
  %v1281 = vpop.f32.mrf.mxu0
  %1282 = vmatprep.mubr.f32.mxu0 0.0
  %v1283 = vand.u32 %v163, 4294901760
  %1284 = vmatmul.mubr.f32.gmra.mxu0 %v1283
  %v1285 = vpop.f32.mrf.mxu0
  %v1286 = vadd.f32 %v1121, %v1285
  %v1287 = vpop.f32.mrf.mxu0
  %1288 = vmatprep.mubr.f32.mxu0 0.0
  %v1289 = vand.u32 %v166, 4294901760
  %1290 = vmatmul.mubr.f32.gmra.mxu0 %v1289
  %v1291 = vpop.f32.mrf.mxu0
  %v1292 = vadd.f32 %v1127, %v1291
  %v1293 = vpop.f32.mrf.mxu0
  %1294 = vmatprep.mubr.f32.mxu0 0.0
  %v1295 = vand.u32 %v169, 4294901760
  %1296 = vmatmul.mubr.f32.gmra.mxu0 %v1295
  %v1297 = vpop.f32.mrf.mxu0
  %v1298 = vadd.f32 %v1133, %v1297
  %v1299 = vpop.f32.mrf.mxu0
  %1300 = vdwg.mxu0
  %v1301 = vld [vmem:[%s4] sm:$0xff]
  %v1302 = vld [vmem:[%s4 + $0x8] sm:$0xff]
  %v1303 = vld [vmem:[%s4 + $0x10] sm:$0xff]
  %v1304 = vld [vmem:[%s4 + $0x18] sm:$0xff]
  %v1305 = vld [vmem:[%s4 + $0x20] sm:$0xff]
  %v1306 = vld [vmem:[%s4 + $0x28] sm:$0xff]
  %v1307 = vld [vmem:[%s4 + $0x30] sm:$0xff]
  %v1308 = vld [vmem:[%s4 + $0x38] sm:$0xff]
  %v1309 = vld [vmem:[%s4 + $0x40] sm:$0xff]
  %v1310 = vld [vmem:[%s4 + $0x48] sm:$0xff]
  %v1311 = vld [vmem:[%s4 + $0x50] sm:$0xff]
  %v1312 = vld [vmem:[%s4 + $0x58] sm:$0xff]
  %v1313 = vld [vmem:[%s4 + $0x60] sm:$0xff]
  %v1314 = vld [vmem:[%s4 + $0x68] sm:$0xff]
  %v1315 = vld [vmem:[%s4 + $0x70] sm:$0xff]
  %v1316 = vld [vmem:[%s4 + $0x78] sm:$0xff]
  %vm1317 = vcmask 523264
  %v1319 = vsel %vm1317, %v1301, 0
  %v1322 = vsel %vm1317, %v1302, 0
  %v1325 = vsel %vm1317, %v1303, 0
  %v1328 = vsel %vm1317, %v1304, 0
  %v1331 = vsel %vm1317, %v1305, 0
  %v1334 = vsel %vm1317, %v1306, 0
  %v1337 = vsel %vm1317, %v1307, 0
  %v1340 = vsel %vm1317, %v1308, 0
  %v1343 = vsel %vm1317, %v1309, 0
  %v1346 = vsel %vm1317, %v1310, 0
  %v1349 = vsel %vm1317, %v1311, 0
  %v1352 = vsel %vm1317, %v1312, 0
  %v1355 = vsel %vm1317, %v1313, 0
  %v1358 = vsel %vm1317, %v1314, 0
  %v1361 = vsel %vm1317, %v1315, 0
  %v1364 = vsel %vm1317, %v1316, 0
  %1366 = vmatprep.subr.mxu0 0.0
  %1367 = vmatpush1.msra.mxu0 0.0
  %1368 = vmatprep.subr.mxu0 0.0
  %1369 = vmatpush1.msra.mxu0 0.0
  %1370 = vmatprep.subr.mxu0 0.0
  %1371 = vmatpush1.msra.mxu0 0.0
  %1372 = vmatprep.subr.mxu0 0.0
  %1373 = vmatpush1.msra.mxu0 0.0
  %1374 = vmatprep.subr.mxu0 0.0
  %1375 = vmatpush1.msra.mxu0 0.0
  %1376 = vmatprep.subr.mxu0 0.0
  %1377 = vmatpush1.msra.mxu0 0.0
  %1378 = vmatprep.subr.mxu0 0.0
  %1379 = vmatpush1.msra.mxu0 0.0
  %1380 = vmatprep.subr.mxu0 0.0
  %1381 = vmatpush1.msra.mxu0 0.0
  %1382 = vmatprep.subr.mxu0 0.0
  %v1383 = vand.u32 %v77, 4294901760
  %1384 = vmatpush1.msra.mxu0 %v1383
  %1385 = vmatprep.subr.mxu0 0.0
  %v1386 = vand.u32 %v76, 4294901760
  %1387 = vmatpush1.msra.mxu0 %v1386
  %1388 = vmatprep.subr.mxu0 0.0
  %v1389 = vand.u32 %v75, 4294901760
  %1390 = vmatpush1.msra.mxu0 %v1389
  %1391 = vmatprep.subr.mxu0 0.0
  %v1392 = vand.u32 %v74, 4294901760
  %1393 = vmatpush1.msra.mxu0 %v1392
  %1394 = vmatprep.subr.mxu0 0.0
  %v1395 = vand.u32 %v73, 4294901760
  %1396 = vmatpush1.msra.mxu0 %v1395
  %1397 = vmatprep.subr.mxu0 0.0
  %v1398 = vand.u32 %v72, 4294901760
  %1399 = vmatpush1.msra.mxu0 %v1398
  %1400 = vmatprep.subr.mxu0 0.0
  %v1401 = vand.u32 %v71, 4294901760
  %1402 = vmatpush1.msra.mxu0 %v1401
  %1403 = vmatprep.subr.mxu0 0.0
  %v1404 = vand.u32 %v70, 4294901760
  %1405 = vmatpush1.msra.mxu0 %v1404
  %1406 = vmatprep.subr.mxu0 0.0
  %1407 = vmatpush2.msra.mxu0 0.0
  %1408 = vmatprep.subr.mxu0 0.0
  %1409 = vmatpush2.msra.mxu0 0.0
  %1410 = vmatprep.subr.mxu0 0.0
  %1411 = vmatpush2.msra.mxu0 0.0
  %1412 = vmatprep.subr.mxu0 0.0
  %1413 = vmatpush2.msra.mxu0 0.0
  %1414 = vmatprep.subr.mxu0 0.0
  %1415 = vmatpush2.msra.mxu0 0.0
  %1416 = vmatprep.subr.mxu0 0.0
  %1417 = vmatpush2.msra.mxu0 0.0
  %1418 = vmatprep.subr.mxu0 0.0
  %1419 = vmatpush2.msra.mxu0 0.0
  %1420 = vmatprep.subr.mxu0 0.0
  %1421 = vmatpush2.msra.mxu0 0.0
  %1422 = vmatprep.subr.mxu0 0.0
  %1423 = vmatpush2.msra.mxu0 0.0
  %1424 = vmatprep.subr.mxu0 0.0
  %1425 = vmatpush2.msra.mxu0 0.0
  %1426 = vmatprep.subr.mxu0 0.0
  %1427 = vmatpush2.msra.mxu0 0.0
  %1428 = vmatprep.subr.mxu0 0.0
  %1429 = vmatpush2.msra.mxu0 0.0
  %1430 = vmatprep.subr.mxu0 0.0
  %1431 = vmatpush2.msra.mxu0 0.0
  %1432 = vmatprep.subr.mxu0 0.0
  %1433 = vmatpush2.msra.mxu0 0.0
  %1434 = vmatprep.subr.mxu0 0.0
  %1435 = vmatpush2.msra.mxu0 0.0
  %1436 = vmatprep.subr.mxu0 0.0
  %1437 = vmatpush2.msra.mxu0 0.0
  %1438 = vmatprep.mubr.f32.mxu0 0.0
  %v1439 = vand.u32 %v1319, 4294901760
  %v1440 = vsub.f32 %v1319, %v1439
  %v1441 = vand.u32 %v1440, 4294901760
  %v1442 = vsub.f32 %v1440, %v1441
  %v1443 = vand.u32 %v1442, 4294901760
  %1444 = vmatmul.mubr.f32.gmra.mxu0 %v1443
  %v1445 = vpop.f32.mrf.mxu0
  %v1446 = vadd.f32 0.0, %v1445
  %v1447 = vpop.f32.mrf.mxu0
  %1448 = vmatprep.mubr.f32.mxu0 0.0
  %v1449 = vand.u32 %v1322, 4294901760
  %v1450 = vsub.f32 %v1322, %v1449
  %v1451 = vand.u32 %v1450, 4294901760
  %v1452 = vsub.f32 %v1450, %v1451
  %v1453 = vand.u32 %v1452, 4294901760
  %1454 = vmatmul.mubr.f32.gmra.mxu0 %v1453
  %v1455 = vpop.f32.mrf.mxu0
  %v1456 = vadd.f32 0.0, %v1455
  %v1457 = vpop.f32.mrf.mxu0
  %1458 = vmatprep.mubr.f32.mxu0 0.0
  %v1459 = vand.u32 %v1325, 4294901760
  %v1460 = vsub.f32 %v1325, %v1459
  %v1461 = vand.u32 %v1460, 4294901760
  %v1462 = vsub.f32 %v1460, %v1461
  %v1463 = vand.u32 %v1462, 4294901760
  %1464 = vmatmul.mubr.f32.gmra.mxu0 %v1463
  %v1465 = vpop.f32.mrf.mxu0
  %v1466 = vadd.f32 0.0, %v1465
  %v1467 = vpop.f32.mrf.mxu0
  %1468 = vmatprep.mubr.f32.mxu0 0.0
  %v1469 = vand.u32 %v1328, 4294901760
  %v1470 = vsub.f32 %v1328, %v1469
  %v1471 = vand.u32 %v1470, 4294901760
  %v1472 = vsub.f32 %v1470, %v1471
  %v1473 = vand.u32 %v1472, 4294901760
  %1474 = vmatmul.mubr.f32.gmra.mxu0 %v1473
  %v1475 = vpop.f32.mrf.mxu0
  %v1476 = vadd.f32 0.0, %v1475
  %v1477 = vpop.f32.mrf.mxu0
  %1478 = vmatprep.mubr.f32.mxu0 0.0
  %v1479 = vand.u32 %v1331, 4294901760
  %v1480 = vsub.f32 %v1331, %v1479
  %v1481 = vand.u32 %v1480, 4294901760
  %v1482 = vsub.f32 %v1480, %v1481
  %v1483 = vand.u32 %v1482, 4294901760
  %1484 = vmatmul.mubr.f32.gmra.mxu0 %v1483
  %v1485 = vpop.f32.mrf.mxu0
  %v1486 = vadd.f32 0.0, %v1485
  %v1487 = vpop.f32.mrf.mxu0
  %1488 = vmatprep.mubr.f32.mxu0 0.0
  %v1489 = vand.u32 %v1334, 4294901760
  %v1490 = vsub.f32 %v1334, %v1489
  %v1491 = vand.u32 %v1490, 4294901760
  %v1492 = vsub.f32 %v1490, %v1491
  %v1493 = vand.u32 %v1492, 4294901760
  %1494 = vmatmul.mubr.f32.gmra.mxu0 %v1493
  %v1495 = vpop.f32.mrf.mxu0
  %v1496 = vadd.f32 0.0, %v1495
  %v1497 = vpop.f32.mrf.mxu0
  %1498 = vmatprep.mubr.f32.mxu0 0.0
  %v1499 = vand.u32 %v1337, 4294901760
  %v1500 = vsub.f32 %v1337, %v1499
  %v1501 = vand.u32 %v1500, 4294901760
  %v1502 = vsub.f32 %v1500, %v1501
  %v1503 = vand.u32 %v1502, 4294901760
  %1504 = vmatmul.mubr.f32.gmra.mxu0 %v1503
  %v1505 = vpop.f32.mrf.mxu0
  %v1506 = vadd.f32 0.0, %v1505
  %v1507 = vpop.f32.mrf.mxu0
  %1508 = vmatprep.mubr.f32.mxu0 0.0
  %v1509 = vand.u32 %v1340, 4294901760
  %v1510 = vsub.f32 %v1340, %v1509
  %v1511 = vand.u32 %v1510, 4294901760
  %v1512 = vsub.f32 %v1510, %v1511
  %v1513 = vand.u32 %v1512, 4294901760
  %1514 = vmatmul.mubr.f32.gmra.mxu0 %v1513
  %v1515 = vpop.f32.mrf.mxu0
  %v1516 = vadd.f32 0.0, %v1515
  %v1517 = vpop.f32.mrf.mxu0
  %1518 = vmatprep.mubr.f32.mxu0 0.0
  %v1519 = vand.u32 %v1343, 4294901760
  %v1520 = vsub.f32 %v1343, %v1519
  %v1521 = vand.u32 %v1520, 4294901760
  %v1522 = vsub.f32 %v1520, %v1521
  %v1523 = vand.u32 %v1522, 4294901760
  %1524 = vmatmul.mubr.f32.gmra.mxu0 %v1523
  %v1525 = vpop.f32.mrf.mxu0
  %v1526 = vadd.f32 0.0, %v1525
  %v1527 = vpop.f32.mrf.mxu0
  %1528 = vmatprep.mubr.f32.mxu0 0.0
  %v1529 = vand.u32 %v1346, 4294901760
  %v1530 = vsub.f32 %v1346, %v1529
  %v1531 = vand.u32 %v1530, 4294901760
  %v1532 = vsub.f32 %v1530, %v1531
  %v1533 = vand.u32 %v1532, 4294901760
  %1534 = vmatmul.mubr.f32.gmra.mxu0 %v1533
  %v1535 = vpop.f32.mrf.mxu0
  %v1536 = vadd.f32 0.0, %v1535
  %v1537 = vpop.f32.mrf.mxu0
  %1538 = vmatprep.mubr.f32.mxu0 0.0
  %v1539 = vand.u32 %v1349, 4294901760
  %v1540 = vsub.f32 %v1349, %v1539
  %v1541 = vand.u32 %v1540, 4294901760
  %v1542 = vsub.f32 %v1540, %v1541
  %v1543 = vand.u32 %v1542, 4294901760
  %1544 = vmatmul.mubr.f32.gmra.mxu0 %v1543
  %v1545 = vpop.f32.mrf.mxu0
  %v1546 = vadd.f32 0.0, %v1545
  %v1547 = vpop.f32.mrf.mxu0
  %1548 = vmatprep.mubr.f32.mxu0 0.0
  %v1549 = vand.u32 %v1352, 4294901760
  %v1550 = vsub.f32 %v1352, %v1549
  %v1551 = vand.u32 %v1550, 4294901760
  %v1552 = vsub.f32 %v1550, %v1551
  %v1553 = vand.u32 %v1552, 4294901760
  %1554 = vmatmul.mubr.f32.gmra.mxu0 %v1553
  %v1555 = vpop.f32.mrf.mxu0
  %v1556 = vadd.f32 0.0, %v1555
  %v1557 = vpop.f32.mrf.mxu0
  %1558 = vmatprep.mubr.f32.mxu0 0.0
  %v1559 = vand.u32 %v1355, 4294901760
  %v1560 = vsub.f32 %v1355, %v1559
  %v1561 = vand.u32 %v1560, 4294901760
  %v1562 = vsub.f32 %v1560, %v1561
  %v1563 = vand.u32 %v1562, 4294901760
  %1564 = vmatmul.mubr.f32.gmra.mxu0 %v1563
  %v1565 = vpop.f32.mrf.mxu0
  %v1566 = vadd.f32 0.0, %v1565
  %v1567 = vpop.f32.mrf.mxu0
  %1568 = vmatprep.mubr.f32.mxu0 0.0
  %v1569 = vand.u32 %v1358, 4294901760
  %v1570 = vsub.f32 %v1358, %v1569
  %v1571 = vand.u32 %v1570, 4294901760
  %v1572 = vsub.f32 %v1570, %v1571
  %v1573 = vand.u32 %v1572, 4294901760
  %1574 = vmatmul.mubr.f32.gmra.mxu0 %v1573
  %v1575 = vpop.f32.mrf.mxu0
  %v1576 = vadd.f32 0.0, %v1575
  %v1577 = vpop.f32.mrf.mxu0
  %1578 = vmatprep.mubr.f32.mxu0 0.0
  %v1579 = vand.u32 %v1361, 4294901760
  %v1580 = vsub.f32 %v1361, %v1579
  %v1581 = vand.u32 %v1580, 4294901760
  %v1582 = vsub.f32 %v1580, %v1581
  %v1583 = vand.u32 %v1582, 4294901760
  %1584 = vmatmul.mubr.f32.gmra.mxu0 %v1583
  %v1585 = vpop.f32.mrf.mxu0
  %v1586 = vadd.f32 0.0, %v1585
  %v1587 = vpop.f32.mrf.mxu0
  %1588 = vmatprep.mubr.f32.mxu0 0.0
  %v1589 = vand.u32 %v1364, 4294901760
  %v1590 = vsub.f32 %v1364, %v1589
  %v1591 = vand.u32 %v1590, 4294901760
  %v1592 = vsub.f32 %v1590, %v1591
  %v1593 = vand.u32 %v1592, 4294901760
  %1594 = vmatmul.mubr.f32.gmra.mxu0 %v1593
  %v1595 = vpop.f32.mrf.mxu0
  %v1596 = vadd.f32 0.0, %v1595
  %v1597 = vpop.f32.mrf.mxu0
  %1598 = vdwg.mxu0
  %1599 = vmatprep.subr.mxu0 0.0
  %1600 = vmatpush1.msra.mxu0 0.0
  %1601 = vmatprep.subr.mxu0 0.0
  %1602 = vmatpush1.msra.mxu0 0.0
  %1603 = vmatprep.subr.mxu0 0.0
  %1604 = vmatpush1.msra.mxu0 0.0
  %1605 = vmatprep.subr.mxu0 0.0
  %1606 = vmatpush1.msra.mxu0 0.0
  %1607 = vmatprep.subr.mxu0 0.0
  %1608 = vmatpush1.msra.mxu0 0.0
  %1609 = vmatprep.subr.mxu0 0.0
  %1610 = vmatpush1.msra.mxu0 0.0
  %1611 = vmatprep.subr.mxu0 0.0
  %1612 = vmatpush1.msra.mxu0 0.0
  %1613 = vmatprep.subr.mxu0 0.0
  %1614 = vmatpush1.msra.mxu0 0.0
  %1615 = vmatprep.subr.mxu0 0.0
  %v1616 = vand.u32 %v77, 4294901760
  %v1617 = vsub.f32 %v77, %v1616
  %v1618 = vand.u32 %v1617, 4294901760
  %v1619 = vsub.f32 %v1617, %v1618
  %v1620 = vand.u32 %v1619, 4294901760
  %1621 = vmatpush1.msra.mxu0 %v1620
  %1622 = vmatprep.subr.mxu0 0.0
  %v1623 = vand.u32 %v76, 4294901760
  %v1624 = vsub.f32 %v76, %v1623
  %v1625 = vand.u32 %v1624, 4294901760
  %v1626 = vsub.f32 %v1624, %v1625
  %v1627 = vand.u32 %v1626, 4294901760
  %1628 = vmatpush1.msra.mxu0 %v1627
  %1629 = vmatprep.subr.mxu0 0.0
  %v1630 = vand.u32 %v75, 4294901760
  %v1631 = vsub.f32 %v75, %v1630
  %v1632 = vand.u32 %v1631, 4294901760
  %v1633 = vsub.f32 %v1631, %v1632
  %v1634 = vand.u32 %v1633, 4294901760
  %1635 = vmatpush1.msra.mxu0 %v1634
  %1636 = vmatprep.subr.mxu0 0.0
  %v1637 = vand.u32 %v74, 4294901760
  %v1638 = vsub.f32 %v74, %v1637
  %v1639 = vand.u32 %v1638, 4294901760
  %v1640 = vsub.f32 %v1638, %v1639
  %v1641 = vand.u32 %v1640, 4294901760
  %1642 = vmatpush1.msra.mxu0 %v1641
  %1643 = vmatprep.subr.mxu0 0.0
  %v1644 = vand.u32 %v73, 4294901760
  %v1645 = vsub.f32 %v73, %v1644
  %v1646 = vand.u32 %v1645, 4294901760
  %v1647 = vsub.f32 %v1645, %v1646
  %v1648 = vand.u32 %v1647, 4294901760
  %1649 = vmatpush1.msra.mxu0 %v1648
  %1650 = vmatprep.subr.mxu0 0.0
  %v1651 = vand.u32 %v72, 4294901760
  %v1652 = vsub.f32 %v72, %v1651
  %v1653 = vand.u32 %v1652, 4294901760
  %v1654 = vsub.f32 %v1652, %v1653
  %v1655 = vand.u32 %v1654, 4294901760
  %1656 = vmatpush1.msra.mxu0 %v1655
  %1657 = vmatprep.subr.mxu0 0.0
  %v1658 = vand.u32 %v71, 4294901760
  %v1659 = vsub.f32 %v71, %v1658
  %v1660 = vand.u32 %v1659, 4294901760
  %v1661 = vsub.f32 %v1659, %v1660
  %v1662 = vand.u32 %v1661, 4294901760
  %1663 = vmatpush1.msra.mxu0 %v1662
  %1664 = vmatprep.subr.mxu0 0.0
  %v1665 = vand.u32 %v70, 4294901760
  %v1666 = vsub.f32 %v70, %v1665
  %v1667 = vand.u32 %v1666, 4294901760
  %v1668 = vsub.f32 %v1666, %v1667
  %v1669 = vand.u32 %v1668, 4294901760
  %1670 = vmatpush1.msra.mxu0 %v1669
  %1671 = vmatprep.subr.mxu0 0.0
  %1672 = vmatpush2.msra.mxu0 0.0
  %1673 = vmatprep.subr.mxu0 0.0
  %1674 = vmatpush2.msra.mxu0 0.0
  %1675 = vmatprep.subr.mxu0 0.0
  %1676 = vmatpush2.msra.mxu0 0.0
  %1677 = vmatprep.subr.mxu0 0.0
  %1678 = vmatpush2.msra.mxu0 0.0
  %1679 = vmatprep.subr.mxu0 0.0
  %1680 = vmatpush2.msra.mxu0 0.0
  %1681 = vmatprep.subr.mxu0 0.0
  %1682 = vmatpush2.msra.mxu0 0.0
  %1683 = vmatprep.subr.mxu0 0.0
  %1684 = vmatpush2.msra.mxu0 0.0
  %1685 = vmatprep.subr.mxu0 0.0
  %1686 = vmatpush2.msra.mxu0 0.0
  %1687 = vmatprep.subr.mxu0 0.0
  %1688 = vmatpush2.msra.mxu0 0.0
  %1689 = vmatprep.subr.mxu0 0.0
  %1690 = vmatpush2.msra.mxu0 0.0
  %1691 = vmatprep.subr.mxu0 0.0
  %1692 = vmatpush2.msra.mxu0 0.0
  %1693 = vmatprep.subr.mxu0 0.0
  %1694 = vmatpush2.msra.mxu0 0.0
  %1695 = vmatprep.subr.mxu0 0.0
  %1696 = vmatpush2.msra.mxu0 0.0
  %1697 = vmatprep.subr.mxu0 0.0
  %1698 = vmatpush2.msra.mxu0 0.0
  %1699 = vmatprep.subr.mxu0 0.0
  %1700 = vmatpush2.msra.mxu0 0.0
  %1701 = vmatprep.subr.mxu0 0.0
  %1702 = vmatpush2.msra.mxu0 0.0
  %1703 = vmatprep.mubr.f32.mxu0 0.0
  %v1704 = vand.u32 %v1319, 4294901760
  %1705 = vmatmul.mubr.f32.gmra.mxu0 %v1704
  %v1706 = vpop.f32.mrf.mxu0
  %v1707 = vadd.f32 %v1446, %v1706
  %v1708 = vpop.f32.mrf.mxu0
  %1709 = vmatprep.mubr.f32.mxu0 0.0
  %v1710 = vand.u32 %v1322, 4294901760
  %1711 = vmatmul.mubr.f32.gmra.mxu0 %v1710
  %v1712 = vpop.f32.mrf.mxu0
  %v1713 = vadd.f32 %v1456, %v1712
  %v1714 = vpop.f32.mrf.mxu0
  %1715 = vmatprep.mubr.f32.mxu0 0.0
  %v1716 = vand.u32 %v1325, 4294901760
  %1717 = vmatmul.mubr.f32.gmra.mxu0 %v1716
  %v1718 = vpop.f32.mrf.mxu0
  %v1719 = vadd.f32 %v1466, %v1718
  %v1720 = vpop.f32.mrf.mxu0
  %1721 = vmatprep.mubr.f32.mxu0 0.0
  %v1722 = vand.u32 %v1328, 4294901760
  %1723 = vmatmul.mubr.f32.gmra.mxu0 %v1722
  %v1724 = vpop.f32.mrf.mxu0
  %v1725 = vadd.f32 %v1476, %v1724
  %v1726 = vpop.f32.mrf.mxu0
  %1727 = vmatprep.mubr.f32.mxu0 0.0
  %v1728 = vand.u32 %v1331, 4294901760
  %1729 = vmatmul.mubr.f32.gmra.mxu0 %v1728
  %v1730 = vpop.f32.mrf.mxu0
  %v1731 = vadd.f32 %v1486, %v1730
  %v1732 = vpop.f32.mrf.mxu0
  %1733 = vmatprep.mubr.f32.mxu0 0.0
  %v1734 = vand.u32 %v1334, 4294901760
  %1735 = vmatmul.mubr.f32.gmra.mxu0 %v1734
  %v1736 = vpop.f32.mrf.mxu0
  %v1737 = vadd.f32 %v1496, %v1736
  %v1738 = vpop.f32.mrf.mxu0
  %1739 = vmatprep.mubr.f32.mxu0 0.0
  %v1740 = vand.u32 %v1337, 4294901760
  %1741 = vmatmul.mubr.f32.gmra.mxu0 %v1740
  %v1742 = vpop.f32.mrf.mxu0
  %v1743 = vadd.f32 %v1506, %v1742
  %v1744 = vpop.f32.mrf.mxu0
  %1745 = vmatprep.mubr.f32.mxu0 0.0
  %v1746 = vand.u32 %v1340, 4294901760
  %1747 = vmatmul.mubr.f32.gmra.mxu0 %v1746
  %v1748 = vpop.f32.mrf.mxu0
  %v1749 = vadd.f32 %v1516, %v1748
  %v1750 = vpop.f32.mrf.mxu0
  %1751 = vmatprep.mubr.f32.mxu0 0.0
  %v1752 = vand.u32 %v1343, 4294901760
  %1753 = vmatmul.mubr.f32.gmra.mxu0 %v1752
  %v1754 = vpop.f32.mrf.mxu0
  %v1755 = vadd.f32 %v1526, %v1754
  %v1756 = vpop.f32.mrf.mxu0
  %1757 = vmatprep.mubr.f32.mxu0 0.0
  %v1758 = vand.u32 %v1346, 4294901760
  %1759 = vmatmul.mubr.f32.gmra.mxu0 %v1758
  %v1760 = vpop.f32.mrf.mxu0
  %v1761 = vadd.f32 %v1536, %v1760
  %v1762 = vpop.f32.mrf.mxu0
  %1763 = vmatprep.mubr.f32.mxu0 0.0
  %v1764 = vand.u32 %v1349, 4294901760
  %1765 = vmatmul.mubr.f32.gmra.mxu0 %v1764
  %v1766 = vpop.f32.mrf.mxu0
  %v1767 = vadd.f32 %v1546, %v1766
  %v1768 = vpop.f32.mrf.mxu0
  %1769 = vmatprep.mubr.f32.mxu0 0.0
  %v1770 = vand.u32 %v1352, 4294901760
  %1771 = vmatmul.mubr.f32.gmra.mxu0 %v1770
  %v1772 = vpop.f32.mrf.mxu0
  %v1773 = vadd.f32 %v1556, %v1772
  %v1774 = vpop.f32.mrf.mxu0
  %1775 = vmatprep.mubr.f32.mxu0 0.0
  %v1776 = vand.u32 %v1355, 4294901760
  %1777 = vmatmul.mubr.f32.gmra.mxu0 %v1776
  %v1778 = vpop.f32.mrf.mxu0
  %v1779 = vadd.f32 %v1566, %v1778
  %v1780 = vpop.f32.mrf.mxu0
  %1781 = vmatprep.mubr.f32.mxu0 0.0
  %v1782 = vand.u32 %v1358, 4294901760
  %1783 = vmatmul.mubr.f32.gmra.mxu0 %v1782
  %v1784 = vpop.f32.mrf.mxu0
  %v1785 = vadd.f32 %v1576, %v1784
  %v1786 = vpop.f32.mrf.mxu0
  %1787 = vmatprep.mubr.f32.mxu0 0.0
  %v1788 = vand.u32 %v1361, 4294901760
  %1789 = vmatmul.mubr.f32.gmra.mxu0 %v1788
  %v1790 = vpop.f32.mrf.mxu0
  %v1791 = vadd.f32 %v1586, %v1790
  %v1792 = vpop.f32.mrf.mxu0
  %1793 = vmatprep.mubr.f32.mxu0 0.0
  %v1794 = vand.u32 %v1364, 4294901760
  %1795 = vmatmul.mubr.f32.gmra.mxu0 %v1794
  %v1796 = vpop.f32.mrf.mxu0
  %v1797 = vadd.f32 %v1596, %v1796
  %v1798 = vpop.f32.mrf.mxu0
  %1799 = vdwg.mxu0
  %1800 = vmatprep.subr.mxu0 0.0
  %1801 = vmatpush1.msra.mxu0 0.0
  %1802 = vmatprep.subr.mxu0 0.0
  %1803 = vmatpush1.msra.mxu0 0.0
  %1804 = vmatprep.subr.mxu0 0.0
  %1805 = vmatpush1.msra.mxu0 0.0
  %1806 = vmatprep.subr.mxu0 0.0
  %1807 = vmatpush1.msra.mxu0 0.0
  %1808 = vmatprep.subr.mxu0 0.0
  %1809 = vmatpush1.msra.mxu0 0.0
  %1810 = vmatprep.subr.mxu0 0.0
  %1811 = vmatpush1.msra.mxu0 0.0
  %1812 = vmatprep.subr.mxu0 0.0
  %1813 = vmatpush1.msra.mxu0 0.0
  %1814 = vmatprep.subr.mxu0 0.0
  %1815 = vmatpush1.msra.mxu0 0.0
  %1816 = vmatprep.subr.mxu0 0.0
  %v1817 = vand.u32 %v77, 4294901760
  %v1818 = vsub.f32 %v77, %v1817
  %1819 = vmatpush1.msra.mxu0 %v1818
  %1820 = vmatprep.subr.mxu0 0.0
  %v1821 = vand.u32 %v76, 4294901760
  %v1822 = vsub.f32 %v76, %v1821
  %1823 = vmatpush1.msra.mxu0 %v1822
  %1824 = vmatprep.subr.mxu0 0.0
  %v1825 = vand.u32 %v75, 4294901760
  %v1826 = vsub.f32 %v75, %v1825
  %1827 = vmatpush1.msra.mxu0 %v1826
  %1828 = vmatprep.subr.mxu0 0.0
  %v1829 = vand.u32 %v74, 4294901760
  %v1830 = vsub.f32 %v74, %v1829
  %1831 = vmatpush1.msra.mxu0 %v1830
  %1832 = vmatprep.subr.mxu0 0.0
  %v1833 = vand.u32 %v73, 4294901760
  %v1834 = vsub.f32 %v73, %v1833
  %1835 = vmatpush1.msra.mxu0 %v1834
  %1836 = vmatprep.subr.mxu0 0.0
  %v1837 = vand.u32 %v72, 4294901760
  %v1838 = vsub.f32 %v72, %v1837
  %1839 = vmatpush1.msra.mxu0 %v1838
  %1840 = vmatprep.subr.mxu0 0.0
  %v1841 = vand.u32 %v71, 4294901760
  %v1842 = vsub.f32 %v71, %v1841
  %1843 = vmatpush1.msra.mxu0 %v1842
  %1844 = vmatprep.subr.mxu0 0.0
  %v1845 = vand.u32 %v70, 4294901760
  %v1846 = vsub.f32 %v70, %v1845
  %1847 = vmatpush1.msra.mxu0 %v1846
  %1848 = vmatprep.subr.mxu0 0.0
  %1849 = vmatpush2.msra.mxu0 0.0
  %1850 = vmatprep.subr.mxu0 0.0
  %1851 = vmatpush2.msra.mxu0 0.0
  %1852 = vmatprep.subr.mxu0 0.0
  %1853 = vmatpush2.msra.mxu0 0.0
  %1854 = vmatprep.subr.mxu0 0.0
  %1855 = vmatpush2.msra.mxu0 0.0
  %1856 = vmatprep.subr.mxu0 0.0
  %1857 = vmatpush2.msra.mxu0 0.0
  %1858 = vmatprep.subr.mxu0 0.0
  %1859 = vmatpush2.msra.mxu0 0.0
  %1860 = vmatprep.subr.mxu0 0.0
  %1861 = vmatpush2.msra.mxu0 0.0
  %1862 = vmatprep.subr.mxu0 0.0
  %1863 = vmatpush2.msra.mxu0 0.0
  %1864 = vmatprep.subr.mxu0 0.0
  %1865 = vmatpush2.msra.mxu0 0.0
  %1866 = vmatprep.subr.mxu0 0.0
  %1867 = vmatpush2.msra.mxu0 0.0
  %1868 = vmatprep.subr.mxu0 0.0
  %1869 = vmatpush2.msra.mxu0 0.0
  %1870 = vmatprep.subr.mxu0 0.0
  %1871 = vmatpush2.msra.mxu0 0.0
  %1872 = vmatprep.subr.mxu0 0.0
  %1873 = vmatpush2.msra.mxu0 0.0
  %1874 = vmatprep.subr.mxu0 0.0
  %1875 = vmatpush2.msra.mxu0 0.0
  %1876 = vmatprep.subr.mxu0 0.0
  %1877 = vmatpush2.msra.mxu0 0.0
  %1878 = vmatprep.subr.mxu0 0.0
  %1879 = vmatpush2.msra.mxu0 0.0
  %1880 = vmatprep.mubr.f32.mxu0 0.0
  %v1881 = vand.u32 %v1319, 4294901760
  %v1882 = vsub.f32 %v1319, %v1881
  %1883 = vmatmul.mubr.f32.gmra.mxu0 %v1882
  %v1884 = vpop.f32.mrf.mxu0
  %v1885 = vadd.f32 %v1707, %v1884
  %v1886 = vpop.f32.mrf.mxu0
  %1887 = vmatprep.mubr.f32.mxu0 0.0
  %v1888 = vand.u32 %v1322, 4294901760
  %v1889 = vsub.f32 %v1322, %v1888
  %1890 = vmatmul.mubr.f32.gmra.mxu0 %v1889
  %v1891 = vpop.f32.mrf.mxu0
  %v1892 = vadd.f32 %v1713, %v1891
  %v1893 = vpop.f32.mrf.mxu0
  %1894 = vmatprep.mubr.f32.mxu0 0.0
  %v1895 = vand.u32 %v1325, 4294901760
  %v1896 = vsub.f32 %v1325, %v1895
  %1897 = vmatmul.mubr.f32.gmra.mxu0 %v1896
  %v1898 = vpop.f32.mrf.mxu0
  %v1899 = vadd.f32 %v1719, %v1898
  %v1900 = vpop.f32.mrf.mxu0
  %1901 = vmatprep.mubr.f32.mxu0 0.0
  %v1902 = vand.u32 %v1328, 4294901760
  %v1903 = vsub.f32 %v1328, %v1902
  %1904 = vmatmul.mubr.f32.gmra.mxu0 %v1903
  %v1905 = vpop.f32.mrf.mxu0
  %v1906 = vadd.f32 %v1725, %v1905
  %v1907 = vpop.f32.mrf.mxu0
  %1908 = vmatprep.mubr.f32.mxu0 0.0
  %v1909 = vand.u32 %v1331, 4294901760
  %v1910 = vsub.f32 %v1331, %v1909
  %1911 = vmatmul.mubr.f32.gmra.mxu0 %v1910
  %v1912 = vpop.f32.mrf.mxu0
  %v1913 = vadd.f32 %v1731, %v1912
  %v1914 = vpop.f32.mrf.mxu0
  %1915 = vmatprep.mubr.f32.mxu0 0.0
  %v1916 = vand.u32 %v1334, 4294901760
  %v1917 = vsub.f32 %v1334, %v1916
  %1918 = vmatmul.mubr.f32.gmra.mxu0 %v1917
  %v1919 = vpop.f32.mrf.mxu0
  %v1920 = vadd.f32 %v1737, %v1919
  %v1921 = vpop.f32.mrf.mxu0
  %1922 = vmatprep.mubr.f32.mxu0 0.0
  %v1923 = vand.u32 %v1337, 4294901760
  %v1924 = vsub.f32 %v1337, %v1923
  %1925 = vmatmul.mubr.f32.gmra.mxu0 %v1924
  %v1926 = vpop.f32.mrf.mxu0
  %v1927 = vadd.f32 %v1743, %v1926
  %v1928 = vpop.f32.mrf.mxu0
  %1929 = vmatprep.mubr.f32.mxu0 0.0
  %v1930 = vand.u32 %v1340, 4294901760
  %v1931 = vsub.f32 %v1340, %v1930
  %1932 = vmatmul.mubr.f32.gmra.mxu0 %v1931
  %v1933 = vpop.f32.mrf.mxu0
  %v1934 = vadd.f32 %v1749, %v1933
  %v1935 = vpop.f32.mrf.mxu0
  %1936 = vmatprep.mubr.f32.mxu0 0.0
  %v1937 = vand.u32 %v1343, 4294901760
  %v1938 = vsub.f32 %v1343, %v1937
  %1939 = vmatmul.mubr.f32.gmra.mxu0 %v1938
  %v1940 = vpop.f32.mrf.mxu0
  %v1941 = vadd.f32 %v1755, %v1940
  %v1942 = vpop.f32.mrf.mxu0
  %1943 = vmatprep.mubr.f32.mxu0 0.0
  %v1944 = vand.u32 %v1346, 4294901760
  %v1945 = vsub.f32 %v1346, %v1944
  %1946 = vmatmul.mubr.f32.gmra.mxu0 %v1945
  %v1947 = vpop.f32.mrf.mxu0
  %v1948 = vadd.f32 %v1761, %v1947
  %v1949 = vpop.f32.mrf.mxu0
  %1950 = vmatprep.mubr.f32.mxu0 0.0
  %v1951 = vand.u32 %v1349, 4294901760
  %v1952 = vsub.f32 %v1349, %v1951
  %1953 = vmatmul.mubr.f32.gmra.mxu0 %v1952
  %v1954 = vpop.f32.mrf.mxu0
  %v1955 = vadd.f32 %v1767, %v1954
  %v1956 = vpop.f32.mrf.mxu0
  %1957 = vmatprep.mubr.f32.mxu0 0.0
  %v1958 = vand.u32 %v1352, 4294901760
  %v1959 = vsub.f32 %v1352, %v1958
  %1960 = vmatmul.mubr.f32.gmra.mxu0 %v1959
  %v1961 = vpop.f32.mrf.mxu0
  %v1962 = vadd.f32 %v1773, %v1961
  %v1963 = vpop.f32.mrf.mxu0
  %1964 = vmatprep.mubr.f32.mxu0 0.0
  %v1965 = vand.u32 %v1355, 4294901760
  %v1966 = vsub.f32 %v1355, %v1965
  %1967 = vmatmul.mubr.f32.gmra.mxu0 %v1966
  %v1968 = vpop.f32.mrf.mxu0
  %v1969 = vadd.f32 %v1779, %v1968
  %v1970 = vpop.f32.mrf.mxu0
  %1971 = vmatprep.mubr.f32.mxu0 0.0
  %v1972 = vand.u32 %v1358, 4294901760
  %v1973 = vsub.f32 %v1358, %v1972
  %1974 = vmatmul.mubr.f32.gmra.mxu0 %v1973
  %v1975 = vpop.f32.mrf.mxu0
  %v1976 = vadd.f32 %v1785, %v1975
  %v1977 = vpop.f32.mrf.mxu0
  %1978 = vmatprep.mubr.f32.mxu0 0.0
  %v1979 = vand.u32 %v1361, 4294901760
  %v1980 = vsub.f32 %v1361, %v1979
  %1981 = vmatmul.mubr.f32.gmra.mxu0 %v1980
  %v1982 = vpop.f32.mrf.mxu0
  %v1983 = vadd.f32 %v1791, %v1982
  %v1984 = vpop.f32.mrf.mxu0
  %1985 = vmatprep.mubr.f32.mxu0 0.0
  %v1986 = vand.u32 %v1364, 4294901760
  %v1987 = vsub.f32 %v1364, %v1986
  %1988 = vmatmul.mubr.f32.gmra.mxu0 %v1987
  %v1989 = vpop.f32.mrf.mxu0
  %v1990 = vadd.f32 %v1797, %v1989
  %v1991 = vpop.f32.mrf.mxu0
  %1992 = vdwg.mxu0
  %1993 = vmatprep.subr.mxu0 0.0
  %1994 = vmatpush1.msra.mxu0 0.0
  %1995 = vmatprep.subr.mxu0 0.0
  %1996 = vmatpush1.msra.mxu0 0.0
  %1997 = vmatprep.subr.mxu0 0.0
  %1998 = vmatpush1.msra.mxu0 0.0
  %1999 = vmatprep.subr.mxu0 0.0
  %2000 = vmatpush1.msra.mxu0 0.0
  %2001 = vmatprep.subr.mxu0 0.0
  %2002 = vmatpush1.msra.mxu0 0.0
  %2003 = vmatprep.subr.mxu0 0.0
  %2004 = vmatpush1.msra.mxu0 0.0
  %2005 = vmatprep.subr.mxu0 0.0
  %2006 = vmatpush1.msra.mxu0 0.0
  %2007 = vmatprep.subr.mxu0 0.0
  %2008 = vmatpush1.msra.mxu0 0.0
  %2009 = vmatprep.subr.mxu0 0.0
  %v2010 = vand.u32 %v77, 4294901760
  %2011 = vmatpush1.msra.mxu0 %v2010
  %2012 = vmatprep.subr.mxu0 0.0
  %v2013 = vand.u32 %v76, 4294901760
  %2014 = vmatpush1.msra.mxu0 %v2013
  %2015 = vmatprep.subr.mxu0 0.0
  %v2016 = vand.u32 %v75, 4294901760
  %2017 = vmatpush1.msra.mxu0 %v2016
  %2018 = vmatprep.subr.mxu0 0.0
  %v2019 = vand.u32 %v74, 4294901760
  %2020 = vmatpush1.msra.mxu0 %v2019
  %2021 = vmatprep.subr.mxu0 0.0
  %v2022 = vand.u32 %v73, 4294901760
  %2023 = vmatpush1.msra.mxu0 %v2022
  %2024 = vmatprep.subr.mxu0 0.0
  %v2025 = vand.u32 %v72, 4294901760
  %2026 = vmatpush1.msra.mxu0 %v2025
  %2027 = vmatprep.subr.mxu0 0.0
  %v2028 = vand.u32 %v71, 4294901760
  %2029 = vmatpush1.msra.mxu0 %v2028
  %2030 = vmatprep.subr.mxu0 0.0
  %v2031 = vand.u32 %v70, 4294901760
  %2032 = vmatpush1.msra.mxu0 %v2031
  %2033 = vmatprep.subr.mxu0 0.0
  %2034 = vmatpush2.msra.mxu0 0.0
  %2035 = vmatprep.subr.mxu0 0.0
  %2036 = vmatpush2.msra.mxu0 0.0
  %2037 = vmatprep.subr.mxu0 0.0
  %2038 = vmatpush2.msra.mxu0 0.0
  %2039 = vmatprep.subr.mxu0 0.0
  %2040 = vmatpush2.msra.mxu0 0.0
  %2041 = vmatprep.subr.mxu0 0.0
  %2042 = vmatpush2.msra.mxu0 0.0
  %2043 = vmatprep.subr.mxu0 0.0
  %2044 = vmatpush2.msra.mxu0 0.0
  %2045 = vmatprep.subr.mxu0 0.0
  %2046 = vmatpush2.msra.mxu0 0.0
  %2047 = vmatprep.subr.mxu0 0.0
  %2048 = vmatpush2.msra.mxu0 0.0
  %2049 = vmatprep.subr.mxu0 0.0
  %2050 = vmatpush2.msra.mxu0 0.0
  %2051 = vmatprep.subr.mxu0 0.0
  %2052 = vmatpush2.msra.mxu0 0.0
  %2053 = vmatprep.subr.mxu0 0.0
  %2054 = vmatpush2.msra.mxu0 0.0
  %2055 = vmatprep.subr.mxu0 0.0
  %2056 = vmatpush2.msra.mxu0 0.0
  %2057 = vmatprep.subr.mxu0 0.0
  %2058 = vmatpush2.msra.mxu0 0.0
  %2059 = vmatprep.subr.mxu0 0.0
  %2060 = vmatpush2.msra.mxu0 0.0
  %2061 = vmatprep.subr.mxu0 0.0
  %2062 = vmatpush2.msra.mxu0 0.0
  %2063 = vmatprep.subr.mxu0 0.0
  %2064 = vmatpush2.msra.mxu0 0.0
  %2065 = vmatprep.mubr.f32.mxu0 0.0
  %v2066 = vand.u32 %v1319, 4294901760
  %v2067 = vsub.f32 %v1319, %v2066
  %v2068 = vand.u32 %v2067, 4294901760
  %2069 = vmatmul.mubr.f32.gmra.mxu0 %v2068
  %v2070 = vpop.f32.mrf.mxu0
  %v2071 = vadd.f32 %v1885, %v2070
  %v2072 = vpop.f32.mrf.mxu0
  %2073 = vmatprep.mubr.f32.mxu0 0.0
  %v2074 = vand.u32 %v1322, 4294901760
  %v2075 = vsub.f32 %v1322, %v2074
  %v2076 = vand.u32 %v2075, 4294901760
  %2077 = vmatmul.mubr.f32.gmra.mxu0 %v2076
  %v2078 = vpop.f32.mrf.mxu0
  %v2079 = vadd.f32 %v1892, %v2078
  %v2080 = vpop.f32.mrf.mxu0
  %2081 = vmatprep.mubr.f32.mxu0 0.0
  %v2082 = vand.u32 %v1325, 4294901760
  %v2083 = vsub.f32 %v1325, %v2082
  %v2084 = vand.u32 %v2083, 4294901760
  %2085 = vmatmul.mubr.f32.gmra.mxu0 %v2084
  %v2086 = vpop.f32.mrf.mxu0
  %v2087 = vadd.f32 %v1899, %v2086
  %v2088 = vpop.f32.mrf.mxu0
  %2089 = vmatprep.mubr.f32.mxu0 0.0
  %v2090 = vand.u32 %v1328, 4294901760
  %v2091 = vsub.f32 %v1328, %v2090
  %v2092 = vand.u32 %v2091, 4294901760
  %2093 = vmatmul.mubr.f32.gmra.mxu0 %v2092
  %v2094 = vpop.f32.mrf.mxu0
  %v2095 = vadd.f32 %v1906, %v2094
  %v2096 = vpop.f32.mrf.mxu0
  %2097 = vmatprep.mubr.f32.mxu0 0.0
  %v2098 = vand.u32 %v1331, 4294901760
  %v2099 = vsub.f32 %v1331, %v2098
  %v2100 = vand.u32 %v2099, 4294901760
  %2101 = vmatmul.mubr.f32.gmra.mxu0 %v2100
  %v2102 = vpop.f32.mrf.mxu0
  %v2103 = vadd.f32 %v1913, %v2102
  %v2104 = vpop.f32.mrf.mxu0
  %2105 = vmatprep.mubr.f32.mxu0 0.0
  %v2106 = vand.u32 %v1334, 4294901760
  %v2107 = vsub.f32 %v1334, %v2106
  %v2108 = vand.u32 %v2107, 4294901760
  %2109 = vmatmul.mubr.f32.gmra.mxu0 %v2108
  %v2110 = vpop.f32.mrf.mxu0
  %v2111 = vadd.f32 %v1920, %v2110
  %v2112 = vpop.f32.mrf.mxu0
  %2113 = vmatprep.mubr.f32.mxu0 0.0
  %v2114 = vand.u32 %v1337, 4294901760
  %v2115 = vsub.f32 %v1337, %v2114
  %v2116 = vand.u32 %v2115, 4294901760
  %2117 = vmatmul.mubr.f32.gmra.mxu0 %v2116
  %v2118 = vpop.f32.mrf.mxu0
  %v2119 = vadd.f32 %v1927, %v2118
  %v2120 = vpop.f32.mrf.mxu0
  %2121 = vmatprep.mubr.f32.mxu0 0.0
  %v2122 = vand.u32 %v1340, 4294901760
  %v2123 = vsub.f32 %v1340, %v2122
  %v2124 = vand.u32 %v2123, 4294901760
  %2125 = vmatmul.mubr.f32.gmra.mxu0 %v2124
  %v2126 = vpop.f32.mrf.mxu0
  %v2127 = vadd.f32 %v1934, %v2126
  %v2128 = vpop.f32.mrf.mxu0
  %2129 = vmatprep.mubr.f32.mxu0 0.0
  %v2130 = vand.u32 %v1343, 4294901760
  %v2131 = vsub.f32 %v1343, %v2130
  %v2132 = vand.u32 %v2131, 4294901760
  %2133 = vmatmul.mubr.f32.gmra.mxu0 %v2132
  %v2134 = vpop.f32.mrf.mxu0
  %v2135 = vadd.f32 %v1941, %v2134
  %v2136 = vpop.f32.mrf.mxu0
  %2137 = vmatprep.mubr.f32.mxu0 0.0
  %v2138 = vand.u32 %v1346, 4294901760
  %v2139 = vsub.f32 %v1346, %v2138
  %v2140 = vand.u32 %v2139, 4294901760
  %2141 = vmatmul.mubr.f32.gmra.mxu0 %v2140
  %v2142 = vpop.f32.mrf.mxu0
  %v2143 = vadd.f32 %v1948, %v2142
  %v2144 = vpop.f32.mrf.mxu0
  %2145 = vmatprep.mubr.f32.mxu0 0.0
  %v2146 = vand.u32 %v1349, 4294901760
  %v2147 = vsub.f32 %v1349, %v2146
  %v2148 = vand.u32 %v2147, 4294901760
  %2149 = vmatmul.mubr.f32.gmra.mxu0 %v2148
  %v2150 = vpop.f32.mrf.mxu0
  %v2151 = vadd.f32 %v1955, %v2150
  %v2152 = vpop.f32.mrf.mxu0
  %2153 = vmatprep.mubr.f32.mxu0 0.0
  %v2154 = vand.u32 %v1352, 4294901760
  %v2155 = vsub.f32 %v1352, %v2154
  %v2156 = vand.u32 %v2155, 4294901760
  %2157 = vmatmul.mubr.f32.gmra.mxu0 %v2156
  %v2158 = vpop.f32.mrf.mxu0
  %v2159 = vadd.f32 %v1962, %v2158
  %v2160 = vpop.f32.mrf.mxu0
  %2161 = vmatprep.mubr.f32.mxu0 0.0
  %v2162 = vand.u32 %v1355, 4294901760
  %v2163 = vsub.f32 %v1355, %v2162
  %v2164 = vand.u32 %v2163, 4294901760
  %2165 = vmatmul.mubr.f32.gmra.mxu0 %v2164
  %v2166 = vpop.f32.mrf.mxu0
  %v2167 = vadd.f32 %v1969, %v2166
  %v2168 = vpop.f32.mrf.mxu0
  %2169 = vmatprep.mubr.f32.mxu0 0.0
  %v2170 = vand.u32 %v1358, 4294901760
  %v2171 = vsub.f32 %v1358, %v2170
  %v2172 = vand.u32 %v2171, 4294901760
  %2173 = vmatmul.mubr.f32.gmra.mxu0 %v2172
  %v2174 = vpop.f32.mrf.mxu0
  %v2175 = vadd.f32 %v1976, %v2174
  %v2176 = vpop.f32.mrf.mxu0
  %2177 = vmatprep.mubr.f32.mxu0 0.0
  %v2178 = vand.u32 %v1361, 4294901760
  %v2179 = vsub.f32 %v1361, %v2178
  %v2180 = vand.u32 %v2179, 4294901760
  %2181 = vmatmul.mubr.f32.gmra.mxu0 %v2180
  %v2182 = vpop.f32.mrf.mxu0
  %v2183 = vadd.f32 %v1983, %v2182
  %v2184 = vpop.f32.mrf.mxu0
  %2185 = vmatprep.mubr.f32.mxu0 0.0
  %v2186 = vand.u32 %v1364, 4294901760
  %v2187 = vsub.f32 %v1364, %v2186
  %v2188 = vand.u32 %v2187, 4294901760
  %2189 = vmatmul.mubr.f32.gmra.mxu0 %v2188
  %v2190 = vpop.f32.mrf.mxu0
  %v2191 = vadd.f32 %v1990, %v2190
  %v2192 = vpop.f32.mrf.mxu0
  %2193 = vdwg.mxu0
  %2194 = vmatprep.subr.mxu0 0.0
  %2195 = vmatpush1.msra.mxu0 0.0
  %2196 = vmatprep.subr.mxu0 0.0
  %2197 = vmatpush1.msra.mxu0 0.0
  %2198 = vmatprep.subr.mxu0 0.0
  %2199 = vmatpush1.msra.mxu0 0.0
  %2200 = vmatprep.subr.mxu0 0.0
  %2201 = vmatpush1.msra.mxu0 0.0
  %2202 = vmatprep.subr.mxu0 0.0
  %2203 = vmatpush1.msra.mxu0 0.0
  %2204 = vmatprep.subr.mxu0 0.0
  %2205 = vmatpush1.msra.mxu0 0.0
  %2206 = vmatprep.subr.mxu0 0.0
  %2207 = vmatpush1.msra.mxu0 0.0
  %2208 = vmatprep.subr.mxu0 0.0
  %2209 = vmatpush1.msra.mxu0 0.0
  %2210 = vmatprep.subr.mxu0 0.0
  %v2211 = vand.u32 %v77, 4294901760
  %v2212 = vsub.f32 %v77, %v2211
  %v2213 = vand.u32 %v2212, 4294901760
  %2214 = vmatpush1.msra.mxu0 %v2213
  %2215 = vmatprep.subr.mxu0 0.0
  %v2216 = vand.u32 %v76, 4294901760
  %v2217 = vsub.f32 %v76, %v2216
  %v2218 = vand.u32 %v2217, 4294901760
  %2219 = vmatpush1.msra.mxu0 %v2218
  %2220 = vmatprep.subr.mxu0 0.0
  %v2221 = vand.u32 %v75, 4294901760
  %v2222 = vsub.f32 %v75, %v2221
  %v2223 = vand.u32 %v2222, 4294901760
  %2224 = vmatpush1.msra.mxu0 %v2223
  %2225 = vmatprep.subr.mxu0 0.0
  %v2226 = vand.u32 %v74, 4294901760
  %v2227 = vsub.f32 %v74, %v2226
  %v2228 = vand.u32 %v2227, 4294901760
  %2229 = vmatpush1.msra.mxu0 %v2228
  %2230 = vmatprep.subr.mxu0 0.0
  %v2231 = vand.u32 %v73, 4294901760
  %v2232 = vsub.f32 %v73, %v2231
  %v2233 = vand.u32 %v2232, 4294901760
  %2234 = vmatpush1.msra.mxu0 %v2233
  %2235 = vmatprep.subr.mxu0 0.0
  %v2236 = vand.u32 %v72, 4294901760
  %v2237 = vsub.f32 %v72, %v2236
  %v2238 = vand.u32 %v2237, 4294901760
  %2239 = vmatpush1.msra.mxu0 %v2238
  %2240 = vmatprep.subr.mxu0 0.0
  %v2241 = vand.u32 %v71, 4294901760
  %v2242 = vsub.f32 %v71, %v2241
  %v2243 = vand.u32 %v2242, 4294901760
  %2244 = vmatpush1.msra.mxu0 %v2243
  %2245 = vmatprep.subr.mxu0 0.0
  %v2246 = vand.u32 %v70, 4294901760
  %v2247 = vsub.f32 %v70, %v2246
  %v2248 = vand.u32 %v2247, 4294901760
  %2249 = vmatpush1.msra.mxu0 %v2248
  %2250 = vmatprep.subr.mxu0 0.0
  %2251 = vmatpush2.msra.mxu0 0.0
  %2252 = vmatprep.subr.mxu0 0.0
  %2253 = vmatpush2.msra.mxu0 0.0
  %2254 = vmatprep.subr.mxu0 0.0
  %2255 = vmatpush2.msra.mxu0 0.0
  %2256 = vmatprep.subr.mxu0 0.0
  %2257 = vmatpush2.msra.mxu0 0.0
  %2258 = vmatprep.subr.mxu0 0.0
  %2259 = vmatpush2.msra.mxu0 0.0
  %2260 = vmatprep.subr.mxu0 0.0
  %2261 = vmatpush2.msra.mxu0 0.0
  %2262 = vmatprep.subr.mxu0 0.0
  %2263 = vmatpush2.msra.mxu0 0.0
  %2264 = vmatprep.subr.mxu0 0.0
  %2265 = vmatpush2.msra.mxu0 0.0
  %2266 = vmatprep.subr.mxu0 0.0
  %2267 = vmatpush2.msra.mxu0 0.0
  %2268 = vmatprep.subr.mxu0 0.0
  %2269 = vmatpush2.msra.mxu0 0.0
  %2270 = vmatprep.subr.mxu0 0.0
  %2271 = vmatpush2.msra.mxu0 0.0
  %2272 = vmatprep.subr.mxu0 0.0
  %2273 = vmatpush2.msra.mxu0 0.0
  %2274 = vmatprep.subr.mxu0 0.0
  %2275 = vmatpush2.msra.mxu0 0.0
  %2276 = vmatprep.subr.mxu0 0.0
  %2277 = vmatpush2.msra.mxu0 0.0
  %2278 = vmatprep.subr.mxu0 0.0
  %2279 = vmatpush2.msra.mxu0 0.0
  %2280 = vmatprep.subr.mxu0 0.0
  %2281 = vmatpush2.msra.mxu0 0.0
  %2282 = vmatprep.mubr.f32.mxu0 0.0
  %v2283 = vand.u32 %v1319, 4294901760
  %2284 = vmatmul.mubr.f32.gmra.mxu0 %v2283
  %v2285 = vpop.f32.mrf.mxu0
  %v2286 = vadd.f32 %v2071, %v2285
  %v2287 = vpop.f32.mrf.mxu0
  %2288 = vmatprep.mubr.f32.mxu0 0.0
  %v2289 = vand.u32 %v1322, 4294901760
  %2290 = vmatmul.mubr.f32.gmra.mxu0 %v2289
  %v2291 = vpop.f32.mrf.mxu0
  %v2292 = vadd.f32 %v2079, %v2291
  %v2293 = vpop.f32.mrf.mxu0
  %2294 = vmatprep.mubr.f32.mxu0 0.0
  %v2295 = vand.u32 %v1325, 4294901760
  %2296 = vmatmul.mubr.f32.gmra.mxu0 %v2295
  %v2297 = vpop.f32.mrf.mxu0
  %v2298 = vadd.f32 %v2087, %v2297
  %v2299 = vpop.f32.mrf.mxu0
  %2300 = vmatprep.mubr.f32.mxu0 0.0
  %v2301 = vand.u32 %v1328, 4294901760
  %2302 = vmatmul.mubr.f32.gmra.mxu0 %v2301
  %v2303 = vpop.f32.mrf.mxu0
  %v2304 = vadd.f32 %v2095, %v2303
  %v2305 = vpop.f32.mrf.mxu0
  %2306 = vmatprep.mubr.f32.mxu0 0.0
  %v2307 = vand.u32 %v1331, 4294901760
  %2308 = vmatmul.mubr.f32.gmra.mxu0 %v2307
  %v2309 = vpop.f32.mrf.mxu0
  %v2310 = vadd.f32 %v2103, %v2309
  %v2311 = vpop.f32.mrf.mxu0
  %2312 = vmatprep.mubr.f32.mxu0 0.0
  %v2313 = vand.u32 %v1334, 4294901760
  %2314 = vmatmul.mubr.f32.gmra.mxu0 %v2313
  %v2315 = vpop.f32.mrf.mxu0
  %v2316 = vadd.f32 %v2111, %v2315
  %v2317 = vpop.f32.mrf.mxu0
  %2318 = vmatprep.mubr.f32.mxu0 0.0
  %v2319 = vand.u32 %v1337, 4294901760
  %2320 = vmatmul.mubr.f32.gmra.mxu0 %v2319
  %v2321 = vpop.f32.mrf.mxu0
  %v2322 = vadd.f32 %v2119, %v2321
  %v2323 = vpop.f32.mrf.mxu0
  %2324 = vmatprep.mubr.f32.mxu0 0.0
  %v2325 = vand.u32 %v1340, 4294901760
  %2326 = vmatmul.mubr.f32.gmra.mxu0 %v2325
  %v2327 = vpop.f32.mrf.mxu0
  %v2328 = vadd.f32 %v2127, %v2327
  %v2329 = vpop.f32.mrf.mxu0
  %2330 = vmatprep.mubr.f32.mxu0 0.0
  %v2331 = vand.u32 %v1343, 4294901760
  %2332 = vmatmul.mubr.f32.gmra.mxu0 %v2331
  %v2333 = vpop.f32.mrf.mxu0
  %v2334 = vadd.f32 %v2135, %v2333
  %v2335 = vpop.f32.mrf.mxu0
  %2336 = vmatprep.mubr.f32.mxu0 0.0
  %v2337 = vand.u32 %v1346, 4294901760
  %2338 = vmatmul.mubr.f32.gmra.mxu0 %v2337
  %v2339 = vpop.f32.mrf.mxu0
  %v2340 = vadd.f32 %v2143, %v2339
  %v2341 = vpop.f32.mrf.mxu0
  %2342 = vmatprep.mubr.f32.mxu0 0.0
  %v2343 = vand.u32 %v1349, 4294901760
  %2344 = vmatmul.mubr.f32.gmra.mxu0 %v2343
  %v2345 = vpop.f32.mrf.mxu0
  %v2346 = vadd.f32 %v2151, %v2345
  %v2347 = vpop.f32.mrf.mxu0
  %2348 = vmatprep.mubr.f32.mxu0 0.0
  %v2349 = vand.u32 %v1352, 4294901760
  %2350 = vmatmul.mubr.f32.gmra.mxu0 %v2349
  %v2351 = vpop.f32.mrf.mxu0
  %v2352 = vadd.f32 %v2159, %v2351
  %v2353 = vpop.f32.mrf.mxu0
  %2354 = vmatprep.mubr.f32.mxu0 0.0
  %v2355 = vand.u32 %v1355, 4294901760
  %2356 = vmatmul.mubr.f32.gmra.mxu0 %v2355
  %v2357 = vpop.f32.mrf.mxu0
  %v2358 = vadd.f32 %v2167, %v2357
  %v2359 = vpop.f32.mrf.mxu0
  %2360 = vmatprep.mubr.f32.mxu0 0.0
  %v2361 = vand.u32 %v1358, 4294901760
  %2362 = vmatmul.mubr.f32.gmra.mxu0 %v2361
  %v2363 = vpop.f32.mrf.mxu0
  %v2364 = vadd.f32 %v2175, %v2363
  %v2365 = vpop.f32.mrf.mxu0
  %2366 = vmatprep.mubr.f32.mxu0 0.0
  %v2367 = vand.u32 %v1361, 4294901760
  %2368 = vmatmul.mubr.f32.gmra.mxu0 %v2367
  %v2369 = vpop.f32.mrf.mxu0
  %v2370 = vadd.f32 %v2183, %v2369
  %v2371 = vpop.f32.mrf.mxu0
  %2372 = vmatprep.mubr.f32.mxu0 0.0
  %v2373 = vand.u32 %v1364, 4294901760
  %2374 = vmatmul.mubr.f32.gmra.mxu0 %v2373
  %v2375 = vpop.f32.mrf.mxu0
  %v2376 = vadd.f32 %v2191, %v2375
  %v2377 = vpop.f32.mrf.mxu0
  %2378 = vdwg.mxu0
  %2379 = vmatprep.subr.mxu0 0.0
  %2380 = vmatpush1.msra.mxu0 0.0
  %2381 = vmatprep.subr.mxu0 0.0
  %2382 = vmatpush1.msra.mxu0 0.0
  %2383 = vmatprep.subr.mxu0 0.0
  %2384 = vmatpush1.msra.mxu0 0.0
  %2385 = vmatprep.subr.mxu0 0.0
  %2386 = vmatpush1.msra.mxu0 0.0
  %2387 = vmatprep.subr.mxu0 0.0
  %2388 = vmatpush1.msra.mxu0 0.0
  %2389 = vmatprep.subr.mxu0 0.0
  %2390 = vmatpush1.msra.mxu0 0.0
  %2391 = vmatprep.subr.mxu0 0.0
  %2392 = vmatpush1.msra.mxu0 0.0
  %2393 = vmatprep.subr.mxu0 0.0
  %2394 = vmatpush1.msra.mxu0 0.0
  %2395 = vmatprep.subr.mxu0 0.0
  %v2396 = vand.u32 %v77, 4294901760
  %2397 = vmatpush1.msra.mxu0 %v2396
  %2398 = vmatprep.subr.mxu0 0.0
  %v2399 = vand.u32 %v76, 4294901760
  %2400 = vmatpush1.msra.mxu0 %v2399
  %2401 = vmatprep.subr.mxu0 0.0
  %v2402 = vand.u32 %v75, 4294901760
  %2403 = vmatpush1.msra.mxu0 %v2402
  %2404 = vmatprep.subr.mxu0 0.0
  %v2405 = vand.u32 %v74, 4294901760
  %2406 = vmatpush1.msra.mxu0 %v2405
  %2407 = vmatprep.subr.mxu0 0.0
  %v2408 = vand.u32 %v73, 4294901760
  %2409 = vmatpush1.msra.mxu0 %v2408
  %2410 = vmatprep.subr.mxu0 0.0
  %v2411 = vand.u32 %v72, 4294901760
  %2412 = vmatpush1.msra.mxu0 %v2411
  %2413 = vmatprep.subr.mxu0 0.0
  %v2414 = vand.u32 %v71, 4294901760
  %2415 = vmatpush1.msra.mxu0 %v2414
  %2416 = vmatprep.subr.mxu0 0.0
  %v2417 = vand.u32 %v70, 4294901760
  %2418 = vmatpush1.msra.mxu0 %v2417
  %2419 = vmatprep.subr.mxu0 0.0
  %2420 = vmatpush2.msra.mxu0 0.0
  %2421 = vmatprep.subr.mxu0 0.0
  %2422 = vmatpush2.msra.mxu0 0.0
  %2423 = vmatprep.subr.mxu0 0.0
  %2424 = vmatpush2.msra.mxu0 0.0
  %2425 = vmatprep.subr.mxu0 0.0
  %2426 = vmatpush2.msra.mxu0 0.0
  %2427 = vmatprep.subr.mxu0 0.0
  %2428 = vmatpush2.msra.mxu0 0.0
  %2429 = vmatprep.subr.mxu0 0.0
  %2430 = vmatpush2.msra.mxu0 0.0
  %2431 = vmatprep.subr.mxu0 0.0
  %2432 = vmatpush2.msra.mxu0 0.0
  %2433 = vmatprep.subr.mxu0 0.0
  %2434 = vmatpush2.msra.mxu0 0.0
  %2435 = vmatprep.subr.mxu0 0.0
  %2436 = vmatpush2.msra.mxu0 0.0
  %2437 = vmatprep.subr.mxu0 0.0
  %2438 = vmatpush2.msra.mxu0 0.0
  %2439 = vmatprep.subr.mxu0 0.0
  %2440 = vmatpush2.msra.mxu0 0.0
  %2441 = vmatprep.subr.mxu0 0.0
  %2442 = vmatpush2.msra.mxu0 0.0
  %2443 = vmatprep.subr.mxu0 0.0
  %2444 = vmatpush2.msra.mxu0 0.0
  %2445 = vmatprep.subr.mxu0 0.0
  %2446 = vmatpush2.msra.mxu0 0.0
  %2447 = vmatprep.subr.mxu0 0.0
  %2448 = vmatpush2.msra.mxu0 0.0
  %2449 = vmatprep.subr.mxu0 0.0
  %2450 = vmatpush2.msra.mxu0 0.0
  %2451 = vmatprep.mubr.f32.mxu0 0.0
  %v2452 = vand.u32 %v1319, 4294901760
  %2453 = vmatmul.mubr.f32.gmra.mxu0 %v2452
  %v2454 = vpop.f32.mrf.mxu0
  %v2455 = vadd.f32 %v2286, %v2454
  %v2456 = vpop.f32.mrf.mxu0
  %2457 = vmatprep.mubr.f32.mxu0 0.0
  %v2458 = vand.u32 %v1322, 4294901760
  %2459 = vmatmul.mubr.f32.gmra.mxu0 %v2458
  %v2460 = vpop.f32.mrf.mxu0
  %v2461 = vadd.f32 %v2292, %v2460
  %v2462 = vpop.f32.mrf.mxu0
  %2463 = vmatprep.mubr.f32.mxu0 0.0
  %v2464 = vand.u32 %v1325, 4294901760
  %2465 = vmatmul.mubr.f32.gmra.mxu0 %v2464
  %v2466 = vpop.f32.mrf.mxu0
  %v2467 = vadd.f32 %v2298, %v2466
  %v2468 = vpop.f32.mrf.mxu0
  %2469 = vmatprep.mubr.f32.mxu0 0.0
  %v2470 = vand.u32 %v1328, 4294901760
  %2471 = vmatmul.mubr.f32.gmra.mxu0 %v2470
  %v2472 = vpop.f32.mrf.mxu0
  %v2473 = vadd.f32 %v2304, %v2472
  %v2474 = vpop.f32.mrf.mxu0
  %2475 = vmatprep.mubr.f32.mxu0 0.0
  %v2476 = vand.u32 %v1331, 4294901760
  %2477 = vmatmul.mubr.f32.gmra.mxu0 %v2476
  %v2478 = vpop.f32.mrf.mxu0
  %v2479 = vadd.f32 %v2310, %v2478
  %v2480 = vpop.f32.mrf.mxu0
  %2481 = vmatprep.mubr.f32.mxu0 0.0
  %v2482 = vand.u32 %v1334, 4294901760
  %2483 = vmatmul.mubr.f32.gmra.mxu0 %v2482
  %v2484 = vpop.f32.mrf.mxu0
  %v2485 = vadd.f32 %v2316, %v2484
  %v2486 = vpop.f32.mrf.mxu0
  %2487 = vmatprep.mubr.f32.mxu0 0.0
  %v2488 = vand.u32 %v1337, 4294901760
  %2489 = vmatmul.mubr.f32.gmra.mxu0 %v2488
  %v2490 = vpop.f32.mrf.mxu0
  %v2491 = vadd.f32 %v2322, %v2490
  %v2492 = vpop.f32.mrf.mxu0
  %2493 = vmatprep.mubr.f32.mxu0 0.0
  %v2494 = vand.u32 %v1340, 4294901760
  %2495 = vmatmul.mubr.f32.gmra.mxu0 %v2494
  %v2496 = vpop.f32.mrf.mxu0
  %v2497 = vadd.f32 %v2328, %v2496
  %v2498 = vpop.f32.mrf.mxu0
  %2499 = vmatprep.mubr.f32.mxu0 0.0
  %v2500 = vand.u32 %v1343, 4294901760
  %2501 = vmatmul.mubr.f32.gmra.mxu0 %v2500
  %v2502 = vpop.f32.mrf.mxu0
  %v2503 = vadd.f32 %v2334, %v2502
  %v2504 = vpop.f32.mrf.mxu0
  %2505 = vmatprep.mubr.f32.mxu0 0.0
  %v2506 = vand.u32 %v1346, 4294901760
  %2507 = vmatmul.mubr.f32.gmra.mxu0 %v2506
  %v2508 = vpop.f32.mrf.mxu0
  %v2509 = vadd.f32 %v2340, %v2508
  %v2510 = vpop.f32.mrf.mxu0
  %2511 = vmatprep.mubr.f32.mxu0 0.0
  %v2512 = vand.u32 %v1349, 4294901760
  %2513 = vmatmul.mubr.f32.gmra.mxu0 %v2512
  %v2514 = vpop.f32.mrf.mxu0
  %v2515 = vadd.f32 %v2346, %v2514
  %v2516 = vpop.f32.mrf.mxu0
  %2517 = vmatprep.mubr.f32.mxu0 0.0
  %v2518 = vand.u32 %v1352, 4294901760
  %2519 = vmatmul.mubr.f32.gmra.mxu0 %v2518
  %v2520 = vpop.f32.mrf.mxu0
  %v2521 = vadd.f32 %v2352, %v2520
  %v2522 = vpop.f32.mrf.mxu0
  %2523 = vmatprep.mubr.f32.mxu0 0.0
  %v2524 = vand.u32 %v1355, 4294901760
  %2525 = vmatmul.mubr.f32.gmra.mxu0 %v2524
  %v2526 = vpop.f32.mrf.mxu0
  %v2527 = vadd.f32 %v2358, %v2526
  %v2528 = vpop.f32.mrf.mxu0
  %2529 = vmatprep.mubr.f32.mxu0 0.0
  %v2530 = vand.u32 %v1358, 4294901760
  %2531 = vmatmul.mubr.f32.gmra.mxu0 %v2530
  %v2532 = vpop.f32.mrf.mxu0
  %v2533 = vadd.f32 %v2364, %v2532
  %v2534 = vpop.f32.mrf.mxu0
  %2535 = vmatprep.mubr.f32.mxu0 0.0
  %v2536 = vand.u32 %v1361, 4294901760
  %2537 = vmatmul.mubr.f32.gmra.mxu0 %v2536
  %v2538 = vpop.f32.mrf.mxu0
  %v2539 = vadd.f32 %v2370, %v2538
  %v2540 = vpop.f32.mrf.mxu0
  %2541 = vmatprep.mubr.f32.mxu0 0.0
  %v2542 = vand.u32 %v1364, 4294901760
  %2543 = vmatmul.mubr.f32.gmra.mxu0 %v2542
  %v2544 = vpop.f32.mrf.mxu0
  %v2545 = vadd.f32 %v2376, %v2544
  %v2546 = vpop.f32.mrf.mxu0
  %2547 = vdwg.mxu0
  %2548 = vmatprep.subr.mxu0 0.0
  %2549 = vmatpush1.msra.mxu0 0.0
  %2550 = vmatprep.subr.mxu0 0.0
  %2551 = vmatpush1.msra.mxu0 0.0
  %2552 = vmatprep.subr.mxu0 0.0
  %2553 = vmatpush1.msra.mxu0 0.0
  %2554 = vmatprep.subr.mxu0 0.0
  %2555 = vmatpush1.msra.mxu0 0.0
  %2556 = vmatprep.subr.mxu0 0.0
  %2557 = vmatpush1.msra.mxu0 0.0
  %2558 = vmatprep.subr.mxu0 0.0
  %2559 = vmatpush1.msra.mxu0 0.0
  %2560 = vmatprep.subr.mxu0 0.0
  %2561 = vmatpush1.msra.mxu0 0.0
  %2562 = vmatprep.subr.mxu0 0.0
  %2563 = vmatpush1.msra.mxu0 0.0
  %2564 = vmatprep.subr.mxu0 0.0
  %v2565 = vand.u32 %v105, 4294901760
  %2566 = vmatpush1.msra.mxu0 %v2565
  %2567 = vmatprep.subr.mxu0 0.0
  %v2568 = vand.u32 %v104, 4294901760
  %2569 = vmatpush1.msra.mxu0 %v2568
  %2570 = vmatprep.subr.mxu0 0.0
  %v2571 = vand.u32 %v103, 4294901760
  %2572 = vmatpush1.msra.mxu0 %v2571
  %2573 = vmatprep.subr.mxu0 0.0
  %v2574 = vand.u32 %v102, 4294901760
  %2575 = vmatpush1.msra.mxu0 %v2574
  %2576 = vmatprep.subr.mxu0 0.0
  %v2577 = vand.u32 %v101, 4294901760
  %2578 = vmatpush1.msra.mxu0 %v2577
  %2579 = vmatprep.subr.mxu0 0.0
  %v2580 = vand.u32 %v100, 4294901760
  %2581 = vmatpush1.msra.mxu0 %v2580
  %2582 = vmatprep.subr.mxu0 0.0
  %v2583 = vand.u32 %v99, 4294901760
  %2584 = vmatpush1.msra.mxu0 %v2583
  %2585 = vmatprep.subr.mxu0 0.0
  %v2586 = vand.u32 %v98, 4294901760
  %2587 = vmatpush1.msra.mxu0 %v2586
  %2588 = vmatprep.subr.mxu0 0.0
  %2589 = vmatpush2.msra.mxu0 0.0
  %2590 = vmatprep.subr.mxu0 0.0
  %2591 = vmatpush2.msra.mxu0 0.0
  %2592 = vmatprep.subr.mxu0 0.0
  %2593 = vmatpush2.msra.mxu0 0.0
  %2594 = vmatprep.subr.mxu0 0.0
  %2595 = vmatpush2.msra.mxu0 0.0
  %2596 = vmatprep.subr.mxu0 0.0
  %2597 = vmatpush2.msra.mxu0 0.0
  %2598 = vmatprep.subr.mxu0 0.0
  %2599 = vmatpush2.msra.mxu0 0.0
  %2600 = vmatprep.subr.mxu0 0.0
  %2601 = vmatpush2.msra.mxu0 0.0
  %2602 = vmatprep.subr.mxu0 0.0
  %2603 = vmatpush2.msra.mxu0 0.0
  %2604 = vmatprep.subr.mxu0 0.0
  %2605 = vmatpush2.msra.mxu0 0.0
  %2606 = vmatprep.subr.mxu0 0.0
  %2607 = vmatpush2.msra.mxu0 0.0
  %2608 = vmatprep.subr.mxu0 0.0
  %2609 = vmatpush2.msra.mxu0 0.0
  %2610 = vmatprep.subr.mxu0 0.0
  %2611 = vmatpush2.msra.mxu0 0.0
  %2612 = vmatprep.subr.mxu0 0.0
  %2613 = vmatpush2.msra.mxu0 0.0
  %2614 = vmatprep.subr.mxu0 0.0
  %2615 = vmatpush2.msra.mxu0 0.0
  %2616 = vmatprep.subr.mxu0 0.0
  %2617 = vmatpush2.msra.mxu0 0.0
  %2618 = vmatprep.subr.mxu0 0.0
  %2619 = vmatpush2.msra.mxu0 0.0
  %2620 = vmatprep.mubr.f32.mxu0 0.0
  %v2621 = vand.u32 %v1319, 4294901760
  %v2622 = vsub.f32 %v1319, %v2621
  %v2623 = vand.u32 %v2622, 4294901760
  %v2624 = vsub.f32 %v2622, %v2623
  %v2625 = vand.u32 %v2624, 4294901760
  %2626 = vmatmul.mubr.f32.gmra.mxu0 %v2625
  %v2627 = vpop.f32.mrf.mxu0
  %v2628 = vadd.f32 0.0, %v2627
  %v2629 = vpop.f32.mrf.mxu0
  %2630 = vmatprep.mubr.f32.mxu0 0.0
  %v2631 = vand.u32 %v1322, 4294901760
  %v2632 = vsub.f32 %v1322, %v2631
  %v2633 = vand.u32 %v2632, 4294901760
  %v2634 = vsub.f32 %v2632, %v2633
  %v2635 = vand.u32 %v2634, 4294901760
  %2636 = vmatmul.mubr.f32.gmra.mxu0 %v2635
  %v2637 = vpop.f32.mrf.mxu0
  %v2638 = vadd.f32 0.0, %v2637
  %v2639 = vpop.f32.mrf.mxu0
  %2640 = vmatprep.mubr.f32.mxu0 0.0
  %v2641 = vand.u32 %v1325, 4294901760
  %v2642 = vsub.f32 %v1325, %v2641
  %v2643 = vand.u32 %v2642, 4294901760
  %v2644 = vsub.f32 %v2642, %v2643
  %v2645 = vand.u32 %v2644, 4294901760
  %2646 = vmatmul.mubr.f32.gmra.mxu0 %v2645
  %v2647 = vpop.f32.mrf.mxu0
  %v2648 = vadd.f32 0.0, %v2647
  %v2649 = vpop.f32.mrf.mxu0
  %2650 = vmatprep.mubr.f32.mxu0 0.0
  %v2651 = vand.u32 %v1328, 4294901760
  %v2652 = vsub.f32 %v1328, %v2651
  %v2653 = vand.u32 %v2652, 4294901760
  %v2654 = vsub.f32 %v2652, %v2653
  %v2655 = vand.u32 %v2654, 4294901760
  %2656 = vmatmul.mubr.f32.gmra.mxu0 %v2655
  %v2657 = vpop.f32.mrf.mxu0
  %v2658 = vadd.f32 0.0, %v2657
  %v2659 = vpop.f32.mrf.mxu0
  %2660 = vmatprep.mubr.f32.mxu0 0.0
  %v2661 = vand.u32 %v1331, 4294901760
  %v2662 = vsub.f32 %v1331, %v2661
  %v2663 = vand.u32 %v2662, 4294901760
  %v2664 = vsub.f32 %v2662, %v2663
  %v2665 = vand.u32 %v2664, 4294901760
  %2666 = vmatmul.mubr.f32.gmra.mxu0 %v2665
  %v2667 = vpop.f32.mrf.mxu0
  %v2668 = vadd.f32 0.0, %v2667
  %v2669 = vpop.f32.mrf.mxu0
  %2670 = vmatprep.mubr.f32.mxu0 0.0
  %v2671 = vand.u32 %v1334, 4294901760
  %v2672 = vsub.f32 %v1334, %v2671
  %v2673 = vand.u32 %v2672, 4294901760
  %v2674 = vsub.f32 %v2672, %v2673
  %v2675 = vand.u32 %v2674, 4294901760
  %2676 = vmatmul.mubr.f32.gmra.mxu0 %v2675
  %v2677 = vpop.f32.mrf.mxu0
  %v2678 = vadd.f32 0.0, %v2677
  %v2679 = vpop.f32.mrf.mxu0
  %2680 = vmatprep.mubr.f32.mxu0 0.0
  %v2681 = vand.u32 %v1337, 4294901760
  %v2682 = vsub.f32 %v1337, %v2681
  %v2683 = vand.u32 %v2682, 4294901760
  %v2684 = vsub.f32 %v2682, %v2683
  %v2685 = vand.u32 %v2684, 4294901760
  %2686 = vmatmul.mubr.f32.gmra.mxu0 %v2685
  %v2687 = vpop.f32.mrf.mxu0
  %v2688 = vadd.f32 0.0, %v2687
  %v2689 = vpop.f32.mrf.mxu0
  %2690 = vmatprep.mubr.f32.mxu0 0.0
  %v2691 = vand.u32 %v1340, 4294901760
  %v2692 = vsub.f32 %v1340, %v2691
  %v2693 = vand.u32 %v2692, 4294901760
  %v2694 = vsub.f32 %v2692, %v2693
  %v2695 = vand.u32 %v2694, 4294901760
  %2696 = vmatmul.mubr.f32.gmra.mxu0 %v2695
  %v2697 = vpop.f32.mrf.mxu0
  %v2698 = vadd.f32 0.0, %v2697
  %v2699 = vpop.f32.mrf.mxu0
  %2700 = vmatprep.mubr.f32.mxu0 0.0
  %v2701 = vand.u32 %v1343, 4294901760
  %v2702 = vsub.f32 %v1343, %v2701
  %v2703 = vand.u32 %v2702, 4294901760
  %v2704 = vsub.f32 %v2702, %v2703
  %v2705 = vand.u32 %v2704, 4294901760
  %2706 = vmatmul.mubr.f32.gmra.mxu0 %v2705
  %v2707 = vpop.f32.mrf.mxu0
  %v2708 = vadd.f32 0.0, %v2707
  %v2709 = vpop.f32.mrf.mxu0
  %2710 = vmatprep.mubr.f32.mxu0 0.0
  %v2711 = vand.u32 %v1346, 4294901760
  %v2712 = vsub.f32 %v1346, %v2711
  %v2713 = vand.u32 %v2712, 4294901760
  %v2714 = vsub.f32 %v2712, %v2713
  %v2715 = vand.u32 %v2714, 4294901760
  %2716 = vmatmul.mubr.f32.gmra.mxu0 %v2715
  %v2717 = vpop.f32.mrf.mxu0
  %v2718 = vadd.f32 0.0, %v2717
  %v2719 = vpop.f32.mrf.mxu0
  %2720 = vmatprep.mubr.f32.mxu0 0.0
  %v2721 = vand.u32 %v1349, 4294901760
  %v2722 = vsub.f32 %v1349, %v2721
  %v2723 = vand.u32 %v2722, 4294901760
  %v2724 = vsub.f32 %v2722, %v2723
  %v2725 = vand.u32 %v2724, 4294901760
  %2726 = vmatmul.mubr.f32.gmra.mxu0 %v2725
  %v2727 = vpop.f32.mrf.mxu0
  %v2728 = vadd.f32 0.0, %v2727
  %v2729 = vpop.f32.mrf.mxu0
  %2730 = vmatprep.mubr.f32.mxu0 0.0
  %v2731 = vand.u32 %v1352, 4294901760
  %v2732 = vsub.f32 %v1352, %v2731
  %v2733 = vand.u32 %v2732, 4294901760
  %v2734 = vsub.f32 %v2732, %v2733
  %v2735 = vand.u32 %v2734, 4294901760
  %2736 = vmatmul.mubr.f32.gmra.mxu0 %v2735
  %v2737 = vpop.f32.mrf.mxu0
  %v2738 = vadd.f32 0.0, %v2737
  %v2739 = vpop.f32.mrf.mxu0
  %2740 = vmatprep.mubr.f32.mxu0 0.0
  %v2741 = vand.u32 %v1355, 4294901760
  %v2742 = vsub.f32 %v1355, %v2741
  %v2743 = vand.u32 %v2742, 4294901760
  %v2744 = vsub.f32 %v2742, %v2743
  %v2745 = vand.u32 %v2744, 4294901760
  %2746 = vmatmul.mubr.f32.gmra.mxu0 %v2745
  %v2747 = vpop.f32.mrf.mxu0
  %v2748 = vadd.f32 0.0, %v2747
  %v2749 = vpop.f32.mrf.mxu0
  %2750 = vmatprep.mubr.f32.mxu0 0.0
  %v2751 = vand.u32 %v1358, 4294901760
  %v2752 = vsub.f32 %v1358, %v2751
  %v2753 = vand.u32 %v2752, 4294901760
  %v2754 = vsub.f32 %v2752, %v2753
  %v2755 = vand.u32 %v2754, 4294901760
  %2756 = vmatmul.mubr.f32.gmra.mxu0 %v2755
  %v2757 = vpop.f32.mrf.mxu0
  %v2758 = vadd.f32 0.0, %v2757
  %v2759 = vpop.f32.mrf.mxu0
  %2760 = vmatprep.mubr.f32.mxu0 0.0
  %v2761 = vand.u32 %v1361, 4294901760
  %v2762 = vsub.f32 %v1361, %v2761
  %v2763 = vand.u32 %v2762, 4294901760
  %v2764 = vsub.f32 %v2762, %v2763
  %v2765 = vand.u32 %v2764, 4294901760
  %2766 = vmatmul.mubr.f32.gmra.mxu0 %v2765
  %v2767 = vpop.f32.mrf.mxu0
  %v2768 = vadd.f32 0.0, %v2767
  %v2769 = vpop.f32.mrf.mxu0
  %2770 = vmatprep.mubr.f32.mxu0 0.0
  %v2771 = vand.u32 %v1364, 4294901760
  %v2772 = vsub.f32 %v1364, %v2771
  %v2773 = vand.u32 %v2772, 4294901760
  %v2774 = vsub.f32 %v2772, %v2773
  %v2775 = vand.u32 %v2774, 4294901760
  %2776 = vmatmul.mubr.f32.gmra.mxu0 %v2775
  %v2777 = vpop.f32.mrf.mxu0
  %v2778 = vadd.f32 0.0, %v2777
  %v2779 = vpop.f32.mrf.mxu0
  %2780 = vdwg.mxu0
  %2781 = vmatprep.subr.mxu0 0.0
  %2782 = vmatpush1.msra.mxu0 0.0
  %2783 = vmatprep.subr.mxu0 0.0
  %2784 = vmatpush1.msra.mxu0 0.0
  %2785 = vmatprep.subr.mxu0 0.0
  %2786 = vmatpush1.msra.mxu0 0.0
  %2787 = vmatprep.subr.mxu0 0.0
  %2788 = vmatpush1.msra.mxu0 0.0
  %2789 = vmatprep.subr.mxu0 0.0
  %2790 = vmatpush1.msra.mxu0 0.0
  %2791 = vmatprep.subr.mxu0 0.0
  %2792 = vmatpush1.msra.mxu0 0.0
  %2793 = vmatprep.subr.mxu0 0.0
  %2794 = vmatpush1.msra.mxu0 0.0
  %2795 = vmatprep.subr.mxu0 0.0
  %2796 = vmatpush1.msra.mxu0 0.0
  %2797 = vmatprep.subr.mxu0 0.0
  %v2798 = vand.u32 %v105, 4294901760
  %v2799 = vsub.f32 %v105, %v2798
  %v2800 = vand.u32 %v2799, 4294901760
  %v2801 = vsub.f32 %v2799, %v2800
  %v2802 = vand.u32 %v2801, 4294901760
  %2803 = vmatpush1.msra.mxu0 %v2802
  %2804 = vmatprep.subr.mxu0 0.0
  %v2805 = vand.u32 %v104, 4294901760
  %v2806 = vsub.f32 %v104, %v2805
  %v2807 = vand.u32 %v2806, 4294901760
  %v2808 = vsub.f32 %v2806, %v2807
  %v2809 = vand.u32 %v2808, 4294901760
  %2810 = vmatpush1.msra.mxu0 %v2809
  %2811 = vmatprep.subr.mxu0 0.0
  %v2812 = vand.u32 %v103, 4294901760
  %v2813 = vsub.f32 %v103, %v2812
  %v2814 = vand.u32 %v2813, 4294901760
  %v2815 = vsub.f32 %v2813, %v2814
  %v2816 = vand.u32 %v2815, 4294901760
  %2817 = vmatpush1.msra.mxu0 %v2816
  %2818 = vmatprep.subr.mxu0 0.0
  %v2819 = vand.u32 %v102, 4294901760
  %v2820 = vsub.f32 %v102, %v2819
  %v2821 = vand.u32 %v2820, 4294901760
  %v2822 = vsub.f32 %v2820, %v2821
  %v2823 = vand.u32 %v2822, 4294901760
  %2824 = vmatpush1.msra.mxu0 %v2823
  %2825 = vmatprep.subr.mxu0 0.0
  %v2826 = vand.u32 %v101, 4294901760
  %v2827 = vsub.f32 %v101, %v2826
  %v2828 = vand.u32 %v2827, 4294901760
  %v2829 = vsub.f32 %v2827, %v2828
  %v2830 = vand.u32 %v2829, 4294901760
  %2831 = vmatpush1.msra.mxu0 %v2830
  %2832 = vmatprep.subr.mxu0 0.0
  %v2833 = vand.u32 %v100, 4294901760
  %v2834 = vsub.f32 %v100, %v2833
  %v2835 = vand.u32 %v2834, 4294901760
  %v2836 = vsub.f32 %v2834, %v2835
  %v2837 = vand.u32 %v2836, 4294901760
  %2838 = vmatpush1.msra.mxu0 %v2837
  %2839 = vmatprep.subr.mxu0 0.0
  %v2840 = vand.u32 %v99, 4294901760
  %v2841 = vsub.f32 %v99, %v2840
  %v2842 = vand.u32 %v2841, 4294901760
  %v2843 = vsub.f32 %v2841, %v2842
  %v2844 = vand.u32 %v2843, 4294901760
  %2845 = vmatpush1.msra.mxu0 %v2844
  %2846 = vmatprep.subr.mxu0 0.0
  %v2847 = vand.u32 %v98, 4294901760
  %v2848 = vsub.f32 %v98, %v2847
  %v2849 = vand.u32 %v2848, 4294901760
  %v2850 = vsub.f32 %v2848, %v2849
  %v2851 = vand.u32 %v2850, 4294901760
  %2852 = vmatpush1.msra.mxu0 %v2851
  %2853 = vmatprep.subr.mxu0 0.0
  %2854 = vmatpush2.msra.mxu0 0.0
  %2855 = vmatprep.subr.mxu0 0.0
  %2856 = vmatpush2.msra.mxu0 0.0
  %2857 = vmatprep.subr.mxu0 0.0
  %2858 = vmatpush2.msra.mxu0 0.0
  %2859 = vmatprep.subr.mxu0 0.0
  %2860 = vmatpush2.msra.mxu0 0.0
  %2861 = vmatprep.subr.mxu0 0.0
  %2862 = vmatpush2.msra.mxu0 0.0
  %2863 = vmatprep.subr.mxu0 0.0
  %2864 = vmatpush2.msra.mxu0 0.0
  %2865 = vmatprep.subr.mxu0 0.0
  %2866 = vmatpush2.msra.mxu0 0.0
  %2867 = vmatprep.subr.mxu0 0.0
  %2868 = vmatpush2.msra.mxu0 0.0
  %2869 = vmatprep.subr.mxu0 0.0
  %2870 = vmatpush2.msra.mxu0 0.0
  %2871 = vmatprep.subr.mxu0 0.0
  %2872 = vmatpush2.msra.mxu0 0.0
  %2873 = vmatprep.subr.mxu0 0.0
  %2874 = vmatpush2.msra.mxu0 0.0
  %2875 = vmatprep.subr.mxu0 0.0
  %2876 = vmatpush2.msra.mxu0 0.0
  %2877 = vmatprep.subr.mxu0 0.0
  %2878 = vmatpush2.msra.mxu0 0.0
  %2879 = vmatprep.subr.mxu0 0.0
  %2880 = vmatpush2.msra.mxu0 0.0
  %2881 = vmatprep.subr.mxu0 0.0
  %2882 = vmatpush2.msra.mxu0 0.0
  %2883 = vmatprep.subr.mxu0 0.0
  %2884 = vmatpush2.msra.mxu0 0.0
  %2885 = vmatprep.mubr.f32.mxu0 0.0
  %v2886 = vand.u32 %v1319, 4294901760
  %2887 = vmatmul.mubr.f32.gmra.mxu0 %v2886
  %v2888 = vpop.f32.mrf.mxu0
  %v2889 = vadd.f32 %v2628, %v2888
  %v2890 = vpop.f32.mrf.mxu0
  %2891 = vmatprep.mubr.f32.mxu0 0.0
  %v2892 = vand.u32 %v1322, 4294901760
  %2893 = vmatmul.mubr.f32.gmra.mxu0 %v2892
  %v2894 = vpop.f32.mrf.mxu0
  %v2895 = vadd.f32 %v2638, %v2894
  %v2896 = vpop.f32.mrf.mxu0
  %2897 = vmatprep.mubr.f32.mxu0 0.0
  %v2898 = vand.u32 %v1325, 4294901760
  %2899 = vmatmul.mubr.f32.gmra.mxu0 %v2898
  %v2900 = vpop.f32.mrf.mxu0
  %v2901 = vadd.f32 %v2648, %v2900
  %v2902 = vpop.f32.mrf.mxu0
  %2903 = vmatprep.mubr.f32.mxu0 0.0
  %v2904 = vand.u32 %v1328, 4294901760
  %2905 = vmatmul.mubr.f32.gmra.mxu0 %v2904
  %v2906 = vpop.f32.mrf.mxu0
  %v2907 = vadd.f32 %v2658, %v2906
  %v2908 = vpop.f32.mrf.mxu0
  %2909 = vmatprep.mubr.f32.mxu0 0.0
  %v2910 = vand.u32 %v1331, 4294901760
  %2911 = vmatmul.mubr.f32.gmra.mxu0 %v2910
  %v2912 = vpop.f32.mrf.mxu0
  %v2913 = vadd.f32 %v2668, %v2912
  %v2914 = vpop.f32.mrf.mxu0
  %2915 = vmatprep.mubr.f32.mxu0 0.0
  %v2916 = vand.u32 %v1334, 4294901760
  %2917 = vmatmul.mubr.f32.gmra.mxu0 %v2916
  %v2918 = vpop.f32.mrf.mxu0
  %v2919 = vadd.f32 %v2678, %v2918
  %v2920 = vpop.f32.mrf.mxu0
  %2921 = vmatprep.mubr.f32.mxu0 0.0
  %v2922 = vand.u32 %v1337, 4294901760
  %2923 = vmatmul.mubr.f32.gmra.mxu0 %v2922
  %v2924 = vpop.f32.mrf.mxu0
  %v2925 = vadd.f32 %v2688, %v2924
  %v2926 = vpop.f32.mrf.mxu0
  %2927 = vmatprep.mubr.f32.mxu0 0.0
  %v2928 = vand.u32 %v1340, 4294901760
  %2929 = vmatmul.mubr.f32.gmra.mxu0 %v2928
  %v2930 = vpop.f32.mrf.mxu0
  %v2931 = vadd.f32 %v2698, %v2930
  %v2932 = vpop.f32.mrf.mxu0
  %2933 = vmatprep.mubr.f32.mxu0 0.0
  %v2934 = vand.u32 %v1343, 4294901760
  %2935 = vmatmul.mubr.f32.gmra.mxu0 %v2934
  %v2936 = vpop.f32.mrf.mxu0
  %v2937 = vadd.f32 %v2708, %v2936
  %v2938 = vpop.f32.mrf.mxu0
  %2939 = vmatprep.mubr.f32.mxu0 0.0
  %v2940 = vand.u32 %v1346, 4294901760
  %2941 = vmatmul.mubr.f32.gmra.mxu0 %v2940
  %v2942 = vpop.f32.mrf.mxu0
  %v2943 = vadd.f32 %v2718, %v2942
  %v2944 = vpop.f32.mrf.mxu0
  %2945 = vmatprep.mubr.f32.mxu0 0.0
  %v2946 = vand.u32 %v1349, 4294901760
  %2947 = vmatmul.mubr.f32.gmra.mxu0 %v2946
  %v2948 = vpop.f32.mrf.mxu0
  %v2949 = vadd.f32 %v2728, %v2948
  %v2950 = vpop.f32.mrf.mxu0
  %2951 = vmatprep.mubr.f32.mxu0 0.0
  %v2952 = vand.u32 %v1352, 4294901760
  %2953 = vmatmul.mubr.f32.gmra.mxu0 %v2952
  %v2954 = vpop.f32.mrf.mxu0
  %v2955 = vadd.f32 %v2738, %v2954
  %v2956 = vpop.f32.mrf.mxu0
  %2957 = vmatprep.mubr.f32.mxu0 0.0
  %v2958 = vand.u32 %v1355, 4294901760
  %2959 = vmatmul.mubr.f32.gmra.mxu0 %v2958
  %v2960 = vpop.f32.mrf.mxu0
  %v2961 = vadd.f32 %v2748, %v2960
  %v2962 = vpop.f32.mrf.mxu0
  %2963 = vmatprep.mubr.f32.mxu0 0.0
  %v2964 = vand.u32 %v1358, 4294901760
  %2965 = vmatmul.mubr.f32.gmra.mxu0 %v2964
  %v2966 = vpop.f32.mrf.mxu0
  %v2967 = vadd.f32 %v2758, %v2966
  %v2968 = vpop.f32.mrf.mxu0
  %2969 = vmatprep.mubr.f32.mxu0 0.0
  %v2970 = vand.u32 %v1361, 4294901760
  %2971 = vmatmul.mubr.f32.gmra.mxu0 %v2970
  %v2972 = vpop.f32.mrf.mxu0
  %v2973 = vadd.f32 %v2768, %v2972
  %v2974 = vpop.f32.mrf.mxu0
  %2975 = vmatprep.mubr.f32.mxu0 0.0
  %v2976 = vand.u32 %v1364, 4294901760
  %2977 = vmatmul.mubr.f32.gmra.mxu0 %v2976
  %v2978 = vpop.f32.mrf.mxu0
  %v2979 = vadd.f32 %v2778, %v2978
  %v2980 = vpop.f32.mrf.mxu0
  %2981 = vdwg.mxu0
  %2982 = vmatprep.subr.mxu0 0.0
  %2983 = vmatpush1.msra.mxu0 0.0
  %2984 = vmatprep.subr.mxu0 0.0
  %2985 = vmatpush1.msra.mxu0 0.0
  %2986 = vmatprep.subr.mxu0 0.0
  %2987 = vmatpush1.msra.mxu0 0.0
  %2988 = vmatprep.subr.mxu0 0.0
  %2989 = vmatpush1.msra.mxu0 0.0
  %2990 = vmatprep.subr.mxu0 0.0
  %2991 = vmatpush1.msra.mxu0 0.0
  %2992 = vmatprep.subr.mxu0 0.0
  %2993 = vmatpush1.msra.mxu0 0.0
  %2994 = vmatprep.subr.mxu0 0.0
  %2995 = vmatpush1.msra.mxu0 0.0
  %2996 = vmatprep.subr.mxu0 0.0
  %2997 = vmatpush1.msra.mxu0 0.0
  %2998 = vmatprep.subr.mxu0 0.0
  %v2999 = vand.u32 %v105, 4294901760
  %v3000 = vsub.f32 %v105, %v2999
  %3001 = vmatpush1.msra.mxu0 %v3000
  %3002 = vmatprep.subr.mxu0 0.0
  %v3003 = vand.u32 %v104, 4294901760
  %v3004 = vsub.f32 %v104, %v3003
  %3005 = vmatpush1.msra.mxu0 %v3004
  %3006 = vmatprep.subr.mxu0 0.0
  %v3007 = vand.u32 %v103, 4294901760
  %v3008 = vsub.f32 %v103, %v3007
  %3009 = vmatpush1.msra.mxu0 %v3008
  %3010 = vmatprep.subr.mxu0 0.0
  %v3011 = vand.u32 %v102, 4294901760
  %v3012 = vsub.f32 %v102, %v3011
  %3013 = vmatpush1.msra.mxu0 %v3012
  %3014 = vmatprep.subr.mxu0 0.0
  %v3015 = vand.u32 %v101, 4294901760
  %v3016 = vsub.f32 %v101, %v3015
  %3017 = vmatpush1.msra.mxu0 %v3016
  %3018 = vmatprep.subr.mxu0 0.0
  %v3019 = vand.u32 %v100, 4294901760
  %v3020 = vsub.f32 %v100, %v3019
  %3021 = vmatpush1.msra.mxu0 %v3020
  %3022 = vmatprep.subr.mxu0 0.0
  %v3023 = vand.u32 %v99, 4294901760
  %v3024 = vsub.f32 %v99, %v3023
  %3025 = vmatpush1.msra.mxu0 %v3024
  %3026 = vmatprep.subr.mxu0 0.0
  %v3027 = vand.u32 %v98, 4294901760
  %v3028 = vsub.f32 %v98, %v3027
  %3029 = vmatpush1.msra.mxu0 %v3028
  %3030 = vmatprep.subr.mxu0 0.0
  %3031 = vmatpush2.msra.mxu0 0.0
  %3032 = vmatprep.subr.mxu0 0.0
  %3033 = vmatpush2.msra.mxu0 0.0
  %3034 = vmatprep.subr.mxu0 0.0
  %3035 = vmatpush2.msra.mxu0 0.0
  %3036 = vmatprep.subr.mxu0 0.0
  %3037 = vmatpush2.msra.mxu0 0.0
  %3038 = vmatprep.subr.mxu0 0.0
  %3039 = vmatpush2.msra.mxu0 0.0
  %3040 = vmatprep.subr.mxu0 0.0
  %3041 = vmatpush2.msra.mxu0 0.0
  %3042 = vmatprep.subr.mxu0 0.0
  %3043 = vmatpush2.msra.mxu0 0.0
  %3044 = vmatprep.subr.mxu0 0.0
  %3045 = vmatpush2.msra.mxu0 0.0
  %3046 = vmatprep.subr.mxu0 0.0
  %3047 = vmatpush2.msra.mxu0 0.0
  %3048 = vmatprep.subr.mxu0 0.0
  %3049 = vmatpush2.msra.mxu0 0.0
  %3050 = vmatprep.subr.mxu0 0.0
  %3051 = vmatpush2.msra.mxu0 0.0
  %3052 = vmatprep.subr.mxu0 0.0
  %3053 = vmatpush2.msra.mxu0 0.0
  %3054 = vmatprep.subr.mxu0 0.0
  %3055 = vmatpush2.msra.mxu0 0.0
  %3056 = vmatprep.subr.mxu0 0.0
  %3057 = vmatpush2.msra.mxu0 0.0
  %3058 = vmatprep.subr.mxu0 0.0
  %3059 = vmatpush2.msra.mxu0 0.0
  %3060 = vmatprep.subr.mxu0 0.0
  %3061 = vmatpush2.msra.mxu0 0.0
  %3062 = vmatprep.mubr.f32.mxu0 0.0
  %v3063 = vand.u32 %v1319, 4294901760
  %v3064 = vsub.f32 %v1319, %v3063
  %3065 = vmatmul.mubr.f32.gmra.mxu0 %v3064
  %v3066 = vpop.f32.mrf.mxu0
  %v3067 = vadd.f32 %v2889, %v3066
  %v3068 = vpop.f32.mrf.mxu0
  %3069 = vmatprep.mubr.f32.mxu0 0.0
  %v3070 = vand.u32 %v1322, 4294901760
  %v3071 = vsub.f32 %v1322, %v3070
  %3072 = vmatmul.mubr.f32.gmra.mxu0 %v3071
  %v3073 = vpop.f32.mrf.mxu0
  %v3074 = vadd.f32 %v2895, %v3073
  %v3075 = vpop.f32.mrf.mxu0
  %3076 = vmatprep.mubr.f32.mxu0 0.0
  %v3077 = vand.u32 %v1325, 4294901760
  %v3078 = vsub.f32 %v1325, %v3077
  %3079 = vmatmul.mubr.f32.gmra.mxu0 %v3078
  %v3080 = vpop.f32.mrf.mxu0
  %v3081 = vadd.f32 %v2901, %v3080
  %v3082 = vpop.f32.mrf.mxu0
  %3083 = vmatprep.mubr.f32.mxu0 0.0
  %v3084 = vand.u32 %v1328, 4294901760
  %v3085 = vsub.f32 %v1328, %v3084
  %3086 = vmatmul.mubr.f32.gmra.mxu0 %v3085
  %v3087 = vpop.f32.mrf.mxu0
  %v3088 = vadd.f32 %v2907, %v3087
  %v3089 = vpop.f32.mrf.mxu0
  %3090 = vmatprep.mubr.f32.mxu0 0.0
  %v3091 = vand.u32 %v1331, 4294901760
  %v3092 = vsub.f32 %v1331, %v3091
  %3093 = vmatmul.mubr.f32.gmra.mxu0 %v3092
  %v3094 = vpop.f32.mrf.mxu0
  %v3095 = vadd.f32 %v2913, %v3094
  %v3096 = vpop.f32.mrf.mxu0
  %3097 = vmatprep.mubr.f32.mxu0 0.0
  %v3098 = vand.u32 %v1334, 4294901760
  %v3099 = vsub.f32 %v1334, %v3098
  %3100 = vmatmul.mubr.f32.gmra.mxu0 %v3099
  %v3101 = vpop.f32.mrf.mxu0
  %v3102 = vadd.f32 %v2919, %v3101
  %v3103 = vpop.f32.mrf.mxu0
  %3104 = vmatprep.mubr.f32.mxu0 0.0
  %v3105 = vand.u32 %v1337, 4294901760
  %v3106 = vsub.f32 %v1337, %v3105
  %3107 = vmatmul.mubr.f32.gmra.mxu0 %v3106
  %v3108 = vpop.f32.mrf.mxu0
  %v3109 = vadd.f32 %v2925, %v3108
  %v3110 = vpop.f32.mrf.mxu0
  %3111 = vmatprep.mubr.f32.mxu0 0.0
  %v3112 = vand.u32 %v1340, 4294901760
  %v3113 = vsub.f32 %v1340, %v3112
  %3114 = vmatmul.mubr.f32.gmra.mxu0 %v3113
  %v3115 = vpop.f32.mrf.mxu0
  %v3116 = vadd.f32 %v2931, %v3115
  %v3117 = vpop.f32.mrf.mxu0
  %3118 = vmatprep.mubr.f32.mxu0 0.0
  %v3119 = vand.u32 %v1343, 4294901760
  %v3120 = vsub.f32 %v1343, %v3119
  %3121 = vmatmul.mubr.f32.gmra.mxu0 %v3120
  %v3122 = vpop.f32.mrf.mxu0
  %v3123 = vadd.f32 %v2937, %v3122
  %v3124 = vpop.f32.mrf.mxu0
  %3125 = vmatprep.mubr.f32.mxu0 0.0
  %v3126 = vand.u32 %v1346, 4294901760
  %v3127 = vsub.f32 %v1346, %v3126
  %3128 = vmatmul.mubr.f32.gmra.mxu0 %v3127
  %v3129 = vpop.f32.mrf.mxu0
  %v3130 = vadd.f32 %v2943, %v3129
  %v3131 = vpop.f32.mrf.mxu0
  %3132 = vmatprep.mubr.f32.mxu0 0.0
  %v3133 = vand.u32 %v1349, 4294901760
  %v3134 = vsub.f32 %v1349, %v3133
  %3135 = vmatmul.mubr.f32.gmra.mxu0 %v3134
  %v3136 = vpop.f32.mrf.mxu0
  %v3137 = vadd.f32 %v2949, %v3136
  %v3138 = vpop.f32.mrf.mxu0
  %3139 = vmatprep.mubr.f32.mxu0 0.0
  %v3140 = vand.u32 %v1352, 4294901760
  %v3141 = vsub.f32 %v1352, %v3140
  %3142 = vmatmul.mubr.f32.gmra.mxu0 %v3141
  %v3143 = vpop.f32.mrf.mxu0
  %v3144 = vadd.f32 %v2955, %v3143
  %v3145 = vpop.f32.mrf.mxu0
  %3146 = vmatprep.mubr.f32.mxu0 0.0
  %v3147 = vand.u32 %v1355, 4294901760
  %v3148 = vsub.f32 %v1355, %v3147
  %3149 = vmatmul.mubr.f32.gmra.mxu0 %v3148
  %v3150 = vpop.f32.mrf.mxu0
  %v3151 = vadd.f32 %v2961, %v3150
  %v3152 = vpop.f32.mrf.mxu0
  %3153 = vmatprep.mubr.f32.mxu0 0.0
  %v3154 = vand.u32 %v1358, 4294901760
  %v3155 = vsub.f32 %v1358, %v3154
  %3156 = vmatmul.mubr.f32.gmra.mxu0 %v3155
  %v3157 = vpop.f32.mrf.mxu0
  %v3158 = vadd.f32 %v2967, %v3157
  %v3159 = vpop.f32.mrf.mxu0
  %3160 = vmatprep.mubr.f32.mxu0 0.0
  %v3161 = vand.u32 %v1361, 4294901760
  %v3162 = vsub.f32 %v1361, %v3161
  %3163 = vmatmul.mubr.f32.gmra.mxu0 %v3162
  %v3164 = vpop.f32.mrf.mxu0
  %v3165 = vadd.f32 %v2973, %v3164
  %v3166 = vpop.f32.mrf.mxu0
  %3167 = vmatprep.mubr.f32.mxu0 0.0
  %v3168 = vand.u32 %v1364, 4294901760
  %v3169 = vsub.f32 %v1364, %v3168
  %3170 = vmatmul.mubr.f32.gmra.mxu0 %v3169
  %v3171 = vpop.f32.mrf.mxu0
  %v3172 = vadd.f32 %v2979, %v3171
  %v3173 = vpop.f32.mrf.mxu0
  %3174 = vdwg.mxu0
  %3175 = vmatprep.subr.mxu0 0.0
  %3176 = vmatpush1.msra.mxu0 0.0
  %3177 = vmatprep.subr.mxu0 0.0
  %3178 = vmatpush1.msra.mxu0 0.0
  %3179 = vmatprep.subr.mxu0 0.0
  %3180 = vmatpush1.msra.mxu0 0.0
  %3181 = vmatprep.subr.mxu0 0.0
  %3182 = vmatpush1.msra.mxu0 0.0
  %3183 = vmatprep.subr.mxu0 0.0
  %3184 = vmatpush1.msra.mxu0 0.0
  %3185 = vmatprep.subr.mxu0 0.0
  %3186 = vmatpush1.msra.mxu0 0.0
  %3187 = vmatprep.subr.mxu0 0.0
  %3188 = vmatpush1.msra.mxu0 0.0
  %3189 = vmatprep.subr.mxu0 0.0
  %3190 = vmatpush1.msra.mxu0 0.0
  %3191 = vmatprep.subr.mxu0 0.0
  %v3192 = vand.u32 %v105, 4294901760
  %3193 = vmatpush1.msra.mxu0 %v3192
  %3194 = vmatprep.subr.mxu0 0.0
  %v3195 = vand.u32 %v104, 4294901760
  %3196 = vmatpush1.msra.mxu0 %v3195
  %3197 = vmatprep.subr.mxu0 0.0
  %v3198 = vand.u32 %v103, 4294901760
  %3199 = vmatpush1.msra.mxu0 %v3198
  %3200 = vmatprep.subr.mxu0 0.0
  %v3201 = vand.u32 %v102, 4294901760
  %3202 = vmatpush1.msra.mxu0 %v3201
  %3203 = vmatprep.subr.mxu0 0.0
  %v3204 = vand.u32 %v101, 4294901760
  %3205 = vmatpush1.msra.mxu0 %v3204
  %3206 = vmatprep.subr.mxu0 0.0
  %v3207 = vand.u32 %v100, 4294901760
  %3208 = vmatpush1.msra.mxu0 %v3207
  %3209 = vmatprep.subr.mxu0 0.0
  %v3210 = vand.u32 %v99, 4294901760
  %3211 = vmatpush1.msra.mxu0 %v3210
  %3212 = vmatprep.subr.mxu0 0.0
  %v3213 = vand.u32 %v98, 4294901760
  %3214 = vmatpush1.msra.mxu0 %v3213
  %3215 = vmatprep.subr.mxu0 0.0
  %3216 = vmatpush2.msra.mxu0 0.0
  %3217 = vmatprep.subr.mxu0 0.0
  %3218 = vmatpush2.msra.mxu0 0.0
  %3219 = vmatprep.subr.mxu0 0.0
  %3220 = vmatpush2.msra.mxu0 0.0
  %3221 = vmatprep.subr.mxu0 0.0
  %3222 = vmatpush2.msra.mxu0 0.0
  %3223 = vmatprep.subr.mxu0 0.0
  %3224 = vmatpush2.msra.mxu0 0.0
  %3225 = vmatprep.subr.mxu0 0.0
  %3226 = vmatpush2.msra.mxu0 0.0
  %3227 = vmatprep.subr.mxu0 0.0
  %3228 = vmatpush2.msra.mxu0 0.0
  %3229 = vmatprep.subr.mxu0 0.0
  %3230 = vmatpush2.msra.mxu0 0.0
  %3231 = vmatprep.subr.mxu0 0.0
  %3232 = vmatpush2.msra.mxu0 0.0
  %3233 = vmatprep.subr.mxu0 0.0
  %3234 = vmatpush2.msra.mxu0 0.0
  %3235 = vmatprep.subr.mxu0 0.0
  %3236 = vmatpush2.msra.mxu0 0.0
  %3237 = vmatprep.subr.mxu0 0.0
  %3238 = vmatpush2.msra.mxu0 0.0
  %3239 = vmatprep.subr.mxu0 0.0
  %3240 = vmatpush2.msra.mxu0 0.0
  %3241 = vmatprep.subr.mxu0 0.0
  %3242 = vmatpush2.msra.mxu0 0.0
  %3243 = vmatprep.subr.mxu0 0.0
  %3244 = vmatpush2.msra.mxu0 0.0
  %3245 = vmatprep.subr.mxu0 0.0
  %3246 = vmatpush2.msra.mxu0 0.0
  %3247 = vmatprep.mubr.f32.mxu0 0.0
  %v3248 = vand.u32 %v1319, 4294901760
  %v3249 = vsub.f32 %v1319, %v3248
  %v3250 = vand.u32 %v3249, 4294901760
  %3251 = vmatmul.mubr.f32.gmra.mxu0 %v3250
  %v3252 = vpop.f32.mrf.mxu0
  %v3253 = vadd.f32 %v3067, %v3252
  %v3254 = vpop.f32.mrf.mxu0
  %3255 = vmatprep.mubr.f32.mxu0 0.0
  %v3256 = vand.u32 %v1322, 4294901760
  %v3257 = vsub.f32 %v1322, %v3256
  %v3258 = vand.u32 %v3257, 4294901760
  %3259 = vmatmul.mubr.f32.gmra.mxu0 %v3258
  %v3260 = vpop.f32.mrf.mxu0
  %v3261 = vadd.f32 %v3074, %v3260
  %v3262 = vpop.f32.mrf.mxu0
  %3263 = vmatprep.mubr.f32.mxu0 0.0
  %v3264 = vand.u32 %v1325, 4294901760
  %v3265 = vsub.f32 %v1325, %v3264
  %v3266 = vand.u32 %v3265, 4294901760
  %3267 = vmatmul.mubr.f32.gmra.mxu0 %v3266
  %v3268 = vpop.f32.mrf.mxu0
  %v3269 = vadd.f32 %v3081, %v3268
  %v3270 = vpop.f32.mrf.mxu0
  %3271 = vmatprep.mubr.f32.mxu0 0.0
  %v3272 = vand.u32 %v1328, 4294901760
  %v3273 = vsub.f32 %v1328, %v3272
  %v3274 = vand.u32 %v3273, 4294901760
  %3275 = vmatmul.mubr.f32.gmra.mxu0 %v3274
  %v3276 = vpop.f32.mrf.mxu0
  %v3277 = vadd.f32 %v3088, %v3276
  %v3278 = vpop.f32.mrf.mxu0
  %3279 = vmatprep.mubr.f32.mxu0 0.0
  %v3280 = vand.u32 %v1331, 4294901760
  %v3281 = vsub.f32 %v1331, %v3280
  %v3282 = vand.u32 %v3281, 4294901760
  %3283 = vmatmul.mubr.f32.gmra.mxu0 %v3282
  %v3284 = vpop.f32.mrf.mxu0
  %v3285 = vadd.f32 %v3095, %v3284
  %v3286 = vpop.f32.mrf.mxu0
  %3287 = vmatprep.mubr.f32.mxu0 0.0
  %v3288 = vand.u32 %v1334, 4294901760
  %v3289 = vsub.f32 %v1334, %v3288
  %v3290 = vand.u32 %v3289, 4294901760
  %3291 = vmatmul.mubr.f32.gmra.mxu0 %v3290
  %v3292 = vpop.f32.mrf.mxu0
  %v3293 = vadd.f32 %v3102, %v3292
  %v3294 = vpop.f32.mrf.mxu0
  %3295 = vmatprep.mubr.f32.mxu0 0.0
  %v3296 = vand.u32 %v1337, 4294901760
  %v3297 = vsub.f32 %v1337, %v3296
  %v3298 = vand.u32 %v3297, 4294901760
  %3299 = vmatmul.mubr.f32.gmra.mxu0 %v3298
  %v3300 = vpop.f32.mrf.mxu0
  %v3301 = vadd.f32 %v3109, %v3300
  %v3302 = vpop.f32.mrf.mxu0
  %3303 = vmatprep.mubr.f32.mxu0 0.0
  %v3304 = vand.u32 %v1340, 4294901760
  %v3305 = vsub.f32 %v1340, %v3304
  %v3306 = vand.u32 %v3305, 4294901760
  %3307 = vmatmul.mubr.f32.gmra.mxu0 %v3306
  %v3308 = vpop.f32.mrf.mxu0
  %v3309 = vadd.f32 %v3116, %v3308
  %v3310 = vpop.f32.mrf.mxu0
  %3311 = vmatprep.mubr.f32.mxu0 0.0
  %v3312 = vand.u32 %v1343, 4294901760
  %v3313 = vsub.f32 %v1343, %v3312
  %v3314 = vand.u32 %v3313, 4294901760
  %3315 = vmatmul.mubr.f32.gmra.mxu0 %v3314
  %v3316 = vpop.f32.mrf.mxu0
  %v3317 = vadd.f32 %v3123, %v3316
  %v3318 = vpop.f32.mrf.mxu0
  %3319 = vmatprep.mubr.f32.mxu0 0.0
  %v3320 = vand.u32 %v1346, 4294901760
  %v3321 = vsub.f32 %v1346, %v3320
  %v3322 = vand.u32 %v3321, 4294901760
  %3323 = vmatmul.mubr.f32.gmra.mxu0 %v3322
  %v3324 = vpop.f32.mrf.mxu0
  %v3325 = vadd.f32 %v3130, %v3324
  %v3326 = vpop.f32.mrf.mxu0
  %3327 = vmatprep.mubr.f32.mxu0 0.0
  %v3328 = vand.u32 %v1349, 4294901760
  %v3329 = vsub.f32 %v1349, %v3328
  %v3330 = vand.u32 %v3329, 4294901760
  %3331 = vmatmul.mubr.f32.gmra.mxu0 %v3330
  %v3332 = vpop.f32.mrf.mxu0
  %v3333 = vadd.f32 %v3137, %v3332
  %v3334 = vpop.f32.mrf.mxu0
  %3335 = vmatprep.mubr.f32.mxu0 0.0
  %v3336 = vand.u32 %v1352, 4294901760
  %v3337 = vsub.f32 %v1352, %v3336
  %v3338 = vand.u32 %v3337, 4294901760
  %3339 = vmatmul.mubr.f32.gmra.mxu0 %v3338
  %v3340 = vpop.f32.mrf.mxu0
  %v3341 = vadd.f32 %v3144, %v3340
  %v3342 = vpop.f32.mrf.mxu0
  %3343 = vmatprep.mubr.f32.mxu0 0.0
  %v3344 = vand.u32 %v1355, 4294901760
  %v3345 = vsub.f32 %v1355, %v3344
  %v3346 = vand.u32 %v3345, 4294901760
  %3347 = vmatmul.mubr.f32.gmra.mxu0 %v3346
  %v3348 = vpop.f32.mrf.mxu0
  %v3349 = vadd.f32 %v3151, %v3348
  %v3350 = vpop.f32.mrf.mxu0
  %3351 = vmatprep.mubr.f32.mxu0 0.0
  %v3352 = vand.u32 %v1358, 4294901760
  %v3353 = vsub.f32 %v1358, %v3352
  %v3354 = vand.u32 %v3353, 4294901760
  %3355 = vmatmul.mubr.f32.gmra.mxu0 %v3354
  %v3356 = vpop.f32.mrf.mxu0
  %v3357 = vadd.f32 %v3158, %v3356
  %v3358 = vpop.f32.mrf.mxu0
  %3359 = vmatprep.mubr.f32.mxu0 0.0
  %v3360 = vand.u32 %v1361, 4294901760
  %v3361 = vsub.f32 %v1361, %v3360
  %v3362 = vand.u32 %v3361, 4294901760
  %3363 = vmatmul.mubr.f32.gmra.mxu0 %v3362
  %v3364 = vpop.f32.mrf.mxu0
  %v3365 = vadd.f32 %v3165, %v3364
  %v3366 = vpop.f32.mrf.mxu0
  %3367 = vmatprep.mubr.f32.mxu0 0.0
  %v3368 = vand.u32 %v1364, 4294901760
  %v3369 = vsub.f32 %v1364, %v3368
  %v3370 = vand.u32 %v3369, 4294901760
  %3371 = vmatmul.mubr.f32.gmra.mxu0 %v3370
  %v3372 = vpop.f32.mrf.mxu0
  %v3373 = vadd.f32 %v3172, %v3372
  %v3374 = vpop.f32.mrf.mxu0
  %3375 = vdwg.mxu0
  %3376 = vmatprep.subr.mxu0 0.0
  %3377 = vmatpush1.msra.mxu0 0.0
  %3378 = vmatprep.subr.mxu0 0.0
  %3379 = vmatpush1.msra.mxu0 0.0
  %3380 = vmatprep.subr.mxu0 0.0
  %3381 = vmatpush1.msra.mxu0 0.0
  %3382 = vmatprep.subr.mxu0 0.0
  %3383 = vmatpush1.msra.mxu0 0.0
  %3384 = vmatprep.subr.mxu0 0.0
  %3385 = vmatpush1.msra.mxu0 0.0
  %3386 = vmatprep.subr.mxu0 0.0
  %3387 = vmatpush1.msra.mxu0 0.0
  %3388 = vmatprep.subr.mxu0 0.0
  %3389 = vmatpush1.msra.mxu0 0.0
  %3390 = vmatprep.subr.mxu0 0.0
  %3391 = vmatpush1.msra.mxu0 0.0
  %3392 = vmatprep.subr.mxu0 0.0
  %v3393 = vand.u32 %v105, 4294901760
  %v3394 = vsub.f32 %v105, %v3393
  %v3395 = vand.u32 %v3394, 4294901760
  %3396 = vmatpush1.msra.mxu0 %v3395
  %3397 = vmatprep.subr.mxu0 0.0
  %v3398 = vand.u32 %v104, 4294901760
  %v3399 = vsub.f32 %v104, %v3398
  %v3400 = vand.u32 %v3399, 4294901760
  %3401 = vmatpush1.msra.mxu0 %v3400
  %3402 = vmatprep.subr.mxu0 0.0
  %v3403 = vand.u32 %v103, 4294901760
  %v3404 = vsub.f32 %v103, %v3403
  %v3405 = vand.u32 %v3404, 4294901760
  %3406 = vmatpush1.msra.mxu0 %v3405
  %3407 = vmatprep.subr.mxu0 0.0
  %v3408 = vand.u32 %v102, 4294901760
  %v3409 = vsub.f32 %v102, %v3408
  %v3410 = vand.u32 %v3409, 4294901760
  %3411 = vmatpush1.msra.mxu0 %v3410
  %3412 = vmatprep.subr.mxu0 0.0
  %v3413 = vand.u32 %v101, 4294901760
  %v3414 = vsub.f32 %v101, %v3413
  %v3415 = vand.u32 %v3414, 4294901760
  %3416 = vmatpush1.msra.mxu0 %v3415
  %3417 = vmatprep.subr.mxu0 0.0
  %v3418 = vand.u32 %v100, 4294901760
  %v3419 = vsub.f32 %v100, %v3418
  %v3420 = vand.u32 %v3419, 4294901760
  %3421 = vmatpush1.msra.mxu0 %v3420
  %3422 = vmatprep.subr.mxu0 0.0
  %v3423 = vand.u32 %v99, 4294901760
  %v3424 = vsub.f32 %v99, %v3423
  %v3425 = vand.u32 %v3424, 4294901760
  %3426 = vmatpush1.msra.mxu0 %v3425
  %3427 = vmatprep.subr.mxu0 0.0
  %v3428 = vand.u32 %v98, 4294901760
  %v3429 = vsub.f32 %v98, %v3428
  %v3430 = vand.u32 %v3429, 4294901760
  %3431 = vmatpush1.msra.mxu0 %v3430
  %3432 = vmatprep.subr.mxu0 0.0
  %3433 = vmatpush2.msra.mxu0 0.0
  %3434 = vmatprep.subr.mxu0 0.0
  %3435 = vmatpush2.msra.mxu0 0.0
  %3436 = vmatprep.subr.mxu0 0.0
  %3437 = vmatpush2.msra.mxu0 0.0
  %3438 = vmatprep.subr.mxu0 0.0
  %3439 = vmatpush2.msra.mxu0 0.0
  %3440 = vmatprep.subr.mxu0 0.0
  %3441 = vmatpush2.msra.mxu0 0.0
  %3442 = vmatprep.subr.mxu0 0.0
  %3443 = vmatpush2.msra.mxu0 0.0
  %3444 = vmatprep.subr.mxu0 0.0
  %3445 = vmatpush2.msra.mxu0 0.0
  %3446 = vmatprep.subr.mxu0 0.0
  %3447 = vmatpush2.msra.mxu0 0.0
  %3448 = vmatprep.subr.mxu0 0.0
  %3449 = vmatpush2.msra.mxu0 0.0
  %3450 = vmatprep.subr.mxu0 0.0
  %3451 = vmatpush2.msra.mxu0 0.0
  %3452 = vmatprep.subr.mxu0 0.0
  %3453 = vmatpush2.msra.mxu0 0.0
  %3454 = vmatprep.subr.mxu0 0.0
  %3455 = vmatpush2.msra.mxu0 0.0
  %3456 = vmatprep.subr.mxu0 0.0
  %3457 = vmatpush2.msra.mxu0 0.0
  %3458 = vmatprep.subr.mxu0 0.0
  %3459 = vmatpush2.msra.mxu0 0.0
  %3460 = vmatprep.subr.mxu0 0.0
  %3461 = vmatpush2.msra.mxu0 0.0
  %3462 = vmatprep.subr.mxu0 0.0
  %3463 = vmatpush2.msra.mxu0 0.0
  %3464 = vmatprep.mubr.f32.mxu0 0.0
  %v3465 = vand.u32 %v1319, 4294901760
  %3466 = vmatmul.mubr.f32.gmra.mxu0 %v3465
  %v3467 = vpop.f32.mrf.mxu0
  %v3468 = vadd.f32 %v3253, %v3467
  %v3469 = vpop.f32.mrf.mxu0
  %3470 = vmatprep.mubr.f32.mxu0 0.0
  %v3471 = vand.u32 %v1322, 4294901760
  %3472 = vmatmul.mubr.f32.gmra.mxu0 %v3471
  %v3473 = vpop.f32.mrf.mxu0
  %v3474 = vadd.f32 %v3261, %v3473
  %v3475 = vpop.f32.mrf.mxu0
  %3476 = vmatprep.mubr.f32.mxu0 0.0
  %v3477 = vand.u32 %v1325, 4294901760
  %3478 = vmatmul.mubr.f32.gmra.mxu0 %v3477
  %v3479 = vpop.f32.mrf.mxu0
  %v3480 = vadd.f32 %v3269, %v3479
  %v3481 = vpop.f32.mrf.mxu0
  %3482 = vmatprep.mubr.f32.mxu0 0.0
  %v3483 = vand.u32 %v1328, 4294901760
  %3484 = vmatmul.mubr.f32.gmra.mxu0 %v3483
  %v3485 = vpop.f32.mrf.mxu0
  %v3486 = vadd.f32 %v3277, %v3485
  %v3487 = vpop.f32.mrf.mxu0
  %3488 = vmatprep.mubr.f32.mxu0 0.0
  %v3489 = vand.u32 %v1331, 4294901760
  %3490 = vmatmul.mubr.f32.gmra.mxu0 %v3489
  %v3491 = vpop.f32.mrf.mxu0
  %v3492 = vadd.f32 %v3285, %v3491
  %v3493 = vpop.f32.mrf.mxu0
  %3494 = vmatprep.mubr.f32.mxu0 0.0
  %v3495 = vand.u32 %v1334, 4294901760
  %3496 = vmatmul.mubr.f32.gmra.mxu0 %v3495
  %v3497 = vpop.f32.mrf.mxu0
  %v3498 = vadd.f32 %v3293, %v3497
  %v3499 = vpop.f32.mrf.mxu0
  %3500 = vmatprep.mubr.f32.mxu0 0.0
  %v3501 = vand.u32 %v1337, 4294901760
  %3502 = vmatmul.mubr.f32.gmra.mxu0 %v3501
  %v3503 = vpop.f32.mrf.mxu0
  %v3504 = vadd.f32 %v3301, %v3503
  %v3505 = vpop.f32.mrf.mxu0
  %3506 = vmatprep.mubr.f32.mxu0 0.0
  %v3507 = vand.u32 %v1340, 4294901760
  %3508 = vmatmul.mubr.f32.gmra.mxu0 %v3507
  %v3509 = vpop.f32.mrf.mxu0
  %v3510 = vadd.f32 %v3309, %v3509
  %v3511 = vpop.f32.mrf.mxu0
  %3512 = vmatprep.mubr.f32.mxu0 0.0
  %v3513 = vand.u32 %v1343, 4294901760
  %3514 = vmatmul.mubr.f32.gmra.mxu0 %v3513
  %v3515 = vpop.f32.mrf.mxu0
  %v3516 = vadd.f32 %v3317, %v3515
  %v3517 = vpop.f32.mrf.mxu0
  %3518 = vmatprep.mubr.f32.mxu0 0.0
  %v3519 = vand.u32 %v1346, 4294901760
  %3520 = vmatmul.mubr.f32.gmra.mxu0 %v3519
  %v3521 = vpop.f32.mrf.mxu0
  %v3522 = vadd.f32 %v3325, %v3521
  %v3523 = vpop.f32.mrf.mxu0
  %3524 = vmatprep.mubr.f32.mxu0 0.0
  %v3525 = vand.u32 %v1349, 4294901760
  %3526 = vmatmul.mubr.f32.gmra.mxu0 %v3525
  %v3527 = vpop.f32.mrf.mxu0
  %v3528 = vadd.f32 %v3333, %v3527
  %v3529 = vpop.f32.mrf.mxu0
  %3530 = vmatprep.mubr.f32.mxu0 0.0
  %v3531 = vand.u32 %v1352, 4294901760
  %3532 = vmatmul.mubr.f32.gmra.mxu0 %v3531
  %v3533 = vpop.f32.mrf.mxu0
  %v3534 = vadd.f32 %v3341, %v3533
  %v3535 = vpop.f32.mrf.mxu0
  %3536 = vmatprep.mubr.f32.mxu0 0.0
  %v3537 = vand.u32 %v1355, 4294901760
  %3538 = vmatmul.mubr.f32.gmra.mxu0 %v3537
  %v3539 = vpop.f32.mrf.mxu0
  %v3540 = vadd.f32 %v3349, %v3539
  %v3541 = vpop.f32.mrf.mxu0
  %3542 = vmatprep.mubr.f32.mxu0 0.0
  %v3543 = vand.u32 %v1358, 4294901760
  %3544 = vmatmul.mubr.f32.gmra.mxu0 %v3543
  %v3545 = vpop.f32.mrf.mxu0
  %v3546 = vadd.f32 %v3357, %v3545
  %v3547 = vpop.f32.mrf.mxu0
  %3548 = vmatprep.mubr.f32.mxu0 0.0
  %v3549 = vand.u32 %v1361, 4294901760
  %3550 = vmatmul.mubr.f32.gmra.mxu0 %v3549
  %v3551 = vpop.f32.mrf.mxu0
  %v3552 = vadd.f32 %v3365, %v3551
  %v3553 = vpop.f32.mrf.mxu0
  %3554 = vmatprep.mubr.f32.mxu0 0.0
  %v3555 = vand.u32 %v1364, 4294901760
  %3556 = vmatmul.mubr.f32.gmra.mxu0 %v3555
  %v3557 = vpop.f32.mrf.mxu0
  %v3558 = vadd.f32 %v3373, %v3557
  %v3559 = vpop.f32.mrf.mxu0
  %3560 = vdwg.mxu0
  %3561 = vmatprep.subr.mxu0 0.0
  %3562 = vmatpush1.msra.mxu0 0.0
  %3563 = vmatprep.subr.mxu0 0.0
  %3564 = vmatpush1.msra.mxu0 0.0
  %3565 = vmatprep.subr.mxu0 0.0
  %3566 = vmatpush1.msra.mxu0 0.0
  %3567 = vmatprep.subr.mxu0 0.0
  %3568 = vmatpush1.msra.mxu0 0.0
  %3569 = vmatprep.subr.mxu0 0.0
  %3570 = vmatpush1.msra.mxu0 0.0
  %3571 = vmatprep.subr.mxu0 0.0
  %3572 = vmatpush1.msra.mxu0 0.0
  %3573 = vmatprep.subr.mxu0 0.0
  %3574 = vmatpush1.msra.mxu0 0.0
  %3575 = vmatprep.subr.mxu0 0.0
  %3576 = vmatpush1.msra.mxu0 0.0
  %3577 = vmatprep.subr.mxu0 0.0
  %v3578 = vand.u32 %v105, 4294901760
  %3579 = vmatpush1.msra.mxu0 %v3578
  %3580 = vmatprep.subr.mxu0 0.0
  %v3581 = vand.u32 %v104, 4294901760
  %3582 = vmatpush1.msra.mxu0 %v3581
  %3583 = vmatprep.subr.mxu0 0.0
  %v3584 = vand.u32 %v103, 4294901760
  %3585 = vmatpush1.msra.mxu0 %v3584
  %3586 = vmatprep.subr.mxu0 0.0
  %v3587 = vand.u32 %v102, 4294901760
  %3588 = vmatpush1.msra.mxu0 %v3587
  %3589 = vmatprep.subr.mxu0 0.0
  %v3590 = vand.u32 %v101, 4294901760
  %3591 = vmatpush1.msra.mxu0 %v3590
  %3592 = vmatprep.subr.mxu0 0.0
  %v3593 = vand.u32 %v100, 4294901760
  %3594 = vmatpush1.msra.mxu0 %v3593
  %3595 = vmatprep.subr.mxu0 0.0
  %v3596 = vand.u32 %v99, 4294901760
  %3597 = vmatpush1.msra.mxu0 %v3596
  %3598 = vmatprep.subr.mxu0 0.0
  %v3599 = vand.u32 %v98, 4294901760
  %3600 = vmatpush1.msra.mxu0 %v3599
  %3601 = vmatprep.subr.mxu0 0.0
  %3602 = vmatpush2.msra.mxu0 0.0
  %3603 = vmatprep.subr.mxu0 0.0
  %3604 = vmatpush2.msra.mxu0 0.0
  %3605 = vmatprep.subr.mxu0 0.0
  %3606 = vmatpush2.msra.mxu0 0.0
  %3607 = vmatprep.subr.mxu0 0.0
  %3608 = vmatpush2.msra.mxu0 0.0
  %3609 = vmatprep.subr.mxu0 0.0
  %3610 = vmatpush2.msra.mxu0 0.0
  %3611 = vmatprep.subr.mxu0 0.0
  %3612 = vmatpush2.msra.mxu0 0.0
  %3613 = vmatprep.subr.mxu0 0.0
  %3614 = vmatpush2.msra.mxu0 0.0
  %3615 = vmatprep.subr.mxu0 0.0
  %3616 = vmatpush2.msra.mxu0 0.0
  %3617 = vmatprep.subr.mxu0 0.0
  %3618 = vmatpush2.msra.mxu0 0.0
  %3619 = vmatprep.subr.mxu0 0.0
  %3620 = vmatpush2.msra.mxu0 0.0
  %3621 = vmatprep.subr.mxu0 0.0
  %3622 = vmatpush2.msra.mxu0 0.0
  %3623 = vmatprep.subr.mxu0 0.0
  %3624 = vmatpush2.msra.mxu0 0.0
  %3625 = vmatprep.subr.mxu0 0.0
  %3626 = vmatpush2.msra.mxu0 0.0
  %3627 = vmatprep.subr.mxu0 0.0
  %3628 = vmatpush2.msra.mxu0 0.0
  %3629 = vmatprep.subr.mxu0 0.0
  %3630 = vmatpush2.msra.mxu0 0.0
  %3631 = vmatprep.subr.mxu0 0.0
  %3632 = vmatpush2.msra.mxu0 0.0
  %3633 = vmatprep.mubr.f32.mxu0 0.0
  %v3634 = vand.u32 %v1319, 4294901760
  %3635 = vmatmul.mubr.f32.gmra.mxu0 %v3634
  %v3636 = vpop.f32.mrf.mxu0
  %v3637 = vadd.f32 %v3468, %v3636
  %v3638 = vpop.f32.mrf.mxu0
  %3639 = vmatprep.mubr.f32.mxu0 0.0
  %v3640 = vand.u32 %v1322, 4294901760
  %3641 = vmatmul.mubr.f32.gmra.mxu0 %v3640
  %v3642 = vpop.f32.mrf.mxu0
  %v3643 = vadd.f32 %v3474, %v3642
  %v3644 = vpop.f32.mrf.mxu0
  %3645 = vmatprep.mubr.f32.mxu0 0.0
  %v3646 = vand.u32 %v1325, 4294901760
  %3647 = vmatmul.mubr.f32.gmra.mxu0 %v3646
  %v3648 = vpop.f32.mrf.mxu0
  %v3649 = vadd.f32 %v3480, %v3648
  %v3650 = vpop.f32.mrf.mxu0
  %3651 = vmatprep.mubr.f32.mxu0 0.0
  %v3652 = vand.u32 %v1328, 4294901760
  %3653 = vmatmul.mubr.f32.gmra.mxu0 %v3652
  %v3654 = vpop.f32.mrf.mxu0
  %v3655 = vadd.f32 %v3486, %v3654
  %v3656 = vpop.f32.mrf.mxu0
  %3657 = vmatprep.mubr.f32.mxu0 0.0
  %v3658 = vand.u32 %v1331, 4294901760
  %3659 = vmatmul.mubr.f32.gmra.mxu0 %v3658
  %v3660 = vpop.f32.mrf.mxu0
  %v3661 = vadd.f32 %v3492, %v3660
  %v3662 = vpop.f32.mrf.mxu0
  %3663 = vmatprep.mubr.f32.mxu0 0.0
  %v3664 = vand.u32 %v1334, 4294901760
  %3665 = vmatmul.mubr.f32.gmra.mxu0 %v3664
  %v3666 = vpop.f32.mrf.mxu0
  %v3667 = vadd.f32 %v3498, %v3666
  %v3668 = vpop.f32.mrf.mxu0
  %3669 = vmatprep.mubr.f32.mxu0 0.0
  %v3670 = vand.u32 %v1337, 4294901760
  %3671 = vmatmul.mubr.f32.gmra.mxu0 %v3670
  %v3672 = vpop.f32.mrf.mxu0
  %v3673 = vadd.f32 %v3504, %v3672
  %v3674 = vpop.f32.mrf.mxu0
  %3675 = vmatprep.mubr.f32.mxu0 0.0
  %v3676 = vand.u32 %v1340, 4294901760
  %3677 = vmatmul.mubr.f32.gmra.mxu0 %v3676
  %v3678 = vpop.f32.mrf.mxu0
  %v3679 = vadd.f32 %v3510, %v3678
  %v3680 = vpop.f32.mrf.mxu0
  %3681 = vmatprep.mubr.f32.mxu0 0.0
  %v3682 = vand.u32 %v1343, 4294901760
  %3683 = vmatmul.mubr.f32.gmra.mxu0 %v3682
  %v3684 = vpop.f32.mrf.mxu0
  %v3685 = vadd.f32 %v3516, %v3684
  %v3686 = vpop.f32.mrf.mxu0
  %3687 = vmatprep.mubr.f32.mxu0 0.0
  %v3688 = vand.u32 %v1346, 4294901760
  %3689 = vmatmul.mubr.f32.gmra.mxu0 %v3688
  %v3690 = vpop.f32.mrf.mxu0
  %v3691 = vadd.f32 %v3522, %v3690
  %v3692 = vpop.f32.mrf.mxu0
  %3693 = vmatprep.mubr.f32.mxu0 0.0
  %v3694 = vand.u32 %v1349, 4294901760
  %3695 = vmatmul.mubr.f32.gmra.mxu0 %v3694
  %v3696 = vpop.f32.mrf.mxu0
  %v3697 = vadd.f32 %v3528, %v3696
  %v3698 = vpop.f32.mrf.mxu0
  %3699 = vmatprep.mubr.f32.mxu0 0.0
  %v3700 = vand.u32 %v1352, 4294901760
  %3701 = vmatmul.mubr.f32.gmra.mxu0 %v3700
  %v3702 = vpop.f32.mrf.mxu0
  %v3703 = vadd.f32 %v3534, %v3702
  %v3704 = vpop.f32.mrf.mxu0
  %3705 = vmatprep.mubr.f32.mxu0 0.0
  %v3706 = vand.u32 %v1355, 4294901760
  %3707 = vmatmul.mubr.f32.gmra.mxu0 %v3706
  %v3708 = vpop.f32.mrf.mxu0
  %v3709 = vadd.f32 %v3540, %v3708
  %v3710 = vpop.f32.mrf.mxu0
  %3711 = vmatprep.mubr.f32.mxu0 0.0
  %v3712 = vand.u32 %v1358, 4294901760
  %3713 = vmatmul.mubr.f32.gmra.mxu0 %v3712
  %v3714 = vpop.f32.mrf.mxu0
  %v3715 = vadd.f32 %v3546, %v3714
  %v3716 = vpop.f32.mrf.mxu0
  %3717 = vmatprep.mubr.f32.mxu0 0.0
  %v3718 = vand.u32 %v1361, 4294901760
  %3719 = vmatmul.mubr.f32.gmra.mxu0 %v3718
  %v3720 = vpop.f32.mrf.mxu0
  %v3721 = vadd.f32 %v3552, %v3720
  %v3722 = vpop.f32.mrf.mxu0
  %3723 = vmatprep.mubr.f32.mxu0 0.0
  %v3724 = vand.u32 %v1364, 4294901760
  %3725 = vmatmul.mubr.f32.gmra.mxu0 %v3724
  %v3726 = vpop.f32.mrf.mxu0
  %v3727 = vadd.f32 %v3558, %v3726
  %v3728 = vpop.f32.mrf.mxu0
  %3729 = vdwg.mxu0
  %v3730 = vmul.f32 %v1208, %v2455
  %v3731 = vmul.f32 %v1214, %v2461
  %v3732 = vmul.f32 %v1220, %v2467
  %v3733 = vmul.f32 %v1226, %v2473
  %v3734 = vmul.f32 %v1232, %v2479
  %v3735 = vmul.f32 %v1238, %v2485
  %v3736 = vmul.f32 %v1244, %v2491
  %v3737 = vmul.f32 %v1250, %v2497
  %v3738 = vmul.f32 %v1256, %v2503
  %v3739 = vmul.f32 %v1262, %v2509
  %v3740 = vmul.f32 %v1268, %v2515
  %v3741 = vmul.f32 %v1274, %v2521
  %v3742 = vmul.f32 %v1280, %v2527
  %v3743 = vmul.f32 %v1286, %v2533
  %v3744 = vmul.f32 %v1292, %v2539
  %v3745 = vmul.f32 %v1298, %v2545
  %v3746 = vadd.f32 %v3730, %v3731
  %v3747 = vadd.f32 %v3746, %v3732
  %v3748 = vadd.f32 %v3747, %v3733
  %v3749 = vadd.f32 %v3748, %v3734
  %v3750 = vadd.f32 %v3749, %v3735
  %v3751 = vadd.f32 %v3750, %v3736
  %v3752 = vadd.f32 %v3751, %v3737
  %v3753 = vadd.f32 %v3752, %v3738
  %v3754 = vadd.f32 %v3753, %v3739
  %v3755 = vadd.f32 %v3754, %v3740
  %v3756 = vadd.f32 %v3755, %v3741
  %v3757 = vadd.f32 %v3756, %v3742
  %v3758 = vadd.f32 %v3757, %v3743
  %v3759 = vadd.f32 %v3758, %v3744
  %v3760 = vadd.f32 %v3759, %v3745
  %v3761 = vrot.slane %v3760, 4
  %v3762 = vadd.f32 %v3760, %v3761
  %v3763 = vrot.slane %v3762, 2
  %v3764 = vadd.f32 %v3762, %v3763
  %v3765 = vrot.slane %v3764, 1
  %v3766 = vadd.f32 %v3764, %v3765
  %3767 = vst [vmem:[%s5] sm:$0x1] %v3766
  %v3768 = vmul.f32 %v1208, %v3637
  %v3769 = vmul.f32 %v1214, %v3643
  %v3770 = vmul.f32 %v1220, %v3649
  %v3771 = vmul.f32 %v1226, %v3655
  %v3772 = vmul.f32 %v1232, %v3661
  %v3773 = vmul.f32 %v1238, %v3667
  %v3774 = vmul.f32 %v1244, %v3673
  %v3775 = vmul.f32 %v1250, %v3679
  %v3776 = vmul.f32 %v1256, %v3685
  %v3777 = vmul.f32 %v1262, %v3691
  %v3778 = vmul.f32 %v1268, %v3697
  %v3779 = vmul.f32 %v1274, %v3703
  %v3780 = vmul.f32 %v1280, %v3709
  %v3781 = vmul.f32 %v1286, %v3715
  %v3782 = vmul.f32 %v1292, %v3721
  %v3783 = vmul.f32 %v1298, %v3727
  %v3784 = vadd.f32 %v3768, %v3769
  %v3785 = vadd.f32 %v3784, %v3770
  %v3786 = vadd.f32 %v3785, %v3771
  %v3787 = vadd.f32 %v3786, %v3772
  %v3788 = vadd.f32 %v3787, %v3773
  %v3789 = vadd.f32 %v3788, %v3774
  %v3790 = vadd.f32 %v3789, %v3775
  %v3791 = vadd.f32 %v3790, %v3776
  %v3792 = vadd.f32 %v3791, %v3777
  %v3793 = vadd.f32 %v3792, %v3778
  %v3794 = vadd.f32 %v3793, %v3779
  %v3795 = vadd.f32 %v3794, %v3780
  %v3796 = vadd.f32 %v3795, %v3781
  %v3797 = vadd.f32 %v3796, %v3782
  %v3798 = vadd.f32 %v3797, %v3783
  %v3799 = vrot.slane %v3798, 4
  %v3800 = vadd.f32 %v3798, %v3799
  %v3801 = vrot.slane %v3800, 2
  %v3802 = vadd.f32 %v3800, %v3801
  %v3803 = vrot.slane %v3802, 1
  %v3804 = vadd.f32 %v3802, %v3803
  %3805 = vst [vmem:[%s6] sm:$0x1] %v3804
  // Predicated region
  $region22: #{bpr_forward.1} parent=0 // pred_check
    _
  $region23: #{bpr_forward.1} parent=0 // pred_check_branch
    %3807 = sbr.rel (0) target = $region25
  $region24: #{bpr_forward.1} parent=0 // pred_region
    _
  $region25: #{bpr_forward.1} parent=0 // pred_fallthru
    _
  // Predicated region
  $region26: #{bpr_forward.1} parent=0 // pred_check
    _
  $region27: #{bpr_forward.1} parent=0 // pred_check_branch
    %3809 = sbr.rel (0) target = $region29
  $region28: #{bpr_forward.1} parent=0 // pred_region
    _
  $region29: #{bpr_forward.1} parent=0 // pred_fallthru
    _
  // Predicated region
  $region30: #{bpr_forward.1} parent=0 // pred_check
    _
  $region31: #{bpr_forward.1} parent=0 // pred_check_branch
    %3811 = sbr.rel (0) target = $region33
  $region32: #{bpr_forward.1} parent=0 // pred_region
    _
  $region33: #{bpr_forward.1} parent=0 // pred_fallthru
    _
  // Predicated region
  $region34: #{bpr_forward.1} parent=0 // pred_check
    _
  $region35: #{bpr_forward.1} parent=0 // pred_check_branch
    %3813 = sbr.rel (0) target = $region37
  $region36: #{bpr_forward.1} parent=0 // pred_region
    _
  $region37: #{bpr_forward.1} parent=0 // pred_fallthru
    _

</llo_original>
